<compile_context>
chip_gen: v5e
topology: v5e:2x2
jax: 0.10.0
libtpu: 0.0.40
codegen_flags: <defaults>
</compile_context>

<pallas_src>
import functools

import jax
import jax.numpy as jnp
from jax import lax
from jax.experimental import pallas as pl
from jax.experimental.pallas import tpu as pltpu


def _attention_kernel(x_ref, wq_ref, wkv_ref, wp_ref, bp_ref, o_ref,
                      k_scr, v_scr, *, num_heads, tq, n_real):
    """One (batch, query-block) grid cell.

    x_ref   : (1, Np, C) bf16  -- full (padded) sequence for this batch elem
    wq_ref  : (C, C)    bf16   -- Q weight, softmax scale pre-folded
    wkv_ref : (C, 2C)   bf16   -- fused [K | V] weight
    wp_ref  : (C, C)    bf16   -- output projection weight
    bp_ref  : (1, C)    f32    -- output projection bias
    o_ref   : (1, tq, C)
    k_scr/v_scr : (Np, C) bf16 VMEM scratch, resident across the qi axis
    """
    qi = pl.program_id(1)
    Np, C = x_ref.shape[1], x_ref.shape[2]
    hd = C // num_heads

    # ---- K/V projection: once per batch element, cached across query blocks.
    @pl.when(qi == 0)
    def _():
        xkv = x_ref[0]                                               # (Np, C)
        kv = jnp.dot(xkv, wkv_ref[...],
                     preferred_element_type=jnp.float32)             # (Np, 2C)
        kv = kv.astype(jnp.bfloat16)
        k_scr[...] = kv[:, :C]
        v_scr[...] = kv[:, C:]

    # ---- Q projection for this block of query rows (scale already folded).
    row0 = pl.multiple_of(qi * tq, tq)
    xq = x_ref[0, pl.ds(row0, tq), :]                                # (tq, C)
    q = jnp.dot(xq, wq_ref[...], preferred_element_type=jnp.float32)

    # Head-major views; cast to bf16 *before* the relayout (half the bytes).
    qh = q.astype(jnp.bfloat16).reshape(tq, num_heads, hd).transpose(1, 0, 2)
    kh = k_scr[...].reshape(Np, num_heads, hd).transpose(1, 0, 2)
    vh = v_scr[...].reshape(Np, num_heads, hd).transpose(1, 0, 2)

    # Scores (H, tq, Np): contract head_dim directly, batched over heads.
    s = lax.dot_general(qh, kh, (((2,), (2,)), ((0,), (0,))),
                        preferred_element_type=jnp.float32)
    if n_real < Np:  # mask padded key columns (static python condition)
        col = lax.broadcasted_iota(jnp.int32, (1, 1, Np), 2)
        s = jnp.where(col < n_real, s, -1e30)

    # Numerically-stable softmax; normalize AFTER the PV matmul so the
    # broadcast multiply runs on (H, tq, hd) instead of (H, tq, Np).
    s = s - jnp.max(s, axis=-1, keepdims=True)
    p = jnp.exp(s)
    l = jnp.sum(p, axis=-1, keepdims=True)                           # (H, tq, 1)
    ctx = lax.dot_general(p.astype(jnp.bfloat16), vh,
                          (((2,), (1,)), ((0,), (0,))),
                          preferred_element_type=jnp.float32)        # (H, tq, hd)
    ctx = ctx * pl.reciprocal(l, approx=True)

    # Merge heads -> lane-dense (tq, C), then output projection + bias.
    ctx = ctx.astype(jnp.bfloat16).transpose(1, 0, 2).reshape(tq, C)
    out = jnp.dot(ctx, wp_ref[...], preferred_element_type=jnp.float32)
    o_ref[0] = (out + bp_ref[...]).astype(o_ref.dtype)


def prepare_attention_params(w_qkv, w_proj, b_proj, num_heads, qk_scale=None):
    """Hoisted once per model load: transpose to x@W layout, fold the softmax
    scale into the Q weight, fuse [K|V] into one (C, 2C) weight, cast bf16."""
    C = w_proj.shape[0]
    hd = C // num_heads
    scale = qk_scale if qk_scale is not None else hd ** (-0.5)

    w_qkv_t = jnp.asarray(w_qkv, jnp.float32).T                      # (C, 3C)
    wq_t = (w_qkv_t[:, :C] * scale).astype(jnp.bfloat16)             # scale folded
    wkv_t = w_qkv_t[:, C:].astype(jnp.bfloat16)                      # (C, 2C) [K|V]
    wp_t = jnp.asarray(w_proj, jnp.float32).T.astype(jnp.bfloat16)
    bp = jnp.asarray(b_proj, jnp.float32).reshape(1, C)
    return wq_t, wkv_t, wp_t, bp


def _round_up(a, m):
    return (a + m - 1) // m * m


def attention_pallas(x, wq_t, wkv_t, wp_t, b_proj, num_heads, *,
                     max_q_block=256, out_dtype=None,
                     vmem_limit_bytes=40 * 1024 * 1024):
    """x: (B, N, C); weights from prepare_attention_params."""
    B, N, C = x.shape
    assert C % num_heads == 0
    assert max_q_block % 8 == 0 and max_q_block > 0
    out_dtype = x.dtype if out_dtype is None else out_dtype

    # Query tile / sequence padding (multiple of 8; cap tile for large N).
    n8 = _round_up(N, 8)
    tq = n8 if n8 <= max_q_block else min(128, max_q_block)
    Np = _round_up(N, tq)
    n_q = Np // tq

    x_bf = x.astype(jnp.bfloat16)                 # bf16 MXU operands, half DMA
    if Np != N:
        x_bf = jnp.pad(x_bf, ((0, 0), (0, Np - N), (0, 0)))

    kernel = functools.partial(_attention_kernel, num_heads=num_heads,
                               tq=tq, n_real=N)

    def build(weight_buffers):
        wmode = dict(pipeline_mode=pl.Buffered(weight_buffers))
        return pl.pallas_call(
            kernel,
            out_shape=jax.ShapeDtypeStruct((B, Np, C), out_dtype),
            grid_spec=pltpu.PrefetchScalarGridSpec(
                num_scalar_prefetch=0,
                grid=(B, n_q),
                in_specs=[
                    # Single x input: full (padded) sequence, constant across qi
                    # so it is DMA'd once per batch element.
                    pl.BlockSpec((1, Np, C), lambda b, qi: (b, 0, 0)),
                    pl.BlockSpec((C, C), lambda b, qi: (0, 0), **wmode),      # Wq
                    pl.BlockSpec((C, 2 * C), lambda b, qi: (0, 0), **wmode),  # [Wk|Wv]
                    pl.BlockSpec((C, C), lambda b, qi: (0, 0), **wmode),      # Wproj
                    pl.BlockSpec((1, C), lambda b, qi: (0, 0), **wmode),      # bias
                ],
                out_specs=pl.BlockSpec((1, tq, C), lambda b, qi: (b, qi, 0)),
                scratch_shapes=[pltpu.VMEM((Np, C), jnp.bfloat16),   # K cache
                                pltpu.VMEM((Np, C), jnp.bfloat16)],  # V cache
            ),
            compiler_params=pltpu.CompilerParams(
                # batch parallel (v7x megacore); qi arbitrary so the K/V scratch
                # may legally stay resident across query blocks.
                dimension_semantics=("parallel", "arbitrary"),
                vmem_limit_bytes=vmem_limit_bytes,
            ),
        )

    try:
        out = build(1)(x_bf, wq_t, wkv_t, wp_t, b_proj)
    except Exception:
        # Fallback if single-buffered inputs are rejected by this jax version.
        out = build(2)(x_bf, wq_t, wkv_t, wp_t, b_proj)

    return out[:, :N, :] if Np != N else out


def attention_reference(x, w_qkv, w_proj, b_proj, num_heads):
    """Pure-JAX f32 reference mirroring the PyTorch forward."""
    B, N, C = x.shape
    hd = C // num_heads
    scale = hd ** (-0.5)
    qkv = x @ w_qkv.T                                               # (B, N, 3C)
    qkv = qkv.reshape(B, N, 3, num_heads, hd).transpose(2, 0, 3, 1, 4)
    q, k, v = qkv[0], qkv[1], qkv[2]                                # (B, H, N, hd)
    attn = jnp.einsum('bhnd,bhmd->bhnm', q, k) * scale
    attn = jax.nn.softmax(attn, axis=-1)
    out = jnp.einsum('bhnm,bhmd->bhnd', attn, v)                    # (B, H, N, hd)
    out = out.transpose(0, 2, 1, 3).reshape(B, N, C)
    return out @ w_proj.T + b_proj


if __name__ == "__main__":
    num_heads = 8

    key = jax.random.PRNGKey(0)
    kx, kqkv, kproj, kb, kx2 = jax.random.split(key, 5)

    # Deterministic parameters (nn.Linear-like scale), torch layout.
    B, N, C = 2, 16, 128
    x = jax.random.normal(kx, (B, N, C), dtype=jnp.float32)
    w_qkv = jax.random.normal(kqkv, (3 * C, C), dtype=jnp.float32) * (C ** -0.5)
    w_proj = jax.random.normal(kproj, (C, C), dtype=jnp.float32) * (C ** -0.5)
    b_proj = jax.random.normal(kb, (C,), dtype=jnp.float32) * 0.02
    params = prepare_attention_params(w_qkv, w_proj, b_proj, num_heads)

    # Case 1: ViT-like single query block (n_q == 1), N a multiple of 8.
    out = jax.block_until_ready(attention_pallas(x, *params, num_heads=num_heads))
    ref = attention_reference(x, w_qkv, w_proj, b_proj, num_heads)
    assert out.shape == (B, N, C)
    err1 = float(jnp.max(jnp.abs(out - ref)))
    # Kernel runs bf16 operands on the MXU (f32 accumulate) -> loose tolerance
    # vs the pure-f32 reference.
    assert err1 < 1e-1, f"case1 max abs err {err1}"

    # Case 2: N not a multiple of 8 and n_q > 1 -> exercises the padded-key
    # mask and the K/V-resident scratch across query blocks.
    N2 = 22
    x2 = jax.random.normal(kx2, (B, N2, C), dtype=jnp.float32)
    out2 = jax.block_until_ready(
        attention_pallas(x2, *params, num_heads=num_heads, max_q_block=8))
    ref2 = attention_reference(x2, w_qkv, w_proj, b_proj, num_heads)
    assert out2.shape == (B, N2, C)
    err2 = float(jnp.max(jnp.abs(out2 - ref2)))
    assert err2 < 1e-1, f"case2 max abs err {err2}"

    print("KERNEL_OK")
</pallas_src>

<mosaic_0001>
module attributes {stable_mosaic.version = 11 : i64} {
  func.func @_attention_kernel(%arg0: i32, %arg1: i32, %arg2: memref<1x16x128xbf16, #tpu.memory_space<vmem>>, %arg3: memref<128x128xbf16, #tpu.memory_space<vmem>>, %arg4: memref<128x256xbf16, #tpu.memory_space<vmem>>, %arg5: memref<128x128xbf16, #tpu.memory_space<vmem>>, %arg6: memref<1x128xf32, #tpu.memory_space<vmem>>, %arg7: memref<1x16x128xf32, #tpu.memory_space<vmem>>, %arg8: memref<16x128xbf16, #tpu.memory_space<vmem>>, %arg9: memref<16x128xbf16, #tpu.memory_space<vmem>>) attributes {dimension_semantics = [#tpu.dimension_semantics<parallel>, #tpu.dimension_semantics<arbitrary>], iteration_bounds = array<i64: 2, 1>, scalar_prefetch = 0 : i64, scratch_operands = 2 : i64, tpu.core_type = #tpu.core_type<tc>, window_params = [{transform_indices = @transform_0, window_bounds = array<i64: 1, 16, 128>}, {pipeline_mode = #tpu.pipeline_mode<synchronous>, transform_indices = @transform_1, window_bounds = array<i64: 128, 128>}, {pipeline_mode = #tpu.pipeline_mode<synchronous>, transform_indices = @transform_2, window_bounds = array<i64: 128, 256>}, {pipeline_mode = #tpu.pipeline_mode<synchronous>, transform_indices = @transform_3, window_bounds = array<i64: 128, 128>}, {pipeline_mode = #tpu.pipeline_mode<synchronous>, transform_indices = @transform_4, window_bounds = array<i64: 1, 128>}, {transform_indices = @transform_5, window_bounds = array<i64: 1, 16, 128>}]} {
    %c0_i32 = arith.constant 0 : i32
    %0 = arith.cmpi eq, %arg1, %c0_i32 : i32
    %1 = arith.extui %0 : i1 to i32
    %c0_i32_0 = arith.constant 0 : i32
    %2 = arith.cmpi ne, %1, %c0_i32_0 : i32
    scf.if %2 {
      %c0_20 = arith.constant 0 : index
      %c0_21 = arith.constant 0 : index
      %c0_22 = arith.constant 0 : index
      %43 = vector.load %arg2[%c0_20, %c0_21, %c0_22] : memref<1x16x128xbf16, #tpu.memory_space<vmem>>, vector<1x16x128xbf16>
      %44 = vector.shape_cast %43 : vector<1x16x128xbf16> to vector<16x128xbf16>
      %c0_23 = arith.constant 0 : index
      %c0_24 = arith.constant 0 : index
      %45 = vector.load %arg4[%c0_23, %c0_24] : memref<128x256xbf16, #tpu.memory_space<vmem>>, vector<128x256xbf16>
      %cst_25 = arith.constant dense<0.000000e+00> : vector<16x256xf32>
      %46 = tpu.matmul %44, %45, %cst_25 {dimension_numbers = #tpu.dot_dimension_numbers<[1], [0], [0], [1], [0, 0, 1, 1], [], []>} : vector<16x128xbf16>, vector<128x256xbf16>, vector<16x256xf32> -> vector<16x256xf32>
      %47 = arith.truncf %46 : vector<16x256xf32> to vector<16x256xbf16>
      %48 = vector.extract_strided_slice %47 {offsets = [0, 0], sizes = [16, 128], strides = [1, 1]} : vector<16x256xbf16> to vector<16x128xbf16>
      %c0_26 = arith.constant 0 : index
      %c0_27 = arith.constant 0 : index
      %49 = vector.load %arg8[%c0_26, %c0_27] : memref<16x128xbf16, #tpu.memory_space<vmem>>, vector<16x128xbf16>
      tpu.vector_store %arg8[%c0_26, %c0_27], %48 {strides = array<i32>} : memref<16x128xbf16, #tpu.memory_space<vmem>>, vector<16x128xbf16>,
      %50 = vector.extract_strided_slice %47 {offsets = [0, 128], sizes = [16, 128], strides = [1, 1]} : vector<16x256xbf16> to vector<16x128xbf16>
      %c0_28 = arith.constant 0 : index
      %c0_29 = arith.constant 0 : index
      %51 = vector.load %arg9[%c0_28, %c0_29] : memref<16x128xbf16, #tpu.memory_space<vmem>>, vector<16x128xbf16>
      tpu.vector_store %arg9[%c0_28, %c0_29], %50 {strides = array<i32>} : memref<16x128xbf16, #tpu.memory_space<vmem>>, vector<16x128xbf16>,
    } else {
    }
    %c16_i32 = arith.constant 16 : i32
    %3 = arith.muli %arg1, %c16_i32 : i32
    %4 = tpu.assume_multiple %3, 16 : i32
    %c0 = arith.constant 0 : index
    %5 = arith.index_cast %4 : i32 to index
    %c0_1 = arith.constant 0 : index
    %6 = vector.load %arg2[%c0, %5, %c0_1] : memref<1x16x128xbf16, #tpu.memory_space<vmem>>, vector<1x16x128xbf16>
    %7 = vector.shape_cast %6 : vector<1x16x128xbf16> to vector<16x128xbf16>
    %c0_2 = arith.constant 0 : index
    %c0_3 = arith.constant 0 : index
    %8 = vector.load %arg3[%c0_2, %c0_3] : memref<128x128xbf16, #tpu.memory_space<vmem>>, vector<128x128xbf16>
    %cst = arith.constant dense<0.000000e+00> : vector<16x128xf32>
    %9 = tpu.matmul %7, %8, %cst {dimension_numbers = #tpu.dot_dimension_numbers<[1], [0], [0], [1], [0, 0, 1, 1], [], []>} : vector<16x128xbf16>, vector<128x128xbf16>, vector<16x128xf32> -> vector<16x128xf32>
    %10 = arith.truncf %9 : vector<16x128xf32> to vector<16x128xbf16>
    %11 = vector.shape_cast %10 : vector<16x128xbf16> to vector<16x8x16xbf16>
    %12 = tpu.transpose %11, [1, 0, 2] : vector<16x8x16xbf16> -> vector<8x16x16xbf16>
    %c0_4 = arith.constant 0 : index
    %c0_5 = arith.constant 0 : index
    %13 = vector.load %arg8[%c0_4, %c0_5] : memref<16x128xbf16, #tpu.memory_space<vmem>>, vector<16x128xbf16>
    %14 = vector.shape_cast %13 : vector<16x128xbf16> to vector<16x8x16xbf16>
    %15 = tpu.transpose %14, [1, 0, 2] : vector<16x8x16xbf16> -> vector<8x16x16xbf16>
    %c0_6 = arith.constant 0 : index
    %c0_7 = arith.constant 0 : index
    %16 = vector.load %arg9[%c0_6, %c0_7] : memref<16x128xbf16, #tpu.memory_space<vmem>>, vector<16x128xbf16>
    %17 = vector.shape_cast %16 : vector<16x128xbf16> to vector<16x8x16xbf16>
    %18 = tpu.transpose %17, [1, 0, 2] : vector<16x8x16xbf16> -> vector<8x16x16xbf16>
    %cst_8 = arith.constant dense<0.000000e+00> : vector<8x16x16xf32>
    %19 = tpu.matmul %12, %15, %cst_8 {dimension_numbers = #tpu.dot_dimension_numbers<[2], [2], [1], [1], [0, 0, 0, 1, 1, 1], [0], [0]>} : vector<8x16x16xbf16>, vector<8x16x16xbf16>, vector<8x16x16xf32> -> vector<8x16x16xf32>
    %cst_9 = arith.constant dense<0xFF800000> : vector<8x16xf32>
    %20 = vector.multi_reduction <maximumf>, %19, %cst_9 [2] : vector<8x16x16xf32> to vector<8x16xf32>
    %21 = vector.shape_cast %20 : vector<8x16xf32> to vector<8x16x1xf32>
    %22 = vector.broadcast %21 : vector<8x16x1xf32> to vector<8x16x16xf32>
    %23 = arith.subf %19, %22 : vector<8x16x16xf32>
    %24 = math.exp %23 : vector<8x16x16xf32>
    %cst_10 = arith.constant dense<0.000000e+00> : vector<8x16xf32>
    %25 = vector.multi_reduction <add>, %24, %cst_10 [2] : vector<8x16x16xf32> to vector<8x16xf32>
    %26 = vector.shape_cast %25 : vector<8x16xf32> to vector<8x16x1xf32>
    %27 = arith.truncf %24 : vector<8x16x16xf32> to vector<8x16x16xbf16>
    %cst_11 = arith.constant dense<0.000000e+00> : vector<8x16x16xf32>
    %28 = tpu.matmul %27, %18, %cst_11 {dimension_numbers = #tpu.dot_dimension_numbers<[2], [1], [1], [2], [0, 0, 0, 1, 1, 2], [0], [0]>} : vector<8x16x16xbf16>, vector<8x16x16xbf16>, vector<8x16x16xf32> -> vector<8x16x16xf32>
    %29 = tpu.reciprocal %26 {approx = true} : vector<8x16x1xf32> -> vector<8x16x1xf32>
    %30 = vector.broadcast %29 : vector<8x16x1xf32> to vector<8x16x16xf32>
    %31 = arith.mulf %28, %30 : vector<8x16x16xf32>
    %32 = arith.truncf %31 : vector<8x16x16xf32> to vector<8x16x16xbf16>
    %33 = tpu.transpose %32, [1, 0, 2] : vector<8x16x16xbf16> -> vector<16x8x16xbf16>
    %34 = vector.shape_cast %33 : vector<16x8x16xbf16> to vector<16x128xbf16>
    %c0_12 = arith.constant 0 : index
    %c0_13 = arith.constant 0 : index
    %35 = vector.load %arg5[%c0_12, %c0_13] : memref<128x128xbf16, #tpu.memory_space<vmem>>, vector<128x128xbf16>
    %cst_14 = arith.constant dense<0.000000e+00> : vector<16x128xf32>
    %36 = tpu.matmul %34, %35, %cst_14 {dimension_numbers = #tpu.dot_dimension_numbers<[1], [0], [0], [1], [0, 0, 1, 1], [], []>} : vector<16x128xbf16>, vector<128x128xbf16>, vector<16x128xf32> -> vector<16x128xf32>
    %c0_15 = arith.constant 0 : index
    %c0_16 = arith.constant 0 : index
    %37 = vector.load %arg6[%c0_15, %c0_16] : memref<1x128xf32, #tpu.memory_space<vmem>>, vector<1x128xf32>
    %38 = vector.broadcast %37 : vector<1x128xf32> to vector<16x128xf32>
    %39 = arith.addf %36, %38 : vector<16x128xf32>
    %c0_17 = arith.constant 0 : index
    %c0_18 = arith.constant 0 : index
    %c0_19 = arith.constant 0 : index
    %40 = vector.load %arg7[%c0_17, %c0_18, %c0_19] : memref<1x16x128xf32, #tpu.memory_space<vmem>>, vector<1x16x128xf32>
    %41 = vector.shape_cast %40 : vector<1x16x128xf32> to vector<16x128xf32>
    %42 = vector.shape_cast %39 : vector<16x128xf32> to vector<1x16x128xf32>
    tpu.vector_store %arg7[%c0_17, %c0_18, %c0_19], %42 {strides = array<i32>} : memref<1x16x128xf32, #tpu.memory_space<vmem>>, vector<1x16x128xf32>,
    return
  }
  func.func @transform_0(%arg0: i32, %arg1: i32) -> (i32, i32, i32) {
    %c0_i32 = arith.constant 0 : i32
    %c0_i32_0 = arith.constant 0 : i32
    %c0_i32_1 = arith.constant 0 : i32
    return %arg0, %c0_i32, %c0_i32_0 : i32, i32, i32
  }
  func.func @transform_1(%arg0: i32, %arg1: i32) -> (i32, i32) {
    %c0_i32 = arith.constant 0 : i32
    %c0_i32_0 = arith.constant 0 : i32
    %c0_i32_1 = arith.constant 0 : i32
    return %c0_i32, %c0_i32_0 : i32, i32
  }
  func.func @transform_2(%arg0: i32, %arg1: i32) -> (i32, i32) {
    %c0_i32 = arith.constant 0 : i32
    %c0_i32_0 = arith.constant 0 : i32
    %c0_i32_1 = arith.constant 0 : i32
    return %c0_i32, %c0_i32_0 : i32, i32
  }
  func.func @transform_3(%arg0: i32, %arg1: i32) -> (i32, i32) {
    %c0_i32 = arith.constant 0 : i32
    %c0_i32_0 = arith.constant 0 : i32
    %c0_i32_1 = arith.constant 0 : i32
    return %c0_i32, %c0_i32_0 : i32, i32
  }
  func.func @transform_4(%arg0: i32, %arg1: i32) -> (i32, i32) {
    %c0_i32 = arith.constant 0 : i32
    %c0_i32_0 = arith.constant 0 : i32
    %c0_i32_1 = arith.constant 0 : i32
    return %c0_i32, %c0_i32_0 : i32, i32
  }
  func.func @transform_5(%arg0: i32, %arg1: i32) -> (i32, i32, i32) {
    %c0_i32 = arith.constant 0 : i32
    %c0_i32_0 = arith.constant 0 : i32
    return %arg0, %arg1, %c0_i32 : i32, i32, i32
  }
}

module attributes {stable_mosaic.version = 11 : i64} {
  func.func @_attention_kernel(%arg0: i32, %arg1: i32, %arg2: memref<1x16x128xbf16, #tpu.memory_space<vmem>>, %arg3: memref<128x128xbf16, #tpu.memory_space<vmem>>, %arg4: memref<128x256xbf16, #tpu.memory_space<vmem>>, %arg5: memref<128x128xbf16, #tpu.memory_space<vmem>>, %arg6: memref<1x128xf32, #tpu.memory_space<vmem>>, %arg7: memref<1x16x128xf32, #tpu.memory_space<vmem>>, %arg8: memref<16x128xbf16, #tpu.memory_space<vmem>>, %arg9: memref<16x128xbf16, #tpu.memory_space<vmem>>) attributes {dimension_semantics = [#tpu.dimension_semantics<parallel>, #tpu.dimension_semantics<arbitrary>], iteration_bounds = array<i64: 2, 1>, scalar_prefetch = 0 : i64, scratch_operands = 2 : i64, tpu.core_type = #tpu.core_type<tc>, window_params = [{transform_indices = @transform_0, window_bounds = array<i64: 1, 16, 128>}, {pipeline_mode = #tpu.pipeline_mode<synchronous>, transform_indices = @transform_1, window_bounds = array<i64: 128, 128>}, {pipeline_mode = #tpu.pipeline_mode<synchronous>, transform_indices = @transform_2, window_bounds = array<i64: 128, 256>}, {pipeline_mode = #tpu.pipeline_mode<synchronous>, transform_indices = @transform_3, window_bounds = array<i64: 128, 128>}, {pipeline_mode = #tpu.pipeline_mode<synchronous>, transform_indices = @transform_4, window_bounds = array<i64: 1, 128>}, {transform_indices = @transform_5, window_bounds = array<i64: 1, 16, 128>}]} {
    %c0_i32 = arith.constant 0 : i32
    %0 = arith.cmpi eq, %arg1, %c0_i32 : i32
    %1 = arith.extui %0 : i1 to i32
    %c0_i32_0 = arith.constant 0 : i32
    %2 = arith.cmpi ne, %1, %c0_i32_0 : i32
    scf.if %2 {
      %c0_20 = arith.constant 0 : index
      %c0_21 = arith.constant 0 : index
      %c0_22 = arith.constant 0 : index
      %43 = vector.load %arg2[%c0_20, %c0_21, %c0_22] : memref<1x16x128xbf16, #tpu.memory_space<vmem>>, vector<1x16x128xbf16>
      %44 = vector.shape_cast %43 : vector<1x16x128xbf16> to vector<16x128xbf16>
      %c0_23 = arith.constant 0 : index
      %c0_24 = arith.constant 0 : index
      %45 = vector.load %arg4[%c0_23, %c0_24] : memref<128x256xbf16, #tpu.memory_space<vmem>>, vector<128x256xbf16>
      %cst_25 = arith.constant dense<0.000000e+00> : vector<16x256xf32>
      %46 = tpu.matmul %44, %45, %cst_25 {dimension_numbers = #tpu.dot_dimension_numbers<[1], [0], [0], [1], [0, 0, 1, 1], [], []>} : vector<16x128xbf16>, vector<128x256xbf16>, vector<16x256xf32> -> vector<16x256xf32>
      %47 = arith.truncf %46 : vector<16x256xf32> to vector<16x256xbf16>
      %48 = vector.extract_strided_slice %47 {offsets = [0, 0], sizes = [16, 128], strides = [1, 1]} : vector<16x256xbf16> to vector<16x128xbf16>
      %c0_26 = arith.constant 0 : index
      %c0_27 = arith.constant 0 : index
      %49 = vector.load %arg8[%c0_26, %c0_27] : memref<16x128xbf16, #tpu.memory_space<vmem>>, vector<16x128xbf16>
      tpu.vector_store %arg8[%c0_26, %c0_27], %48 {strides = array<i32>} : memref<16x128xbf16, #tpu.memory_space<vmem>>, vector<16x128xbf16>,
      %50 = vector.extract_strided_slice %47 {offsets = [0, 128], sizes = [16, 128], strides = [1, 1]} : vector<16x256xbf16> to vector<16x128xbf16>
      %c0_28 = arith.constant 0 : index
      %c0_29 = arith.constant 0 : index
      %51 = vector.load %arg9[%c0_28, %c0_29] : memref<16x128xbf16, #tpu.memory_space<vmem>>, vector<16x128xbf16>
      tpu.vector_store %arg9[%c0_28, %c0_29], %50 {strides = array<i32>} : memref<16x128xbf16, #tpu.memory_space<vmem>>, vector<16x128xbf16>,
    } else {
    }
    %c16_i32 = arith.constant 16 : i32
    %3 = arith.muli %arg1, %c16_i32 : i32
    %4 = tpu.assume_multiple %3, 16 : i32
    %c0 = arith.constant 0 : index
    %5 = arith.index_cast %4 : i32 to index
    %c0_1 = arith.constant 0 : index
    %6 = vector.load %arg2[%c0, %5, %c0_1] : memref<1x16x128xbf16, #tpu.memory_space<vmem>>, vector<1x16x128xbf16>
    %7 = vector.shape_cast %6 : vector<1x16x128xbf16> to vector<16x128xbf16>
    %c0_2 = arith.constant 0 : index
    %c0_3 = arith.constant 0 : index
    %8 = vector.load %arg3[%c0_2, %c0_3] : memref<128x128xbf16, #tpu.memory_space<vmem>>, vector<128x128xbf16>
    %cst = arith.constant dense<0.000000e+00> : vector<16x128xf32>
    %9 = tpu.matmul %7, %8, %cst {dimension_numbers = #tpu.dot_dimension_numbers<[1], [0], [0], [1], [0, 0, 1, 1], [], []>} : vector<16x128xbf16>, vector<128x128xbf16>, vector<16x128xf32> -> vector<16x128xf32>
    %10 = arith.truncf %9 : vector<16x128xf32> to vector<16x128xbf16>
    %11 = vector.shape_cast %10 : vector<16x128xbf16> to vector<16x8x16xbf16>
    %12 = tpu.transpose %11, [1, 0, 2] : vector<16x8x16xbf16> -> vector<8x16x16xbf16>
    %c0_4 = arith.constant 0 : index
    %c0_5 = arith.constant 0 : index
    %13 = vector.load %arg8[%c0_4, %c0_5] : memref<16x128xbf16, #tpu.memory_space<vmem>>, vector<16x128xbf16>
    %14 = vector.shape_cast %13 : vector<16x128xbf16> to vector<16x8x16xbf16>
    %15 = tpu.transpose %14, [1, 0, 2] : vector<16x8x16xbf16> -> vector<8x16x16xbf16>
    %c0_6 = arith.constant 0 : index
    %c0_7 = arith.constant 0 : index
    %16 = vector.load %arg9[%c0_6, %c0_7] : memref<16x128xbf16, #tpu.memory_space<vmem>>, vector<16x128xbf16>
    %17 = vector.shape_cast %16 : vector<16x128xbf16> to vector<16x8x16xbf16>
    %18 = tpu.transpose %17, [1, 0, 2] : vector<16x8x16xbf16> -> vector<8x16x16xbf16>
    %cst_8 = arith.constant dense<0.000000e+00> : vector<8x16x16xf32>
    %19 = tpu.matmul %12, %15, %cst_8 {dimension_numbers = #tpu.dot_dimension_numbers<[2], [2], [1], [1], [0, 0, 0, 1, 1, 1], [0], [0]>} : vector<8x16x16xbf16>, vector<8x16x16xbf16>, vector<8x16x16xf32> -> vector<8x16x16xf32>
    %cst_9 = arith.constant dense<0xFF800000> : vector<8x16xf32>
    %20 = vector.multi_reduction <maximumf>, %19, %cst_9 [2] : vector<8x16x16xf32> to vector<8x16xf32>
    %21 = vector.shape_cast %20 : vector<8x16xf32> to vector<8x16x1xf32>
    %22 = vector.broadcast %21 : vector<8x16x1xf32> to vector<8x16x16xf32>
    %23 = arith.subf %19, %22 : vector<8x16x16xf32>
    %24 = math.exp %23 : vector<8x16x16xf32>
    %cst_10 = arith.constant dense<0.000000e+00> : vector<8x16xf32>
    %25 = vector.multi_reduction <add>, %24, %cst_10 [2] : vector<8x16x16xf32> to vector<8x16xf32>
    %26 = vector.shape_cast %25 : vector<8x16xf32> to vector<8x16x1xf32>
    %27 = arith.truncf %24 : vector<8x16x16xf32> to vector<8x16x16xbf16>
    %cst_11 = arith.constant dense<0.000000e+00> : vector<8x16x16xf32>
    %28 = tpu.matmul %27, %18, %cst_11 {dimension_numbers = #tpu.dot_dimension_numbers<[2], [1], [1], [2], [0, 0, 0, 1, 1, 2], [0], [0]>} : vector<8x16x16xbf16>, vector<8x16x16xbf16>, vector<8x16x16xf32> -> vector<8x16x16xf32>
    %29 = tpu.reciprocal %26 {approx = true} : vector<8x16x1xf32> -> vector<8x16x1xf32>
    %30 = vector.broadcast %29 : vector<8x16x1xf32> to vector<8x16x16xf32>
    %31 = arith.mulf %28, %30 : vector<8x16x16xf32>
    %32 = arith.truncf %31 : vector<8x16x16xf32> to vector<8x16x16xbf16>
    %33 = tpu.transpose %32, [1, 0, 2] : vector<8x16x16xbf16> -> vector<16x8x16xbf16>
    %34 = vector.shape_cast %33 : vector<16x8x16xbf16> to vector<16x128xbf16>
    %c0_12 = arith.constant 0 : index
    %c0_13 = arith.constant 0 : index
    %35 = vector.load %arg5[%c0_12, %c0_13] : memref<128x128xbf16, #tpu.memory_space<vmem>>, vector<128x128xbf16>
    %cst_14 = arith.constant dense<0.000000e+00> : vector<16x128xf32>
    %36 = tpu.matmul %34, %35, %cst_14 {dimension_numbers = #tpu.dot_dimension_numbers<[1], [0], [0], [1], [0, 0, 1, 1], [], []>} : vector<16x128xbf16>, vector<128x128xbf16>, vector<16x128xf32> -> vector<16x128xf32>
    %c0_15 = arith.constant 0 : index
    %c0_16 = arith.constant 0 : index
    %37 = vector.load %arg6[%c0_15, %c0_16] : memref<1x128xf32, #tpu.memory_space<vmem>>, vector<1x128xf32>
    %38 = vector.broadcast %37 : vector<1x128xf32> to vector<16x128xf32>
    %39 = arith.addf %36, %38 : vector<16x128xf32>
    %c0_17 = arith.constant 0 : index
    %c0_18 = arith.constant 0 : index
    %c0_19 = arith.constant 0 : index
    %40 = vector.load %arg7[%c0_17, %c0_18, %c0_19] : memref<1x16x128xf32, #tpu.memory_space<vmem>>, vector<1x16x128xf32>
    %41 = vector.shape_cast %40 : vector<1x16x128xf32> to vector<16x128xf32>
    %42 = vector.shape_cast %39 : vector<16x128xf32> to vector<1x16x128xf32>
    tpu.vector_store %arg7[%c0_17, %c0_18, %c0_19], %42 {strides = array<i32>} : memref<1x16x128xf32, #tpu.memory_space<vmem>>, vector<1x16x128xf32>,
    return
  }
  func.func @transform_0(%arg0: i32, %arg1: i32) -> (i32, i32, i32) {
    %c0_i32 = arith.constant 0 : i32
    %c0_i32_0 = arith.constant 0 : i32
    %c0_i32_1 = arith.constant 0 : i32
    return %arg0, %c0_i32, %c0_i32_0 : i32, i32, i32
  }
  func.func @transform_1(%arg0: i32, %arg1: i32) -> (i32, i32) {
    %c0_i32 = arith.constant 0 : i32
    %c0_i32_0 = arith.constant 0 : i32
    %c0_i32_1 = arith.constant 0 : i32
    return %c0_i32, %c0_i32_0 : i32, i32
  }
  func.func @transform_2(%arg0: i32, %arg1: i32) -> (i32, i32) {
    %c0_i32 = arith.constant 0 : i32
    %c0_i32_0 = arith.constant 0 : i32
    %c0_i32_1 = arith.constant 0 : i32
    return %c0_i32, %c0_i32_0 : i32, i32
  }
  func.func @transform_3(%arg0: i32, %arg1: i32) -> (i32, i32) {
    %c0_i32 = arith.constant 0 : i32
    %c0_i32_0 = arith.constant 0 : i32
    %c0_i32_1 = arith.constant 0 : i32
    return %c0_i32, %c0_i32_0 : i32, i32
  }
  func.func @transform_4(%arg0: i32, %arg1: i32) -> (i32, i32) {
    %c0_i32 = arith.constant 0 : i32
    %c0_i32_0 = arith.constant 0 : i32
    %c0_i32_1 = arith.constant 0 : i32
    return %c0_i32, %c0_i32_0 : i32, i32
  }
  func.func @transform_5(%arg0: i32, %arg1: i32) -> (i32, i32, i32) {
    %c0_i32 = arith.constant 0 : i32
    %c0_i32_0 = arith.constant 0 : i32
    return %arg0, %arg1, %c0_i32 : i32, i32, i32
  }
}

</mosaic_0001>

<llo_original>
// kernel: tpu_custom_call.1
$region0: #{tpu_custom_call.1}
  #allocation0 [shape = 'u32[]', space=smem, size = 0x4, offset = 0x4, fixed_abs, tag = 'smem constant byte address 0x4 - core index']
  #allocation1 [shape = 'u32[72,128]{1,0:T(1,128)}', space=vmem, size = 0x9000, scoped, tag = 'internal scratch']
  #allocation2 [shape = 'bf16[16,128]{1,0:T(8,128)(2,1)}', space=vmem, size = 0x1000, scoped, tag = 'scratch operand']
  #allocation3 [shape = 'bf16[16,128]{1,0:T(8,128)(2,1)}', space=vmem, size = 0x1000, scoped, tag = 'scratch operand']
  %s0 = inlined_call_operand.hbm [shape: bf16[2,16,128], index: 0, kind: input, shape index: {}]
  %s1 = inlined_call_operand.hbm [shape: bf16[128,128], index: 1, kind: input, shape index: {}]
  %s2 = inlined_call_operand.hbm [shape: bf16[128,256], index: 2, kind: input, shape index: {}]
  %s3 = inlined_call_operand.hbm [shape: bf16[128,128], index: 3, kind: input, shape index: {}]
  %s4 = inlined_call_operand.vmem [shape: f32[1,128], index: 4, kind: input, shape index: {}]
  %s5 = inlined_call_operand.hbm [shape: f32[2,16,128], index: 5, kind: output, shape index: {}]
  %s6 = sld [smem:[#allocation0]]
  $region73: #{tpu_custom_call.1} parent=0
    _
  %s8 = ssub.s32 1, %s6
  %s9 = scalar_select 0, %s8, %s6
  $region1: #{tpu_custom_call.1} parent=0
    #allocation4 [shape = 'u8[8192]{0}', space=vmem, size = 0x2000, scoped, tag = 'input window, operand 0']
    #allocation5 [shape = 's32[2]{0}', space=sflag, size = 0x8, scoped, tag = 'scoped memory for tpu_custom_call.1']
    #allocation6 [shape = 's32[2]{0}', space=sflag, size = 0x8, scoped, tag = 'scoped memory for tpu_custom_call.1']
    #allocation7 [shape = 'u8[32768]{0}', space=vmem, size = 0x8000, scoped, tag = 'input window, operand 1, single buffered']
    #allocation8 [shape = 's32[1]{0}', space=sflag, size = 0x4, scoped, tag = 'scoped memory for tpu_custom_call.1']
    #allocation9 [shape = 'u8[65536]{0}', space=vmem, size = 0x10000, scoped, tag = 'input window, operand 2, single buffered']
    #allocation10 [shape = 'u8[32768]{0}', space=vmem, size = 0x8000, scoped, tag = 'input window, operand 3, single buffered']
    #allocation11 [shape = 's32[1]{0}', space=sflag, size = 0x4, scoped, tag = 'scoped memory for tpu_custom_call.1']
    #allocation12 [shape = 'u8[16384]{0}', space=vmem, size = 0x4000, scoped, tag = 'output window, operand 0']
    %10 = vsyncpa [#allocation5], 0
    %s11 = scalar_lea.sflag [#allocation5], 1
    %12 = vsyncpa %s11, 0
    %13 = vsyncpa [#allocation8], 0
    %14 = vsyncpa [#allocation11], 0
    %15 = vsyncpa [#allocation6], 0
    %s16 = scalar_lea.sflag [#allocation6], 1
    %17 = vsyncpa %s16, 0
    loop: start=0, step=1, limit=4
    $region2: #{tpu_custom_call.1} parent=1 // loop_pre_header
      _
    $region3: #{tpu_custom_call.1} parent=1 // loop_header
      %s19 = sphi 0, %s23
      %p20 = scmp.ge.s32.totalorder %s19, 4
      %s26 = sphi 0, %s38
      %s27 = sphi 0, %s34
      %s28 = sphi 0, %s26
      %s29 = sphi 0, %s27
      %s30 = sphi 0, %s28
      %s31 = sphi 0, %s29
      %s41 = sphi 0, %s43
      %s44 = sphi 0, %s41
      %s45 = sphi 0, %s44
      %s61 = sphi 0, %s45
      %s65 = sphi 0, %s65
      %s67 = sphi 0, %s65
      %s68 = sphi 0, %s67
      %s82 = sphi 0, %s68
      %s86 = sphi 0, %s86
      %s88 = sphi 0, %s86
      %s89 = sphi 0, %s88
      %s103 = sphi 0, %s89
      %s107 = sphi 0, %s107
      %s109 = sphi 0, %s107
      %s110 = sphi 0, %s109
      %s124 = sphi 0, %s110
      %s128 = sphi 0, %s128
      %s130 = sphi 0, %s128
      %s131 = sphi 0, %s130
      %s145 = sphi 0, %s131
      %s153 = sphi 0, %s155
      %s156 = sphi 0, %s153
      %s157 = sphi 0, %s156
      %s173 = sphi 0, %s157
    $region4: #{tpu_custom_call.1} parent=1 // loop_header_branch
      %22 = sbr.rel (%p20) target = $region8
    $region5: #{tpu_custom_call.1} parent=1 // loop_body
      %s24 = ssub.s32 %s19, 1
      %s25 = ssub.s32 %s19, 2
      %s32 = sadd.s32 1, %s27
      %p33 = scmp.ge.s32.totalorder %s32, 1
      %s34 = scalar_select %p33, 0, %s32
      %s35 = sadd.s32 1, %s26
      %s36 = scalar_select %p33, %s35, %s26
      %p37 = scmp.ge.s32.totalorder %s36, 2
      %s38 = scalar_select %p37, 0, %s36
      %s39 = ssub.s32 %s26, %s38
      %p40 = scmp.eq.s32.totalorder %s39, 0
      %s42 = sadd.s32 %s41, 1
      %s43 = scalar_select %p40, %s41, %s42
      %p46 = pneg %p40
      %p47 = scmp.eq.s32.totalorder %s19, 1
      %p48 = por %p46, %p47
      %p49 = scmp.ne.s32.totalorder %s41, %s44
      %p50 = scmp.eq.s32.totalorder %s19, 0
      %p51 = por %p49, %p50
      %p52 = scmp.ne.s32.totalorder %s41, %s44
      %p53 = scmp.eq.s32.totalorder %s24, 1
      %p54 = por %p52, %p53
      %p55 = scmp.ne.s32.totalorder %s44, %s45
      %p56 = scmp.eq.s32.totalorder %s24, 0
      %p57 = por %p55, %p56
      %p58 = scmp.ne.s32.totalorder %s44, %s45
      %p59 = scmp.eq.s32.totalorder %s25, 1
      %p60 = por %p58, %p59
      %p62 = scmp.ne.s32.totalorder %s45, %s61
      %p63 = scmp.eq.s32.totalorder %s25, 0
      %p64 = por %p62, %p63
      %s66 = sadd.s32 %s65, 1
      %p69 = scmp.eq.s32.totalorder %s19, 1
      %p70 = scmp.ne.s32.totalorder %s65, %s67
      %p71 = scmp.eq.s32.totalorder %s19, 0
      %p72 = por %p70, %p71
      %p73 = scmp.ne.s32.totalorder %s65, %s67
      %p74 = scmp.eq.s32.totalorder %s24, 1
      %p75 = por %p73, %p74
      %p76 = scmp.ne.s32.totalorder %s67, %s68
      %p77 = scmp.eq.s32.totalorder %s24, 0
      %p78 = por %p76, %p77
      %p79 = scmp.ne.s32.totalorder %s67, %s68
      %p80 = scmp.eq.s32.totalorder %s25, 1
      %p81 = por %p79, %p80
      %p83 = scmp.ne.s32.totalorder %s68, %s82
      %p84 = scmp.eq.s32.totalorder %s25, 0
      %p85 = por %p83, %p84
      %s87 = sadd.s32 %s86, 1
      %p90 = scmp.eq.s32.totalorder %s19, 1
      %p91 = scmp.ne.s32.totalorder %s86, %s88
      %p92 = scmp.eq.s32.totalorder %s19, 0
      %p93 = por %p91, %p92
      %p94 = scmp.ne.s32.totalorder %s86, %s88
      %p95 = scmp.eq.s32.totalorder %s24, 1
      %p96 = por %p94, %p95
      %p97 = scmp.ne.s32.totalorder %s88, %s89
      %p98 = scmp.eq.s32.totalorder %s24, 0
      %p99 = por %p97, %p98
      %p100 = scmp.ne.s32.totalorder %s88, %s89
      %p101 = scmp.eq.s32.totalorder %s25, 1
      %p102 = por %p100, %p101
      %p104 = scmp.ne.s32.totalorder %s89, %s103
      %p105 = scmp.eq.s32.totalorder %s25, 0
      %p106 = por %p104, %p105
      %s108 = sadd.s32 %s107, 1
      %p111 = scmp.eq.s32.totalorder %s19, 1
      %p112 = scmp.ne.s32.totalorder %s107, %s109
      %p113 = scmp.eq.s32.totalorder %s19, 0
      %p114 = por %p112, %p113
      %p115 = scmp.ne.s32.totalorder %s107, %s109
      %p116 = scmp.eq.s32.totalorder %s24, 1
      %p117 = por %p115, %p116
      %p118 = scmp.ne.s32.totalorder %s109, %s110
      %p119 = scmp.eq.s32.totalorder %s24, 0
      %p120 = por %p118, %p119
      %p121 = scmp.ne.s32.totalorder %s109, %s110
      %p122 = scmp.eq.s32.totalorder %s25, 1
      %p123 = por %p121, %p122
      %p125 = scmp.ne.s32.totalorder %s110, %s124
      %p126 = scmp.eq.s32.totalorder %s25, 0
      %p127 = por %p125, %p126
      %s129 = sadd.s32 %s128, 1
      %p132 = scmp.eq.s32.totalorder %s19, 1
      %p133 = scmp.ne.s32.totalorder %s128, %s130
      %p134 = scmp.eq.s32.totalorder %s19, 0
      %p135 = por %p133, %p134
      %p136 = scmp.ne.s32.totalorder %s128, %s130
      %p137 = scmp.eq.s32.totalorder %s24, 1
      %p138 = por %p136, %p137
      %p139 = scmp.ne.s32.totalorder %s130, %s131
      %p140 = scmp.eq.s32.totalorder %s24, 0
      %p141 = por %p139, %p140
      %p142 = scmp.ne.s32.totalorder %s130, %s131
      %p143 = scmp.eq.s32.totalorder %s25, 1
      %p144 = por %p142, %p143
      %p146 = scmp.ne.s32.totalorder %s131, %s145
      %p147 = scmp.eq.s32.totalorder %s25, 0
      %p148 = por %p146, %p147
      %s149 = ssub.s32 %s26, %s38
      %s150 = ssub.s32 %s27, %s34
      %s151 = sor.u32 %s149, %s150
      %p152 = scmp.eq.s32.totalorder %s151, 0
      %s154 = sadd.s32 %s153, 1
      %s155 = scalar_select %p152, %s153, %s154
      %p158 = pneg %p152
      %p159 = scmp.eq.s32.totalorder %s19, 1
      %p160 = por %p158, %p159
      %p161 = scmp.ne.s32.totalorder %s153, %s156
      %p162 = scmp.eq.s32.totalorder %s19, 0
      %p163 = por %p161, %p162
      %p164 = scmp.ne.s32.totalorder %s153, %s156
      %p165 = scmp.eq.s32.totalorder %s24, 1
      %p166 = por %p164, %p165
      %p167 = scmp.ne.s32.totalorder %s156, %s157
      %p168 = scmp.eq.s32.totalorder %s24, 0
      %p169 = por %p167, %p168
      %p170 = scmp.ne.s32.totalorder %s156, %s157
      %p171 = scmp.eq.s32.totalorder %s25, 1
      %p172 = por %p170, %p171
      %p174 = scmp.ne.s32.totalorder %s157, %s173
      %p175 = scmp.eq.s32.totalorder %s25, 0
      %p176 = por %p174, %p175
      %p177 = scmp.le.s32.totalorder 1, %s19
      %p178 = scmp.lt.s32.totalorder %s19, 3
      %p179 = pnand %p177, %p178
      %p180 = pneg %p179
      // Predicated region
      $region9: #{tpu_custom_call.1} parent=5 // pred_check
        _
      $region10: #{tpu_custom_call.1} parent=5 // pred_check_branch
        %182 = sbr.rel (%p179) target = $region12
      $region11: #{tpu_custom_call.1} parent=5 // pred_region
        %s183 = ssub.s32 %s19, 1
        // Predicated region
        $region13: #{tpu_custom_call.1} parent=11 // pred_check
          %p184 = pneg %p78
        $region14: #{tpu_custom_call.1} parent=11 // pred_check_branch
          %186 = sbr.rel (%p184) target = $region16
        $region15: #{tpu_custom_call.1} parent=11 // pred_region
          %188 = vsyncadd [#allocation8], 0
          %s189 = sshll.u32 %s1, 4
          %s190 = int_to_ptr.hbm [resolvable:$true] %s189
          %s191 = sshll.u32 [#allocation7], 4
          %s192 = int_to_ptr.vmem [resolvable:$true] %s191
          %197 = dma.hbm_to_vmem [thread:$0]  %s190, 1024, %s192, [#allocation8], 64, 64, 4
        $region16: #{tpu_custom_call.1} parent=11 // pred_fallthru
          _
        // Predicated region
        $region17: #{tpu_custom_call.1} parent=11 // pred_check
          %p198 = pneg %p99
        $region18: #{tpu_custom_call.1} parent=11 // pred_check_branch
          %200 = sbr.rel (%p198) target = $region20
        $region19: #{tpu_custom_call.1} parent=11 // pred_region
          %202 = vsyncadd [#allocation8], 0
          %s203 = sshll.u32 %s2, 4
          %s204 = int_to_ptr.hbm [resolvable:$true] %s203
          %s205 = sshll.u32 [#allocation9], 4
          %s206 = int_to_ptr.vmem [resolvable:$true] %s205
          %211 = dma.hbm_to_vmem [thread:$0]  %s204, 2048, %s206, [#allocation8], 128, 128, 8
        $region20: #{tpu_custom_call.1} parent=11 // pred_fallthru
          _
        // Predicated region
        $region21: #{tpu_custom_call.1} parent=11 // pred_check
          %p212 = pneg %p120
        $region22: #{tpu_custom_call.1} parent=11 // pred_check_branch
          %214 = sbr.rel (%p212) target = $region24
        $region23: #{tpu_custom_call.1} parent=11 // pred_region
          %216 = vsyncadd [#allocation11], 0
          %s217 = sshll.u32 %s3, 4
          %s218 = int_to_ptr.hbm [resolvable:$true] %s217
          %s219 = sshll.u32 [#allocation10], 4
          %s220 = int_to_ptr.vmem [resolvable:$true] %s219
          %225 = dma.hbm_to_vmem [thread:$0]  %s218, 1024, %s220, [#allocation11], 64, 64, 4
        $region24: #{tpu_custom_call.1} parent=11 // pred_fallthru
          _
        // Predicated region
        $region25: #{tpu_custom_call.1} parent=11 // pred_check
          %p226 = pneg %p141
        $region26: #{tpu_custom_call.1} parent=11 // pred_check_branch
          %228 = sbr.rel (%p226) target = $region28
        $region27: #{tpu_custom_call.1} parent=11 // pred_region
          _
        $region28: #{tpu_custom_call.1} parent=11 // pred_fallthru
          _
      $region12: #{tpu_custom_call.1} parent=5 // pred_fallthru
        _
      %p229 = scmp.lt.s32.totalorder %s19, 2
      // Predicated region
      $region29: #{tpu_custom_call.1} parent=5 // pred_check
        %p230 = pneg %p229
      $region30: #{tpu_custom_call.1} parent=5 // pred_check_branch
        %232 = sbr.rel (%p230) target = $region32
      $region31: #{tpu_custom_call.1} parent=5 // pred_region
        // Predicated region
        $region33: #{tpu_custom_call.1} parent=31 // pred_check
          %p233 = pneg %p51
        $region34: #{tpu_custom_call.1} parent=31 // pred_check_branch
          %235 = sbr.rel (%p233) target = $region36
        $region35: #{tpu_custom_call.1} parent=31 // pred_region
          %s236 = sand.u32 %s41, 1
          %s237 = scalar_lea.sflag [#allocation5], %s236
          %s238 = sand.u32 %s41, 1
          %s239 = smul.addr %s238, 8
          %s240 = scalar_lea.vmem [#allocation4], %s239
          %242 = vsyncadd %s237, 0
          %s243 = smul.addr %s26, 2
          %s244 = smul.addr %s243, 4
          %s245 = scalar_lea.hbm %s0, %s244
          %s246 = sshll.u32 %s245, 4
          %s247 = int_to_ptr.hbm [resolvable:$true] %s246
          %s248 = sshll.u32 %s240, 4
          %s249 = int_to_ptr.vmem [resolvable:$true] %s248
          %254 = dma.hbm_to_vmem [thread:$0]  %s247, 128, %s249, %s237, 64, 64, 4
        $region36: #{tpu_custom_call.1} parent=31 // pred_fallthru
          _
      $region32: #{tpu_custom_call.1} parent=5 // pred_fallthru
        _
      %p255 = scmp.le.s32.totalorder 1, %s19
      %p256 = scmp.lt.s32.totalorder %s19, 3
      %p257 = pnand %p255, %p256
      %p258 = pneg %p257
      // Predicated region
      $region37: #{tpu_custom_call.1} parent=5 // pred_check
        _
      $region38: #{tpu_custom_call.1} parent=5 // pred_check_branch
        %260 = sbr.rel (%p257) target = $region40
      $region39: #{tpu_custom_call.1} parent=5 // pred_region
        %s261 = ssub.s32 %s19, 1
        %s262 = sand.u32 %s44, 1
        %s263 = scalar_lea.sflag [#allocation5], %s262
        %s264 = sand.u32 %s44, 1
        %s265 = smul.addr %s264, 8
        %s266 = scalar_lea.vmem [#allocation4], %s265
        // Predicated region
        $region41: #{tpu_custom_call.1} parent=39 // pred_check
          %p267 = pneg %p57
        $region42: #{tpu_custom_call.1} parent=39 // pred_check_branch
          %269 = sbr.rel (%p267) target = $region44
        $region43: #{tpu_custom_call.1} parent=39 // pred_region
          %271 = dma.done %s263, 128
        $region44: #{tpu_custom_call.1} parent=39 // pred_fallthru
          _
        // Predicated region
        $region45: #{tpu_custom_call.1} parent=39 // pred_check
          %p272 = pneg %p78
        $region46: #{tpu_custom_call.1} parent=39 // pred_check_branch
          %274 = sbr.rel (%p272) target = $region48
        $region47: #{tpu_custom_call.1} parent=39 // pred_region
          %276 = dma.done [#allocation8], 1024
        $region48: #{tpu_custom_call.1} parent=39 // pred_fallthru
          _
        // Predicated region
        $region49: #{tpu_custom_call.1} parent=39 // pred_check
          %p277 = pneg %p99
        $region50: #{tpu_custom_call.1} parent=39 // pred_check_branch
          %279 = sbr.rel (%p277) target = $region52
        $region51: #{tpu_custom_call.1} parent=39 // pred_region
          %281 = dma.done [#allocation8], 2048
        $region52: #{tpu_custom_call.1} parent=39 // pred_fallthru
          _
        // Predicated region
        $region53: #{tpu_custom_call.1} parent=39 // pred_check
          %p282 = pneg %p120
        $region54: #{tpu_custom_call.1} parent=39 // pred_check_branch
          %284 = sbr.rel (%p282) target = $region56
        $region55: #{tpu_custom_call.1} parent=39 // pred_region
          %286 = dma.done [#allocation11], 1024
        $region56: #{tpu_custom_call.1} parent=39 // pred_fallthru
          _
        %s287 = sand.u32 %s44, 1
        %s288 = scalar_lea.sflag [#allocation5], %s287
        %s289 = sand.u32 %s44, 1
        %s290 = smul.addr %s289, 8
        %s291 = scalar_lea.vmem [#allocation4], %s290
        %p292 = pneg %p57
        %p293 = pneg %p54
        %p294 = pneg %p78
        %p295 = pneg %p75
        %p296 = pneg %p99
        %p297 = pneg %p96
        %p298 = pneg %p120
        %p299 = pneg %p117
        %p300 = pneg %p141
        %p301 = pneg %p138
        %p302 = pneg %p169
        %p303 = pneg %p166
        %s304 = sand.u32 %s156, 1
        %s305 = scalar_lea.sflag [#allocation6], %s304
        %s306 = sand.u32 %s156, 1
        %s307 = smul.addr %s306, 16
        %s308 = scalar_lea.vmem [#allocation12], %s307
        %s309 = smul.u32 2, %s29
        %p311 = scmp.eq.s32.totalorder %s29, 0
        // Predicated region
        $region57: #{tpu_custom_call.1} parent=39 // pred_check
          %p312 = pneg %p311
        $region58: #{tpu_custom_call.1} parent=39 // pred_check_branch
          %314 = sbr.rel (%p312) target = $region60
        $region59: #{tpu_custom_call.1} parent=39 // pred_region
          %v315 = vld [vmem:[%s266] sm:$0xf]
          %v316 = vld [vmem:[%s266 + $0x4] sm:$0xf]
          %v317 = vld [vmem:[#allocation9] sm:$0xff]
          %v318 = vld [vmem:[#allocation9 + $0x8] sm:$0xff]
          %v319 = vld [vmem:[#allocation9 + $0x10] sm:$0xff]
          %v320 = vld [vmem:[#allocation9 + $0x18] sm:$0xff]
          %v321 = vld [vmem:[#allocation9 + $0x20] sm:$0xff]
          %v322 = vld [vmem:[#allocation9 + $0x28] sm:$0xff]
          %v323 = vld [vmem:[#allocation9 + $0x30] sm:$0xff]
          %v324 = vld [vmem:[#allocation9 + $0x38] sm:$0xff]
          %v325 = vld [vmem:[#allocation9 + $0x40] sm:$0xff]
          %v326 = vld [vmem:[#allocation9 + $0x48] sm:$0xff]
          %v327 = vld [vmem:[#allocation9 + $0x50] sm:$0xff]
          %v328 = vld [vmem:[#allocation9 + $0x58] sm:$0xff]
          %v329 = vld [vmem:[#allocation9 + $0x60] sm:$0xff]
          %v330 = vld [vmem:[#allocation9 + $0x68] sm:$0xff]
          %v331 = vld [vmem:[#allocation9 + $0x70] sm:$0xff]
          %v332 = vld [vmem:[#allocation9 + $0x78] sm:$0xff]
          %v335 = vunpack.c.l.b16 %v315
          %v336 = vunpack.c.l.b16 %v316
          %v337 = vpack.c.b16 %v336, %v335
          %v355 = vunpack.c.l.b16 %v317
          %v356 = vunpack.c.h.b16 %v317
          %v357 = vunpack.c.l.b16 %v318
          %v358 = vunpack.c.h.b16 %v318
          %v359 = vunpack.c.l.b16 %v319
          %v360 = vunpack.c.h.b16 %v319
          %v361 = vunpack.c.l.b16 %v320
          %v362 = vunpack.c.h.b16 %v320
          %v363 = vunpack.c.l.b16 %v321
          %v364 = vunpack.c.h.b16 %v321
          %v365 = vunpack.c.l.b16 %v322
          %v366 = vunpack.c.h.b16 %v322
          %v367 = vunpack.c.l.b16 %v323
          %v368 = vunpack.c.h.b16 %v323
          %v369 = vunpack.c.l.b16 %v324
          %v370 = vunpack.c.h.b16 %v324
          %v371 = vunpack.c.l.b16 %v325
          %v372 = vunpack.c.h.b16 %v325
          %v373 = vunpack.c.l.b16 %v326
          %v374 = vunpack.c.h.b16 %v326
          %v375 = vunpack.c.l.b16 %v327
          %v376 = vunpack.c.h.b16 %v327
          %v377 = vunpack.c.l.b16 %v328
          %v378 = vunpack.c.h.b16 %v328
          %v379 = vunpack.c.l.b16 %v329
          %v380 = vunpack.c.h.b16 %v329
          %v381 = vunpack.c.l.b16 %v330
          %v382 = vunpack.c.h.b16 %v330
          %v383 = vunpack.c.l.b16 %v331
          %v384 = vunpack.c.h.b16 %v331
          %v385 = vunpack.c.l.b16 %v332
          %v386 = vunpack.c.h.b16 %v332
          %v387 = vpack.c.b16 %v357, %v355
          %v388 = vpack.c.b16 %v358, %v356
          %v389 = vpack.c.b16 %v361, %v359
          %v390 = vpack.c.b16 %v362, %v360
          %v391 = vpack.c.b16 %v365, %v363
          %v392 = vpack.c.b16 %v366, %v364
          %v393 = vpack.c.b16 %v369, %v367
          %v394 = vpack.c.b16 %v370, %v368
          %v395 = vpack.c.b16 %v373, %v371
          %v396 = vpack.c.b16 %v374, %v372
          %v397 = vpack.c.b16 %v377, %v375
          %v398 = vpack.c.b16 %v378, %v376
          %v399 = vpack.c.b16 %v381, %v379
          %v400 = vpack.c.b16 %v382, %v380
          %v401 = vpack.c.b16 %v385, %v383
          %v402 = vpack.c.b16 %v386, %v384
          %419 = vmatpush.bf16.msra.mxu0 %v401
          %420 = vmatpush.bf16.msra.mxu0 %v399
          %421 = vmatpush.bf16.msra.mxu0 %v397
          %422 = vmatpush.bf16.msra.mxu0 %v395
          %423 = vmatpush.bf16.msra.mxu0 %v393
          %424 = vmatpush.bf16.msra.mxu0 %v391
          %425 = vmatpush.bf16.msra.mxu0 %v389
          %426 = vmatpush.bf16.msra.mxu0 %v387
          %427 = vmatmul.bf16.gmra.mxu0 %v337
          %v428 = vpop.f32.mrf.mxu0
          %v429 = vadd.f32 0.0, %v428
          %v430 = vpop.f32.mrf.mxu0
          %v431 = vadd.f32 0.0, %v430
          %432 = vdwg.mxu0
          %433 = vmatpush.bf16.msra.mxu0 %v402
          %434 = vmatpush.bf16.msra.mxu0 %v400
          %435 = vmatpush.bf16.msra.mxu0 %v398
          %436 = vmatpush.bf16.msra.mxu0 %v396
          %437 = vmatpush.bf16.msra.mxu0 %v394
          %438 = vmatpush.bf16.msra.mxu0 %v392
          %439 = vmatpush.bf16.msra.mxu0 %v390
          %440 = vmatpush.bf16.msra.mxu0 %v388
          %441 = vmatmul.bf16.gmra.mxu0 %v337
          %v442 = vpop.f32.mrf.mxu0
          %v443 = vadd.f32 0.0, %v442
          %v444 = vpop.f32.mrf.mxu0
          %v445 = vadd.f32 0.0, %v444
          %446 = vdwg.mxu0
          %v447 = vpack.c.bf16 %v443, %v429
          %v448 = vpack.c.bf16 %v445, %v431
          %449 = vst [vmem:[#allocation2] sm:$0xf] %v447
          %450 = vst [vmem:[#allocation2 + $0x4] sm:$0xf] %v448
          %v453 = vrot.slane %v447, 4
          %v454 = vrot.slane %v448, 4
          %457 = vst [vmem:[#allocation3] sm:$0xf] %v453
          %458 = vst [vmem:[#allocation3 + $0x4] sm:$0xf] %v454
        $region60: #{tpu_custom_call.1} parent=39 // pred_fallthru
          _
        %s459 = smul.u32 %s29, 16
        %s460 = sshra.s32 %s459, 3
        %s461 = sand.u32 %s459, 7
        %s462 = smul.addr %s460, 4
        %s463 = scalar_lea.vmem %s266, %s462 [#allocation4]
        %v464 = vld [vmem:[%s463] sm:$0xf]
        %v465 = vld [vmem:[%s463 + $0x4] sm:$0xf]
        %v466 = vld [vmem:[#allocation7] sm:$0xf]
        %v467 = vld [vmem:[#allocation7 + $0x4] sm:$0xf]
        %v468 = vld [vmem:[#allocation7 + $0x8] sm:$0xf]
        %v469 = vld [vmem:[#allocation7 + $0xc] sm:$0xf]
        %v470 = vld [vmem:[#allocation7 + $0x10] sm:$0xf]
        %v471 = vld [vmem:[#allocation7 + $0x14] sm:$0xf]
        %v472 = vld [vmem:[#allocation7 + $0x18] sm:$0xf]
        %v473 = vld [vmem:[#allocation7 + $0x1c] sm:$0xf]
        %v474 = vld [vmem:[#allocation7 + $0x20] sm:$0xf]
        %v475 = vld [vmem:[#allocation7 + $0x24] sm:$0xf]
        %v476 = vld [vmem:[#allocation7 + $0x28] sm:$0xf]
        %v477 = vld [vmem:[#allocation7 + $0x2c] sm:$0xf]
        %v478 = vld [vmem:[#allocation7 + $0x30] sm:$0xf]
        %v479 = vld [vmem:[#allocation7 + $0x34] sm:$0xf]
        %v480 = vld [vmem:[#allocation7 + $0x38] sm:$0xf]
        %v481 = vld [vmem:[#allocation7 + $0x3c] sm:$0xf]
        %v484 = vunpack.c.l.b16 %v464
        %v485 = vunpack.c.l.b16 %v465
        %v486 = vpack.c.b16 %v485, %v484
        %v504 = vunpack.c.l.b16 %v466
        %v505 = vunpack.c.l.b16 %v467
        %v506 = vunpack.c.l.b16 %v468
        %v507 = vunpack.c.l.b16 %v469
        %v508 = vunpack.c.l.b16 %v470
        %v509 = vunpack.c.l.b16 %v471
        %v510 = vunpack.c.l.b16 %v472
        %v511 = vunpack.c.l.b16 %v473
        %v512 = vunpack.c.l.b16 %v474
        %v513 = vunpack.c.l.b16 %v475
        %v514 = vunpack.c.l.b16 %v476
        %v515 = vunpack.c.l.b16 %v477
        %v516 = vunpack.c.l.b16 %v478
        %v517 = vunpack.c.l.b16 %v479
        %v518 = vunpack.c.l.b16 %v480
        %v519 = vunpack.c.l.b16 %v481
        %v520 = vpack.c.b16 %v505, %v504
        %v521 = vpack.c.b16 %v507, %v506
        %v522 = vpack.c.b16 %v509, %v508
        %v523 = vpack.c.b16 %v511, %v510
        %v524 = vpack.c.b16 %v513, %v512
        %v525 = vpack.c.b16 %v515, %v514
        %v526 = vpack.c.b16 %v517, %v516
        %v527 = vpack.c.b16 %v519, %v518
        %536 = vmatpush.bf16.msra.mxu0 %v527
        %537 = vmatpush.bf16.msra.mxu0 %v526
        %538 = vmatpush.bf16.msra.mxu0 %v525
        %539 = vmatpush.bf16.msra.mxu0 %v524
        %540 = vmatpush.bf16.msra.mxu0 %v523
        %541 = vmatpush.bf16.msra.mxu0 %v522
        %542 = vmatpush.bf16.msra.mxu0 %v521
        %543 = vmatpush.bf16.msra.mxu0 %v520
        %544 = vmatmul.bf16.gmra.mxu0 %v486
        %v545 = vpop.f32.mrf.mxu0
        %v546 = vadd.f32 0.0, %v545
        %v547 = vpop.f32.mrf.mxu0
        %v548 = vadd.f32 0.0, %v547
        %549 = vdwg.mxu0
        %v550 = vpack.c.bf16 %v546, %v546
        %v551 = vpack.c.bf16 %v548, %v548
        %554 = vrot.lane.b32.xlu0 %v550, 112
        %v555 = vpop.permute.xlu0 %554
        %556 = vrot.lane.b32.xlu0 %v551, 112
        %v557 = vpop.permute.xlu0 %556
        %560 = vrot.lane.b32.xlu0 %v550, 96
        %v561 = vpop.permute.xlu0 %560
        %562 = vrot.lane.b32.xlu0 %v551, 96
        %v563 = vpop.permute.xlu0 %562
        %566 = vrot.lane.b32.xlu0 %v550, 80
        %v567 = vpop.permute.xlu0 %566
        %568 = vrot.lane.b32.xlu0 %v551, 80
        %v569 = vpop.permute.xlu0 %568
        %572 = vrot.lane.b32.xlu0 %v550, 64
        %v573 = vpop.permute.xlu0 %572
        %574 = vrot.lane.b32.xlu0 %v551, 64
        %v575 = vpop.permute.xlu0 %574
        %578 = vrot.lane.b32.xlu0 %v550, 48
        %v579 = vpop.permute.xlu0 %578
        %580 = vrot.lane.b32.xlu0 %v551, 48
        %v581 = vpop.permute.xlu0 %580
        %584 = vrot.lane.b32.xlu0 %v550, 32
        %v585 = vpop.permute.xlu0 %584
        %586 = vrot.lane.b32.xlu0 %v551, 32
        %v587 = vpop.permute.xlu0 %586
        %590 = vrot.lane.b32.xlu0 %v550, 16
        %v591 = vpop.permute.xlu0 %590
        %592 = vrot.lane.b32.xlu0 %v551, 16
        %v593 = vpop.permute.xlu0 %592
        %v596 = vrot.slane %v573, 4
        %vm597 = vcmask 1047556
        %v598 = vsel %vm597, %v596, %v550
        %v600 = vunpack.c.l.s4 1983009808
        %v601 = vunpack.c.0.s8 %v600
        %v602 = vperm.slane %v598, %v601
        %v603 = vrot.slane %v585, 4
        %v604 = vsel %vm597, %v603, %v561
        %v606 = vunpack.c.l.s4 1983009808
        %v607 = vunpack.c.0.s8 %v606
        %v608 = vperm.slane %v604, %v607
        %v609 = vrot.slane %v608, 4
        %v610 = vsel %vm597, %v609, %v602
        %v611 = vrot.slane %v602, 4
        %v612 = vsel %vm597, %v608, %v611
        %v614 = vunpack.c.l.s4 1934713408
        %v615 = vunpack.c.0.s8 %v614
        %v616 = vperm.slane %v610, %v615
        %v618 = vunpack.c.l.s4 1934713408
        %v619 = vunpack.c.0.s8 %v618
        %v620 = vperm.slane %v612, %v619
        %v621 = vrot.slane %v616, 4
        %v622 = vsel %vm597, 0, %v621
        %v623 = vrot.slane %v620, 4
        %v624 = vsel %vm597, 0, %v623
        %v625 = vrot.slane %v579, 4
        %v626 = vsel %vm597, %v625, %v555
        %v628 = vunpack.c.l.s4 1983009808
        %v629 = vunpack.c.0.s8 %v628
        %v630 = vperm.slane %v626, %v629
        %v631 = vrot.slane %v591, 4
        %v632 = vsel %vm597, %v631, %v567
        %v634 = vunpack.c.l.s4 1983009808
        %v635 = vunpack.c.0.s8 %v634
        %v636 = vperm.slane %v632, %v635
        %v637 = vrot.slane %v636, 4
        %v638 = vsel %vm597, %v637, %v630
        %v639 = vrot.slane %v630, 4
        %v640 = vsel %vm597, %v636, %v639
        %v642 = vunpack.c.l.s4 1934713408
        %v643 = vunpack.c.0.s8 %v642
        %v644 = vperm.slane %v638, %v643
        %v646 = vunpack.c.l.s4 1934713408
        %v647 = vunpack.c.0.s8 %v646
        %v648 = vperm.slane %v640, %v647
        %v649 = vrot.slane %v644, 4
        %v650 = vsel %vm597, 0, %v649
        %v651 = vrot.slane %v648, 4
        %v652 = vsel %vm597, 0, %v651
        %v653 = vrot.slane %v575, 4
        %v654 = vsel %vm597, %v653, %v551
        %v656 = vunpack.c.l.s4 1983009808
        %v657 = vunpack.c.0.s8 %v656
        %v658 = vperm.slane %v654, %v657
        %v659 = vrot.slane %v587, 4
        %v660 = vsel %vm597, %v659, %v563
        %v662 = vunpack.c.l.s4 1983009808
        %v663 = vunpack.c.0.s8 %v662
        %v664 = vperm.slane %v660, %v663
        %v665 = vrot.slane %v664, 4
        %v666 = vsel %vm597, %v665, %v658
        %v667 = vrot.slane %v658, 4
        %v668 = vsel %vm597, %v664, %v667
        %v670 = vunpack.c.l.s4 1934713408
        %v671 = vunpack.c.0.s8 %v670
        %v672 = vperm.slane %v666, %v671
        %v674 = vunpack.c.l.s4 1934713408
        %v675 = vunpack.c.0.s8 %v674
        %v676 = vperm.slane %v668, %v675
        %v677 = vrot.slane %v672, 4
        %v678 = vsel %vm597, 0, %v677
        %v679 = vrot.slane %v676, 4
        %v680 = vsel %vm597, 0, %v679
        %v681 = vrot.slane %v581, 4
        %v682 = vsel %vm597, %v681, %v557
        %v684 = vunpack.c.l.s4 1983009808
        %v685 = vunpack.c.0.s8 %v684
        %v686 = vperm.slane %v682, %v685
        %v687 = vrot.slane %v593, 4
        %v688 = vsel %vm597, %v687, %v569
        %v690 = vunpack.c.l.s4 1983009808
        %v691 = vunpack.c.0.s8 %v690
        %v692 = vperm.slane %v688, %v691
        %v693 = vrot.slane %v692, 4
        %v694 = vsel %vm597, %v693, %v686
        %v695 = vrot.slane %v686, 4
        %v696 = vsel %vm597, %v692, %v695
        %v698 = vunpack.c.l.s4 1934713408
        %v699 = vunpack.c.0.s8 %v698
        %v700 = vperm.slane %v694, %v699
        %v702 = vunpack.c.l.s4 1934713408
        %v703 = vunpack.c.0.s8 %v702
        %v704 = vperm.slane %v696, %v703
        %v705 = vrot.slane %v700, 4
        %v706 = vsel %vm597, 0, %v705
        %v707 = vrot.slane %v704, 4
        %v708 = vsel %vm597, 0, %v707
        %v711 = vpack.i.b16 %v644, %v616
        %v713 = vshrl.u32 %v616, 16
        %v714 = vshrl.u32 %v644, 16
        %v715 = vpack.i.b16 %v714, %v713
        %v719 = vpack.i.b16 %v650, %v622
        %v721 = vshrl.u32 %v622, 16
        %v722 = vshrl.u32 %v650, 16
        %v723 = vpack.i.b16 %v722, %v721
        %v727 = vpack.i.b16 %v648, %v620
        %v729 = vshrl.u32 %v620, 16
        %v730 = vshrl.u32 %v648, 16
        %v731 = vpack.i.b16 %v730, %v729
        %v735 = vpack.i.b16 %v652, %v624
        %v737 = vshrl.u32 %v624, 16
        %v738 = vshrl.u32 %v652, 16
        %v739 = vpack.i.b16 %v738, %v737
        %v743 = vpack.i.b16 %v700, %v672
        %v745 = vshrl.u32 %v672, 16
        %v746 = vshrl.u32 %v700, 16
        %v747 = vpack.i.b16 %v746, %v745
        %v751 = vpack.i.b16 %v706, %v678
        %v753 = vshrl.u32 %v678, 16
        %v754 = vshrl.u32 %v706, 16
        %v755 = vpack.i.b16 %v754, %v753
        %v759 = vpack.i.b16 %v704, %v676
        %v761 = vshrl.u32 %v676, 16
        %v762 = vshrl.u32 %v704, 16
        %v763 = vpack.i.b16 %v762, %v761
        %v767 = vpack.i.b16 %v708, %v680
        %v769 = vshrl.u32 %v680, 16
        %v770 = vshrl.u32 %v708, 16
        %v771 = vpack.i.b16 %v770, %v769
        %v773 = vrot.slane %v727, 4
        %v774 = vsel %vm597, %v773, %v711
        %v776 = vunpack.c.l.s4 1983009808
        %v777 = vunpack.c.0.s8 %v776
        %v778 = vperm.slane %v774, %v777
        %v779 = vrot.slane %v735, 4
        %v780 = vsel %vm597, %v779, %v719
        %v782 = vunpack.c.l.s4 1983009808
        %v783 = vunpack.c.0.s8 %v782
        %v784 = vperm.slane %v780, %v783
        %v785 = vrot.slane %v784, 4
        %v786 = vsel %vm597, %v785, %v778
        %v787 = vrot.slane %v778, 4
        %v788 = vsel %vm597, %v784, %v787
        %v790 = vunpack.c.l.s4 1934713408
        %v791 = vunpack.c.0.s8 %v790
        %v792 = vperm.slane %v786, %v791
        %v794 = vunpack.c.l.s4 1934713408
        %v795 = vunpack.c.0.s8 %v794
        %v796 = vperm.slane %v788, %v795
        %v797 = vrot.slane %v792, 4
        %v798 = vsel %vm597, 0, %v797
        %v799 = vrot.slane %v796, 4
        %v800 = vsel %vm597, 0, %v799
        %v801 = vrot.slane %v731, 4
        %v802 = vsel %vm597, %v801, %v715
        %v804 = vunpack.c.l.s4 1983009808
        %v805 = vunpack.c.0.s8 %v804
        %v806 = vperm.slane %v802, %v805
        %v807 = vrot.slane %v739, 4
        %v808 = vsel %vm597, %v807, %v723
        %v810 = vunpack.c.l.s4 1983009808
        %v811 = vunpack.c.0.s8 %v810
        %v812 = vperm.slane %v808, %v811
        %v813 = vrot.slane %v812, 4
        %v814 = vsel %vm597, %v813, %v806
        %v815 = vrot.slane %v806, 4
        %v816 = vsel %vm597, %v812, %v815
        %v818 = vunpack.c.l.s4 1934713408
        %v819 = vunpack.c.0.s8 %v818
        %v820 = vperm.slane %v814, %v819
        %v822 = vunpack.c.l.s4 1934713408
        %v823 = vunpack.c.0.s8 %v822
        %v824 = vperm.slane %v816, %v823
        %v825 = vrot.slane %v820, 4
        %v826 = vsel %vm597, 0, %v825
        %v827 = vrot.slane %v824, 4
        %v828 = vsel %vm597, 0, %v827
        %v829 = vrot.slane %v759, 4
        %v830 = vsel %vm597, %v829, %v743
        %v832 = vunpack.c.l.s4 1983009808
        %v833 = vunpack.c.0.s8 %v832
        %v834 = vperm.slane %v830, %v833
        %v835 = vrot.slane %v767, 4
        %v836 = vsel %vm597, %v835, %v751
        %v838 = vunpack.c.l.s4 1983009808
        %v839 = vunpack.c.0.s8 %v838
        %v840 = vperm.slane %v836, %v839
        %v841 = vrot.slane %v840, 4
        %v842 = vsel %vm597, %v841, %v834
        %v843 = vrot.slane %v834, 4
        %v844 = vsel %vm597, %v840, %v843
        %v846 = vunpack.c.l.s4 1934713408
        %v847 = vunpack.c.0.s8 %v846
        %v848 = vperm.slane %v842, %v847
        %v850 = vunpack.c.l.s4 1934713408
        %v851 = vunpack.c.0.s8 %v850
        %v852 = vperm.slane %v844, %v851
        %v853 = vrot.slane %v848, 4
        %v854 = vsel %vm597, 0, %v853
        %v855 = vrot.slane %v852, 4
        %v856 = vsel %vm597, 0, %v855
        %v857 = vrot.slane %v763, 4
        %v858 = vsel %vm597, %v857, %v747
        %v860 = vunpack.c.l.s4 1983009808
        %v861 = vunpack.c.0.s8 %v860
        %v862 = vperm.slane %v858, %v861
        %v863 = vrot.slane %v771, 4
        %v864 = vsel %vm597, %v863, %v755
        %v866 = vunpack.c.l.s4 1983009808
        %v867 = vunpack.c.0.s8 %v866
        %v868 = vperm.slane %v864, %v867
        %v869 = vrot.slane %v868, 4
        %v870 = vsel %vm597, %v869, %v862
        %v871 = vrot.slane %v862, 4
        %v872 = vsel %vm597, %v868, %v871
        %v874 = vunpack.c.l.s4 1934713408
        %v875 = vunpack.c.0.s8 %v874
        %v876 = vperm.slane %v870, %v875
        %v878 = vunpack.c.l.s4 1934713408
        %v879 = vunpack.c.0.s8 %v878
        %v880 = vperm.slane %v872, %v879
        %v881 = vrot.slane %v876, 4
        %v882 = vsel %vm597, 0, %v881
        %v883 = vrot.slane %v880, 4
        %v884 = vsel %vm597, 0, %v883
        %v887 = vpack.i.b16 %v820, %v792
        %v888 = vshrl.u32 %v792, 16
        %v889 = vshrl.u32 %v820, 16
        %v890 = vpack.i.b16 %v889, %v888
        %v893 = vpack.i.b16 %v826, %v798
        %v894 = vshrl.u32 %v798, 16
        %v895 = vshrl.u32 %v826, 16
        %v896 = vpack.i.b16 %v895, %v894
        %v899 = vpack.i.b16 %v824, %v796
        %v900 = vshrl.u32 %v796, 16
        %v901 = vshrl.u32 %v824, 16
        %v902 = vpack.i.b16 %v901, %v900
        %v905 = vpack.i.b16 %v828, %v800
        %v906 = vshrl.u32 %v800, 16
        %v907 = vshrl.u32 %v828, 16
        %v908 = vpack.i.b16 %v907, %v906
        %v911 = vpack.i.b16 %v876, %v848
        %v912 = vshrl.u32 %v848, 16
        %v913 = vshrl.u32 %v876, 16
        %v914 = vpack.i.b16 %v913, %v912
        %v917 = vpack.i.b16 %v882, %v854
        %v918 = vshrl.u32 %v854, 16
        %v919 = vshrl.u32 %v882, 16
        %v920 = vpack.i.b16 %v919, %v918
        %v923 = vpack.i.b16 %v880, %v852
        %v924 = vshrl.u32 %v852, 16
        %v925 = vshrl.u32 %v880, 16
        %v926 = vpack.i.b16 %v925, %v924
        %v929 = vpack.i.b16 %v884, %v856
        %v930 = vshrl.u32 %v856, 16
        %v931 = vshrl.u32 %v884, 16
        %v932 = vpack.i.b16 %v931, %v930
        %v933 = vld [vmem:[#allocation2] sm:$0xf]
        %v934 = vld [vmem:[#allocation2 + $0x4] sm:$0xf]
        %937 = vrot.lane.b32.xlu0 %v933, 112
        %v938 = vpop.permute.xlu0 %937
        %939 = vrot.lane.b32.xlu0 %v934, 112
        %v940 = vpop.permute.xlu0 %939
        %943 = vrot.lane.b32.xlu0 %v933, 96
        %v944 = vpop.permute.xlu0 %943
        %945 = vrot.lane.b32.xlu0 %v934, 96
        %v946 = vpop.permute.xlu0 %945
        %949 = vrot.lane.b32.xlu0 %v933, 80
        %v950 = vpop.permute.xlu0 %949
        %951 = vrot.lane.b32.xlu0 %v934, 80
        %v952 = vpop.permute.xlu0 %951
        %955 = vrot.lane.b32.xlu0 %v933, 64
        %v956 = vpop.permute.xlu0 %955
        %957 = vrot.lane.b32.xlu0 %v934, 64
        %v958 = vpop.permute.xlu0 %957
        %961 = vrot.lane.b32.xlu0 %v933, 48
        %v962 = vpop.permute.xlu0 %961
        %963 = vrot.lane.b32.xlu0 %v934, 48
        %v964 = vpop.permute.xlu0 %963
        %967 = vrot.lane.b32.xlu0 %v933, 32
        %v968 = vpop.permute.xlu0 %967
        %969 = vrot.lane.b32.xlu0 %v934, 32
        %v970 = vpop.permute.xlu0 %969
        %973 = vrot.lane.b32.xlu0 %v933, 16
        %v974 = vpop.permute.xlu0 %973
        %975 = vrot.lane.b32.xlu0 %v934, 16
        %v976 = vpop.permute.xlu0 %975
        %v979 = vrot.slane %v956, 4
        %v980 = vsel %vm597, %v979, %v933
        %v982 = vunpack.c.l.s4 1983009808
        %v983 = vunpack.c.0.s8 %v982
        %v984 = vperm.slane %v980, %v983
        %v985 = vrot.slane %v968, 4
        %v986 = vsel %vm597, %v985, %v944
        %v988 = vunpack.c.l.s4 1983009808
        %v989 = vunpack.c.0.s8 %v988
        %v990 = vperm.slane %v986, %v989
        %v991 = vrot.slane %v990, 4
        %v992 = vsel %vm597, %v991, %v984
        %v993 = vrot.slane %v984, 4
        %v994 = vsel %vm597, %v990, %v993
        %v996 = vunpack.c.l.s4 1934713408
        %v997 = vunpack.c.0.s8 %v996
        %v998 = vperm.slane %v992, %v997
        %v1000 = vunpack.c.l.s4 1934713408
        %v1001 = vunpack.c.0.s8 %v1000
        %v1002 = vperm.slane %v994, %v1001
        %v1003 = vrot.slane %v998, 4
        %v1004 = vsel %vm597, 0, %v1003
        %v1005 = vrot.slane %v1002, 4
        %v1006 = vsel %vm597, 0, %v1005
        %v1007 = vrot.slane %v962, 4
        %v1008 = vsel %vm597, %v1007, %v938
        %v1010 = vunpack.c.l.s4 1983009808
        %v1011 = vunpack.c.0.s8 %v1010
        %v1012 = vperm.slane %v1008, %v1011
        %v1013 = vrot.slane %v974, 4
        %v1014 = vsel %vm597, %v1013, %v950
        %v1016 = vunpack.c.l.s4 1983009808
        %v1017 = vunpack.c.0.s8 %v1016
        %v1018 = vperm.slane %v1014, %v1017
        %v1019 = vrot.slane %v1018, 4
        %v1020 = vsel %vm597, %v1019, %v1012
        %v1021 = vrot.slane %v1012, 4
        %v1022 = vsel %vm597, %v1018, %v1021
        %v1024 = vunpack.c.l.s4 1934713408
        %v1025 = vunpack.c.0.s8 %v1024
        %v1026 = vperm.slane %v1020, %v1025
        %v1028 = vunpack.c.l.s4 1934713408
        %v1029 = vunpack.c.0.s8 %v1028
        %v1030 = vperm.slane %v1022, %v1029
        %v1031 = vrot.slane %v1026, 4
        %v1032 = vsel %vm597, 0, %v1031
        %v1033 = vrot.slane %v1030, 4
        %v1034 = vsel %vm597, 0, %v1033
        %v1035 = vrot.slane %v958, 4
        %v1036 = vsel %vm597, %v1035, %v934
        %v1038 = vunpack.c.l.s4 1983009808
        %v1039 = vunpack.c.0.s8 %v1038
        %v1040 = vperm.slane %v1036, %v1039
        %v1041 = vrot.slane %v970, 4
        %v1042 = vsel %vm597, %v1041, %v946
        %v1044 = vunpack.c.l.s4 1983009808
        %v1045 = vunpack.c.0.s8 %v1044
        %v1046 = vperm.slane %v1042, %v1045
        %v1047 = vrot.slane %v1046, 4
        %v1048 = vsel %vm597, %v1047, %v1040
        %v1049 = vrot.slane %v1040, 4
        %v1050 = vsel %vm597, %v1046, %v1049
        %v1052 = vunpack.c.l.s4 1934713408
        %v1053 = vunpack.c.0.s8 %v1052
        %v1054 = vperm.slane %v1048, %v1053
        %v1056 = vunpack.c.l.s4 1934713408
        %v1057 = vunpack.c.0.s8 %v1056
        %v1058 = vperm.slane %v1050, %v1057
        %v1059 = vrot.slane %v1054, 4
        %v1060 = vsel %vm597, 0, %v1059
        %v1061 = vrot.slane %v1058, 4
        %v1062 = vsel %vm597, 0, %v1061
        %v1063 = vrot.slane %v964, 4
        %v1064 = vsel %vm597, %v1063, %v940
        %v1066 = vunpack.c.l.s4 1983009808
        %v1067 = vunpack.c.0.s8 %v1066
        %v1068 = vperm.slane %v1064, %v1067
        %v1069 = vrot.slane %v976, 4
        %v1070 = vsel %vm597, %v1069, %v952
        %v1072 = vunpack.c.l.s4 1983009808
        %v1073 = vunpack.c.0.s8 %v1072
        %v1074 = vperm.slane %v1070, %v1073
        %v1075 = vrot.slane %v1074, 4
        %v1076 = vsel %vm597, %v1075, %v1068
        %v1077 = vrot.slane %v1068, 4
        %v1078 = vsel %vm597, %v1074, %v1077
        %v1080 = vunpack.c.l.s4 1934713408
        %v1081 = vunpack.c.0.s8 %v1080
        %v1082 = vperm.slane %v1076, %v1081
        %v1084 = vunpack.c.l.s4 1934713408
        %v1085 = vunpack.c.0.s8 %v1084
        %v1086 = vperm.slane %v1078, %v1085
        %v1087 = vrot.slane %v1082, 4
        %v1088 = vsel %vm597, 0, %v1087
        %v1089 = vrot.slane %v1086, 4
        %v1090 = vsel %vm597, 0, %v1089
        %v1093 = vpack.i.b16 %v1026, %v998
        %v1095 = vshrl.u32 %v998, 16
        %v1096 = vshrl.u32 %v1026, 16
        %v1097 = vpack.i.b16 %v1096, %v1095
        %v1101 = vpack.i.b16 %v1032, %v1004
        %v1103 = vshrl.u32 %v1004, 16
        %v1104 = vshrl.u32 %v1032, 16
        %v1105 = vpack.i.b16 %v1104, %v1103
        %v1109 = vpack.i.b16 %v1030, %v1002
        %v1111 = vshrl.u32 %v1002, 16
        %v1112 = vshrl.u32 %v1030, 16
        %v1113 = vpack.i.b16 %v1112, %v1111
        %v1117 = vpack.i.b16 %v1034, %v1006
        %v1119 = vshrl.u32 %v1006, 16
        %v1120 = vshrl.u32 %v1034, 16
        %v1121 = vpack.i.b16 %v1120, %v1119
        %v1125 = vpack.i.b16 %v1082, %v1054
        %v1127 = vshrl.u32 %v1054, 16
        %v1128 = vshrl.u32 %v1082, 16
        %v1129 = vpack.i.b16 %v1128, %v1127
        %v1133 = vpack.i.b16 %v1088, %v1060
        %v1135 = vshrl.u32 %v1060, 16
        %v1136 = vshrl.u32 %v1088, 16
        %v1137 = vpack.i.b16 %v1136, %v1135
        %v1141 = vpack.i.b16 %v1086, %v1058
        %v1143 = vshrl.u32 %v1058, 16
        %v1144 = vshrl.u32 %v1086, 16
        %v1145 = vpack.i.b16 %v1144, %v1143
        %v1149 = vpack.i.b16 %v1090, %v1062
        %v1151 = vshrl.u32 %v1062, 16
        %v1152 = vshrl.u32 %v1090, 16
        %v1153 = vpack.i.b16 %v1152, %v1151
        %v1155 = vrot.slane %v1109, 4
        %v1156 = vsel %vm597, %v1155, %v1093
        %v1158 = vunpack.c.l.s4 1983009808
        %v1159 = vunpack.c.0.s8 %v1158
        %v1160 = vperm.slane %v1156, %v1159
        %v1161 = vrot.slane %v1117, 4
        %v1162 = vsel %vm597, %v1161, %v1101
        %v1164 = vunpack.c.l.s4 1983009808
        %v1165 = vunpack.c.0.s8 %v1164
        %v1166 = vperm.slane %v1162, %v1165
        %v1167 = vrot.slane %v1166, 4
        %v1168 = vsel %vm597, %v1167, %v1160
        %v1169 = vrot.slane %v1160, 4
        %v1170 = vsel %vm597, %v1166, %v1169
        %v1172 = vunpack.c.l.s4 1934713408
        %v1173 = vunpack.c.0.s8 %v1172
        %v1174 = vperm.slane %v1168, %v1173
        %v1176 = vunpack.c.l.s4 1934713408
        %v1177 = vunpack.c.0.s8 %v1176
        %v1178 = vperm.slane %v1170, %v1177
        %v1179 = vrot.slane %v1174, 4
        %v1180 = vsel %vm597, 0, %v1179
        %v1181 = vrot.slane %v1178, 4
        %v1182 = vsel %vm597, 0, %v1181
        %v1183 = vrot.slane %v1113, 4
        %v1184 = vsel %vm597, %v1183, %v1097
        %v1186 = vunpack.c.l.s4 1983009808
        %v1187 = vunpack.c.0.s8 %v1186
        %v1188 = vperm.slane %v1184, %v1187
        %v1189 = vrot.slane %v1121, 4
        %v1190 = vsel %vm597, %v1189, %v1105
        %v1192 = vunpack.c.l.s4 1983009808
        %v1193 = vunpack.c.0.s8 %v1192
        %v1194 = vperm.slane %v1190, %v1193
        %v1195 = vrot.slane %v1194, 4
        %v1196 = vsel %vm597, %v1195, %v1188
        %v1197 = vrot.slane %v1188, 4
        %v1198 = vsel %vm597, %v1194, %v1197
        %v1200 = vunpack.c.l.s4 1934713408
        %v1201 = vunpack.c.0.s8 %v1200
        %v1202 = vperm.slane %v1196, %v1201
        %v1204 = vunpack.c.l.s4 1934713408
        %v1205 = vunpack.c.0.s8 %v1204
        %v1206 = vperm.slane %v1198, %v1205
        %v1207 = vrot.slane %v1202, 4
        %v1208 = vsel %vm597, 0, %v1207
        %v1209 = vrot.slane %v1206, 4
        %v1210 = vsel %vm597, 0, %v1209
        %v1211 = vrot.slane %v1141, 4
        %v1212 = vsel %vm597, %v1211, %v1125
        %v1214 = vunpack.c.l.s4 1983009808
        %v1215 = vunpack.c.0.s8 %v1214
        %v1216 = vperm.slane %v1212, %v1215
        %v1217 = vrot.slane %v1149, 4
        %v1218 = vsel %vm597, %v1217, %v1133
        %v1220 = vunpack.c.l.s4 1983009808
        %v1221 = vunpack.c.0.s8 %v1220
        %v1222 = vperm.slane %v1218, %v1221
        %v1223 = vrot.slane %v1222, 4
        %v1224 = vsel %vm597, %v1223, %v1216
        %v1225 = vrot.slane %v1216, 4
        %v1226 = vsel %vm597, %v1222, %v1225
        %v1228 = vunpack.c.l.s4 1934713408
        %v1229 = vunpack.c.0.s8 %v1228
        %v1230 = vperm.slane %v1224, %v1229
        %v1232 = vunpack.c.l.s4 1934713408
        %v1233 = vunpack.c.0.s8 %v1232
        %v1234 = vperm.slane %v1226, %v1233
        %v1235 = vrot.slane %v1230, 4
        %v1236 = vsel %vm597, 0, %v1235
        %v1237 = vrot.slane %v1234, 4
        %v1238 = vsel %vm597, 0, %v1237
        %v1239 = vrot.slane %v1145, 4
        %v1240 = vsel %vm597, %v1239, %v1129
        %v1242 = vunpack.c.l.s4 1983009808
        %v1243 = vunpack.c.0.s8 %v1242
        %v1244 = vperm.slane %v1240, %v1243
        %v1245 = vrot.slane %v1153, 4
        %v1246 = vsel %vm597, %v1245, %v1137
        %v1248 = vunpack.c.l.s4 1983009808
        %v1249 = vunpack.c.0.s8 %v1248
        %v1250 = vperm.slane %v1246, %v1249
        %v1251 = vrot.slane %v1250, 4
        %v1252 = vsel %vm597, %v1251, %v1244
        %v1253 = vrot.slane %v1244, 4
        %v1254 = vsel %vm597, %v1250, %v1253
        %v1256 = vunpack.c.l.s4 1934713408
        %v1257 = vunpack.c.0.s8 %v1256
        %v1258 = vperm.slane %v1252, %v1257
        %v1260 = vunpack.c.l.s4 1934713408
        %v1261 = vunpack.c.0.s8 %v1260
        %v1262 = vperm.slane %v1254, %v1261
        %v1263 = vrot.slane %v1258, 4
        %v1264 = vsel %vm597, 0, %v1263
        %v1265 = vrot.slane %v1262, 4
        %v1266 = vsel %vm597, 0, %v1265
        %v1269 = vpack.i.b16 %v1202, %v1174
        %v1270 = vshrl.u32 %v1174, 16
        %v1271 = vshrl.u32 %v1202, 16
        %v1272 = vpack.i.b16 %v1271, %v1270
        %v1275 = vpack.i.b16 %v1208, %v1180
        %v1276 = vshrl.u32 %v1180, 16
        %v1277 = vshrl.u32 %v1208, 16
        %v1278 = vpack.i.b16 %v1277, %v1276
        %v1281 = vpack.i.b16 %v1206, %v1178
        %v1282 = vshrl.u32 %v1178, 16
        %v1283 = vshrl.u32 %v1206, 16
        %v1284 = vpack.i.b16 %v1283, %v1282
        %v1287 = vpack.i.b16 %v1210, %v1182
        %v1288 = vshrl.u32 %v1182, 16
        %v1289 = vshrl.u32 %v1210, 16
        %v1290 = vpack.i.b16 %v1289, %v1288
        %v1293 = vpack.i.b16 %v1258, %v1230
        %v1294 = vshrl.u32 %v1230, 16
        %v1295 = vshrl.u32 %v1258, 16
        %v1296 = vpack.i.b16 %v1295, %v1294
        %v1299 = vpack.i.b16 %v1264, %v1236
        %v1300 = vshrl.u32 %v1236, 16
        %v1301 = vshrl.u32 %v1264, 16
        %v1302 = vpack.i.b16 %v1301, %v1300
        %v1305 = vpack.i.b16 %v1262, %v1234
        %v1306 = vshrl.u32 %v1234, 16
        %v1307 = vshrl.u32 %v1262, 16
        %v1308 = vpack.i.b16 %v1307, %v1306
        %v1311 = vpack.i.b16 %v1266, %v1238
        %v1312 = vshrl.u32 %v1238, 16
        %v1313 = vshrl.u32 %v1266, 16
        %v1314 = vpack.i.b16 %v1313, %v1312
        %v1315 = vld [vmem:[#allocation3] sm:$0xf]
        %v1316 = vld [vmem:[#allocation3 + $0x4] sm:$0xf]
        %1319 = vrot.lane.b32.xlu0 %v1315, 112
        %v1320 = vpop.permute.xlu0 %1319
        %1321 = vrot.lane.b32.xlu0 %v1316, 112
        %v1322 = vpop.permute.xlu0 %1321
        %1325 = vrot.lane.b32.xlu0 %v1315, 96
        %v1326 = vpop.permute.xlu0 %1325
        %1327 = vrot.lane.b32.xlu0 %v1316, 96
        %v1328 = vpop.permute.xlu0 %1327
        %1331 = vrot.lane.b32.xlu0 %v1315, 80
        %v1332 = vpop.permute.xlu0 %1331
        %1333 = vrot.lane.b32.xlu0 %v1316, 80
        %v1334 = vpop.permute.xlu0 %1333
        %1337 = vrot.lane.b32.xlu0 %v1315, 64
        %v1338 = vpop.permute.xlu0 %1337
        %1339 = vrot.lane.b32.xlu0 %v1316, 64
        %v1340 = vpop.permute.xlu0 %1339
        %1343 = vrot.lane.b32.xlu0 %v1315, 48
        %v1344 = vpop.permute.xlu0 %1343
        %1345 = vrot.lane.b32.xlu0 %v1316, 48
        %v1346 = vpop.permute.xlu0 %1345
        %1349 = vrot.lane.b32.xlu0 %v1315, 32
        %v1350 = vpop.permute.xlu0 %1349
        %1351 = vrot.lane.b32.xlu0 %v1316, 32
        %v1352 = vpop.permute.xlu0 %1351
        %1355 = vrot.lane.b32.xlu0 %v1315, 16
        %v1356 = vpop.permute.xlu0 %1355
        %1357 = vrot.lane.b32.xlu0 %v1316, 16
        %v1358 = vpop.permute.xlu0 %1357
        %v1361 = vrot.slane %v1338, 4
        %v1362 = vsel %vm597, %v1361, %v1315
        %v1364 = vunpack.c.l.s4 1983009808
        %v1365 = vunpack.c.0.s8 %v1364
        %v1366 = vperm.slane %v1362, %v1365
        %v1367 = vrot.slane %v1350, 4
        %v1368 = vsel %vm597, %v1367, %v1326
        %v1370 = vunpack.c.l.s4 1983009808
        %v1371 = vunpack.c.0.s8 %v1370
        %v1372 = vperm.slane %v1368, %v1371
        %v1373 = vrot.slane %v1372, 4
        %v1374 = vsel %vm597, %v1373, %v1366
        %v1375 = vrot.slane %v1366, 4
        %v1376 = vsel %vm597, %v1372, %v1375
        %v1378 = vunpack.c.l.s4 1934713408
        %v1379 = vunpack.c.0.s8 %v1378
        %v1380 = vperm.slane %v1374, %v1379
        %v1382 = vunpack.c.l.s4 1934713408
        %v1383 = vunpack.c.0.s8 %v1382
        %v1384 = vperm.slane %v1376, %v1383
        %v1385 = vrot.slane %v1380, 4
        %v1386 = vsel %vm597, 0, %v1385
        %v1387 = vrot.slane %v1384, 4
        %v1388 = vsel %vm597, 0, %v1387
        %v1389 = vrot.slane %v1344, 4
        %v1390 = vsel %vm597, %v1389, %v1320
        %v1392 = vunpack.c.l.s4 1983009808
        %v1393 = vunpack.c.0.s8 %v1392
        %v1394 = vperm.slane %v1390, %v1393
        %v1395 = vrot.slane %v1356, 4
        %v1396 = vsel %vm597, %v1395, %v1332
        %v1398 = vunpack.c.l.s4 1983009808
        %v1399 = vunpack.c.0.s8 %v1398
        %v1400 = vperm.slane %v1396, %v1399
        %v1401 = vrot.slane %v1400, 4
        %v1402 = vsel %vm597, %v1401, %v1394
        %v1403 = vrot.slane %v1394, 4
        %v1404 = vsel %vm597, %v1400, %v1403
        %v1406 = vunpack.c.l.s4 1934713408
        %v1407 = vunpack.c.0.s8 %v1406
        %v1408 = vperm.slane %v1402, %v1407
        %v1410 = vunpack.c.l.s4 1934713408
        %v1411 = vunpack.c.0.s8 %v1410
        %v1412 = vperm.slane %v1404, %v1411
        %v1413 = vrot.slane %v1408, 4
        %v1414 = vsel %vm597, 0, %v1413
        %v1415 = vrot.slane %v1412, 4
        %v1416 = vsel %vm597, 0, %v1415
        %v1417 = vrot.slane %v1340, 4
        %v1418 = vsel %vm597, %v1417, %v1316
        %v1420 = vunpack.c.l.s4 1983009808
        %v1421 = vunpack.c.0.s8 %v1420
        %v1422 = vperm.slane %v1418, %v1421
        %v1423 = vrot.slane %v1352, 4
        %v1424 = vsel %vm597, %v1423, %v1328
        %v1426 = vunpack.c.l.s4 1983009808
        %v1427 = vunpack.c.0.s8 %v1426
        %v1428 = vperm.slane %v1424, %v1427
        %v1429 = vrot.slane %v1428, 4
        %v1430 = vsel %vm597, %v1429, %v1422
        %v1431 = vrot.slane %v1422, 4
        %v1432 = vsel %vm597, %v1428, %v1431
        %v1434 = vunpack.c.l.s4 1934713408
        %v1435 = vunpack.c.0.s8 %v1434
        %v1436 = vperm.slane %v1430, %v1435
        %v1438 = vunpack.c.l.s4 1934713408
        %v1439 = vunpack.c.0.s8 %v1438
        %v1440 = vperm.slane %v1432, %v1439
        %v1441 = vrot.slane %v1436, 4
        %v1442 = vsel %vm597, 0, %v1441
        %v1443 = vrot.slane %v1440, 4
        %v1444 = vsel %vm597, 0, %v1443
        %v1445 = vrot.slane %v1346, 4
        %v1446 = vsel %vm597, %v1445, %v1322
        %v1448 = vunpack.c.l.s4 1983009808
        %v1449 = vunpack.c.0.s8 %v1448
        %v1450 = vperm.slane %v1446, %v1449
        %v1451 = vrot.slane %v1358, 4
        %v1452 = vsel %vm597, %v1451, %v1334
        %v1454 = vunpack.c.l.s4 1983009808
        %v1455 = vunpack.c.0.s8 %v1454
        %v1456 = vperm.slane %v1452, %v1455
        %v1457 = vrot.slane %v1456, 4
        %v1458 = vsel %vm597, %v1457, %v1450
        %v1459 = vrot.slane %v1450, 4
        %v1460 = vsel %vm597, %v1456, %v1459
        %v1462 = vunpack.c.l.s4 1934713408
        %v1463 = vunpack.c.0.s8 %v1462
        %v1464 = vperm.slane %v1458, %v1463
        %v1466 = vunpack.c.l.s4 1934713408
        %v1467 = vunpack.c.0.s8 %v1466
        %v1468 = vperm.slane %v1460, %v1467
        %v1469 = vrot.slane %v1464, 4
        %v1470 = vsel %vm597, 0, %v1469
        %v1471 = vrot.slane %v1468, 4
        %v1472 = vsel %vm597, 0, %v1471
        %v1475 = vpack.i.b16 %v1408, %v1380
        %v1477 = vshrl.u32 %v1380, 16
        %v1478 = vshrl.u32 %v1408, 16
        %v1479 = vpack.i.b16 %v1478, %v1477
        %v1483 = vpack.i.b16 %v1414, %v1386
        %v1485 = vshrl.u32 %v1386, 16
        %v1486 = vshrl.u32 %v1414, 16
        %v1487 = vpack.i.b16 %v1486, %v1485
        %v1491 = vpack.i.b16 %v1412, %v1384
        %v1493 = vshrl.u32 %v1384, 16
        %v1494 = vshrl.u32 %v1412, 16
        %v1495 = vpack.i.b16 %v1494, %v1493
        %v1499 = vpack.i.b16 %v1416, %v1388
        %v1501 = vshrl.u32 %v1388, 16
        %v1502 = vshrl.u32 %v1416, 16
        %v1503 = vpack.i.b16 %v1502, %v1501
        %v1507 = vpack.i.b16 %v1464, %v1436
        %v1509 = vshrl.u32 %v1436, 16
        %v1510 = vshrl.u32 %v1464, 16
        %v1511 = vpack.i.b16 %v1510, %v1509
        %v1515 = vpack.i.b16 %v1470, %v1442
        %v1517 = vshrl.u32 %v1442, 16
        %v1518 = vshrl.u32 %v1470, 16
        %v1519 = vpack.i.b16 %v1518, %v1517
        %v1523 = vpack.i.b16 %v1468, %v1440
        %v1525 = vshrl.u32 %v1440, 16
        %v1526 = vshrl.u32 %v1468, 16
        %v1527 = vpack.i.b16 %v1526, %v1525
        %v1531 = vpack.i.b16 %v1472, %v1444
        %v1533 = vshrl.u32 %v1444, 16
        %v1534 = vshrl.u32 %v1472, 16
        %v1535 = vpack.i.b16 %v1534, %v1533
        %v1537 = vrot.slane %v1491, 4
        %v1538 = vsel %vm597, %v1537, %v1475
        %v1540 = vunpack.c.l.s4 1983009808
        %v1541 = vunpack.c.0.s8 %v1540
        %v1542 = vperm.slane %v1538, %v1541
        %v1543 = vrot.slane %v1499, 4
        %v1544 = vsel %vm597, %v1543, %v1483
        %v1546 = vunpack.c.l.s4 1983009808
        %v1547 = vunpack.c.0.s8 %v1546
        %v1548 = vperm.slane %v1544, %v1547
        %v1549 = vrot.slane %v1548, 4
        %v1550 = vsel %vm597, %v1549, %v1542
        %v1551 = vrot.slane %v1542, 4
        %v1552 = vsel %vm597, %v1548, %v1551
        %v1554 = vunpack.c.l.s4 1934713408
        %v1555 = vunpack.c.0.s8 %v1554
        %v1556 = vperm.slane %v1550, %v1555
        %v1558 = vunpack.c.l.s4 1934713408
        %v1559 = vunpack.c.0.s8 %v1558
        %v1560 = vperm.slane %v1552, %v1559
        %v1561 = vrot.slane %v1556, 4
        %v1562 = vsel %vm597, 0, %v1561
        %v1563 = vrot.slane %v1560, 4
        %v1564 = vsel %vm597, 0, %v1563
        %v1565 = vrot.slane %v1495, 4
        %v1566 = vsel %vm597, %v1565, %v1479
        %v1568 = vunpack.c.l.s4 1983009808
        %v1569 = vunpack.c.0.s8 %v1568
        %v1570 = vperm.slane %v1566, %v1569
        %v1571 = vrot.slane %v1503, 4
        %v1572 = vsel %vm597, %v1571, %v1487
        %v1574 = vunpack.c.l.s4 1983009808
        %v1575 = vunpack.c.0.s8 %v1574
        %v1576 = vperm.slane %v1572, %v1575
        %v1577 = vrot.slane %v1576, 4
        %v1578 = vsel %vm597, %v1577, %v1570
        %v1579 = vrot.slane %v1570, 4
        %v1580 = vsel %vm597, %v1576, %v1579
        %v1582 = vunpack.c.l.s4 1934713408
        %v1583 = vunpack.c.0.s8 %v1582
        %v1584 = vperm.slane %v1578, %v1583
        %v1586 = vunpack.c.l.s4 1934713408
        %v1587 = vunpack.c.0.s8 %v1586
        %v1588 = vperm.slane %v1580, %v1587
        %v1589 = vrot.slane %v1584, 4
        %v1590 = vsel %vm597, 0, %v1589
        %v1591 = vrot.slane %v1588, 4
        %v1592 = vsel %vm597, 0, %v1591
        %v1593 = vrot.slane %v1523, 4
        %v1594 = vsel %vm597, %v1593, %v1507
        %v1596 = vunpack.c.l.s4 1983009808
        %v1597 = vunpack.c.0.s8 %v1596
        %v1598 = vperm.slane %v1594, %v1597
        %v1599 = vrot.slane %v1531, 4
        %v1600 = vsel %vm597, %v1599, %v1515
        %v1602 = vunpack.c.l.s4 1983009808
        %v1603 = vunpack.c.0.s8 %v1602
        %v1604 = vperm.slane %v1600, %v1603
        %v1605 = vrot.slane %v1604, 4
        %v1606 = vsel %vm597, %v1605, %v1598
        %v1607 = vrot.slane %v1598, 4
        %v1608 = vsel %vm597, %v1604, %v1607
        %v1610 = vunpack.c.l.s4 1934713408
        %v1611 = vunpack.c.0.s8 %v1610
        %v1612 = vperm.slane %v1606, %v1611
        %v1614 = vunpack.c.l.s4 1934713408
        %v1615 = vunpack.c.0.s8 %v1614
        %v1616 = vperm.slane %v1608, %v1615
        %v1617 = vrot.slane %v1612, 4
        %v1618 = vsel %vm597, 0, %v1617
        %v1619 = vrot.slane %v1616, 4
        %v1620 = vsel %vm597, 0, %v1619
        %v1621 = vrot.slane %v1527, 4
        %v1622 = vsel %vm597, %v1621, %v1511
        %v1624 = vunpack.c.l.s4 1983009808
        %v1625 = vunpack.c.0.s8 %v1624
        %v1626 = vperm.slane %v1622, %v1625
        %v1627 = vrot.slane %v1535, 4
        %v1628 = vsel %vm597, %v1627, %v1519
        %v1630 = vunpack.c.l.s4 1983009808
        %v1631 = vunpack.c.0.s8 %v1630
        %v1632 = vperm.slane %v1628, %v1631
        %v1633 = vrot.slane %v1632, 4
        %v1634 = vsel %vm597, %v1633, %v1626
        %v1635 = vrot.slane %v1626, 4
        %v1636 = vsel %vm597, %v1632, %v1635
        %v1638 = vunpack.c.l.s4 1934713408
        %v1639 = vunpack.c.0.s8 %v1638
        %v1640 = vperm.slane %v1634, %v1639
        %v1642 = vunpack.c.l.s4 1934713408
        %v1643 = vunpack.c.0.s8 %v1642
        %v1644 = vperm.slane %v1636, %v1643
        %v1645 = vrot.slane %v1640, 4
        %v1646 = vsel %vm597, 0, %v1645
        %v1647 = vrot.slane %v1644, 4
        %v1648 = vsel %vm597, 0, %v1647
        %v1651 = vpack.i.b16 %v1584, %v1556
        %v1652 = vshrl.u32 %v1556, 16
        %v1653 = vshrl.u32 %v1584, 16
        %v1654 = vpack.i.b16 %v1653, %v1652
        %v1657 = vpack.i.b16 %v1590, %v1562
        %v1658 = vshrl.u32 %v1562, 16
        %v1659 = vshrl.u32 %v1590, 16
        %v1660 = vpack.i.b16 %v1659, %v1658
        %v1663 = vpack.i.b16 %v1588, %v1560
        %v1664 = vshrl.u32 %v1560, 16
        %v1665 = vshrl.u32 %v1588, 16
        %v1666 = vpack.i.b16 %v1665, %v1664
        %v1669 = vpack.i.b16 %v1592, %v1564
        %v1670 = vshrl.u32 %v1564, 16
        %v1671 = vshrl.u32 %v1592, 16
        %v1672 = vpack.i.b16 %v1671, %v1670
        %v1675 = vpack.i.b16 %v1640, %v1612
        %v1676 = vshrl.u32 %v1612, 16
        %v1677 = vshrl.u32 %v1640, 16
        %v1678 = vpack.i.b16 %v1677, %v1676
        %v1681 = vpack.i.b16 %v1646, %v1618
        %v1682 = vshrl.u32 %v1618, 16
        %v1683 = vshrl.u32 %v1646, 16
        %v1684 = vpack.i.b16 %v1683, %v1682
        %v1687 = vpack.i.b16 %v1644, %v1616
        %v1688 = vshrl.u32 %v1616, 16
        %v1689 = vshrl.u32 %v1644, 16
        %v1690 = vpack.i.b16 %v1689, %v1688
        %v1693 = vpack.i.b16 %v1648, %v1620
        %v1694 = vshrl.u32 %v1620, 16
        %v1695 = vshrl.u32 %v1648, 16
        %v1696 = vpack.i.b16 %v1695, %v1694
        %v1697 = vunpack.c.l.b16 %v887
        %v1698 = vunpack.c.l.b16 %v911
        %v1699 = vpack.c.b16 %v1698, %v1697
        %v1700 = vunpack.c.l.b16 %v1269
        %v1701 = vunpack.c.l.b16 %v1293
        %v1702 = vpack.c.b16 %v1701, %v1700
        %vm1703 = vcmask 130048
        %v1705 = vsel %vm1703, %v1699, 0
        %v1708 = vsel %vm1703, %v1702, 0
        %1710 = vmatpush.bf16.xpose.msra.mxu0 0
        %1711 = vmatpush.bf16.xpose.msra.mxu0 0
        %1712 = vmatpush.bf16.xpose.msra.mxu0 0
        %1713 = vmatpush.bf16.xpose.msra.mxu0 0
        %1714 = vmatpush.bf16.xpose.msra.mxu0 0
        %1715 = vmatpush.bf16.xpose.msra.mxu0 0
        %1716 = vmatpush.bf16.xpose.msra.mxu0 0
        %1717 = vmatpush.bf16.xpose.msra.mxu0 %v1708
        %1718 = vmatmul.bf16.gmra.mxu0 %v1705
        %v1719 = vpop.f32.mrf.mxu0
        %v1720 = vadd.f32 0.0, %v1719
        %v1721 = vpop.f32.mrf.mxu0
        %v1722 = vadd.f32 0.0, %v1721
        %1723 = vdwg.mxu0
        %v1724 = vunpack.c.l.b16 %v890
        %v1725 = vunpack.c.l.b16 %v914
        %v1726 = vpack.c.b16 %v1725, %v1724
        %v1727 = vunpack.c.l.b16 %v1272
        %v1728 = vunpack.c.l.b16 %v1296
        %v1729 = vpack.c.b16 %v1728, %v1727
        %v1731 = vsel %vm1703, %v1726, 0
        %v1734 = vsel %vm1703, %v1729, 0
        %1736 = vmatpush.bf16.xpose.msra.mxu0 0
        %1737 = vmatpush.bf16.xpose.msra.mxu0 0
        %1738 = vmatpush.bf16.xpose.msra.mxu0 0
        %1739 = vmatpush.bf16.xpose.msra.mxu0 0
        %1740 = vmatpush.bf16.xpose.msra.mxu0 0
        %1741 = vmatpush.bf16.xpose.msra.mxu0 0
        %1742 = vmatpush.bf16.xpose.msra.mxu0 0
        %1743 = vmatpush.bf16.xpose.msra.mxu0 %v1734
        %1744 = vmatmul.bf16.gmra.mxu0 %v1731
        %v1745 = vpop.f32.mrf.mxu0
        %v1746 = vadd.f32 0.0, %v1745
        %v1747 = vpop.f32.mrf.mxu0
        %v1748 = vadd.f32 0.0, %v1747
        %1749 = vdwg.mxu0
        %v1750 = vunpack.c.l.b16 %v893
        %v1751 = vunpack.c.l.b16 %v917
        %v1752 = vpack.c.b16 %v1751, %v1750
        %v1753 = vunpack.c.l.b16 %v1275
        %v1754 = vunpack.c.l.b16 %v1299
        %v1755 = vpack.c.b16 %v1754, %v1753
        %v1757 = vsel %vm1703, %v1752, 0
        %v1760 = vsel %vm1703, %v1755, 0
        %1762 = vmatpush.bf16.xpose.msra.mxu0 0
        %1763 = vmatpush.bf16.xpose.msra.mxu0 0
        %1764 = vmatpush.bf16.xpose.msra.mxu0 0
        %1765 = vmatpush.bf16.xpose.msra.mxu0 0
        %1766 = vmatpush.bf16.xpose.msra.mxu0 0
        %1767 = vmatpush.bf16.xpose.msra.mxu0 0
        %1768 = vmatpush.bf16.xpose.msra.mxu0 0
        %1769 = vmatpush.bf16.xpose.msra.mxu0 %v1760
        %1770 = vmatmul.bf16.gmra.mxu0 %v1757
        %v1771 = vpop.f32.mrf.mxu0
        %v1772 = vadd.f32 0.0, %v1771
        %v1773 = vpop.f32.mrf.mxu0
        %v1774 = vadd.f32 0.0, %v1773
        %1775 = vdwg.mxu0
        %v1776 = vunpack.c.l.b16 %v896
        %v1777 = vunpack.c.l.b16 %v920
        %v1778 = vpack.c.b16 %v1777, %v1776
        %v1779 = vunpack.c.l.b16 %v1278
        %v1780 = vunpack.c.l.b16 %v1302
        %v1781 = vpack.c.b16 %v1780, %v1779
        %v1783 = vsel %vm1703, %v1778, 0
        %v1786 = vsel %vm1703, %v1781, 0
        %1788 = vmatpush.bf16.xpose.msra.mxu0 0
        %1789 = vmatpush.bf16.xpose.msra.mxu0 0
        %1790 = vmatpush.bf16.xpose.msra.mxu0 0
        %1791 = vmatpush.bf16.xpose.msra.mxu0 0
        %1792 = vmatpush.bf16.xpose.msra.mxu0 0
        %1793 = vmatpush.bf16.xpose.msra.mxu0 0
        %1794 = vmatpush.bf16.xpose.msra.mxu0 0
        %1795 = vmatpush.bf16.xpose.msra.mxu0 %v1786
        %1796 = vmatmul.bf16.gmra.mxu0 %v1783
        %v1797 = vpop.f32.mrf.mxu0
        %v1798 = vadd.f32 0.0, %v1797
        %v1799 = vpop.f32.mrf.mxu0
        %v1800 = vadd.f32 0.0, %v1799
        %1801 = vdwg.mxu0
        %v1802 = vunpack.c.l.b16 %v899
        %v1803 = vunpack.c.l.b16 %v923
        %v1804 = vpack.c.b16 %v1803, %v1802
        %v1805 = vunpack.c.l.b16 %v1281
        %v1806 = vunpack.c.l.b16 %v1305
        %v1807 = vpack.c.b16 %v1806, %v1805
        %v1809 = vsel %vm1703, %v1804, 0
        %v1812 = vsel %vm1703, %v1807, 0
        %1814 = vmatpush.bf16.xpose.msra.mxu0 0
        %1815 = vmatpush.bf16.xpose.msra.mxu0 0
        %1816 = vmatpush.bf16.xpose.msra.mxu0 0
        %1817 = vmatpush.bf16.xpose.msra.mxu0 0
        %1818 = vmatpush.bf16.xpose.msra.mxu0 0
        %1819 = vmatpush.bf16.xpose.msra.mxu0 0
        %1820 = vmatpush.bf16.xpose.msra.mxu0 0
        %1821 = vmatpush.bf16.xpose.msra.mxu0 %v1812
        %1822 = vmatmul.bf16.gmra.mxu0 %v1809
        %v1823 = vpop.f32.mrf.mxu0
        %v1824 = vadd.f32 0.0, %v1823
        %v1825 = vpop.f32.mrf.mxu0
        %v1826 = vadd.f32 0.0, %v1825
        %1827 = vdwg.mxu0
        %v1828 = vunpack.c.l.b16 %v902
        %v1829 = vunpack.c.l.b16 %v926
        %v1830 = vpack.c.b16 %v1829, %v1828
        %v1831 = vunpack.c.l.b16 %v1284
        %v1832 = vunpack.c.l.b16 %v1308
        %v1833 = vpack.c.b16 %v1832, %v1831
        %v1835 = vsel %vm1703, %v1830, 0
        %v1838 = vsel %vm1703, %v1833, 0
        %1840 = vmatpush.bf16.xpose.msra.mxu0 0
        %1841 = vmatpush.bf16.xpose.msra.mxu0 0
        %1842 = vmatpush.bf16.xpose.msra.mxu0 0
        %1843 = vmatpush.bf16.xpose.msra.mxu0 0
        %1844 = vmatpush.bf16.xpose.msra.mxu0 0
        %1845 = vmatpush.bf16.xpose.msra.mxu0 0
        %1846 = vmatpush.bf16.xpose.msra.mxu0 0
        %1847 = vmatpush.bf16.xpose.msra.mxu0 %v1838
        %1848 = vmatmul.bf16.gmra.mxu0 %v1835
        %v1849 = vpop.f32.mrf.mxu0
        %v1850 = vadd.f32 0.0, %v1849
        %v1851 = vpop.f32.mrf.mxu0
        %v1852 = vadd.f32 0.0, %v1851
        %1853 = vdwg.mxu0
        %v1854 = vunpack.c.l.b16 %v905
        %v1855 = vunpack.c.l.b16 %v929
        %v1856 = vpack.c.b16 %v1855, %v1854
        %v1857 = vunpack.c.l.b16 %v1287
        %v1858 = vunpack.c.l.b16 %v1311
        %v1859 = vpack.c.b16 %v1858, %v1857
        %v1861 = vsel %vm1703, %v1856, 0
        %v1864 = vsel %vm1703, %v1859, 0
        %1866 = vmatpush.bf16.xpose.msra.mxu0 0
        %1867 = vmatpush.bf16.xpose.msra.mxu0 0
        %1868 = vmatpush.bf16.xpose.msra.mxu0 0
        %1869 = vmatpush.bf16.xpose.msra.mxu0 0
        %1870 = vmatpush.bf16.xpose.msra.mxu0 0
        %1871 = vmatpush.bf16.xpose.msra.mxu0 0
        %1872 = vmatpush.bf16.xpose.msra.mxu0 0
        %1873 = vmatpush.bf16.xpose.msra.mxu0 %v1864
        %1874 = vmatmul.bf16.gmra.mxu0 %v1861
        %v1875 = vpop.f32.mrf.mxu0
        %v1876 = vadd.f32 0.0, %v1875
        %v1877 = vpop.f32.mrf.mxu0
        %v1878 = vadd.f32 0.0, %v1877
        %1879 = vdwg.mxu0
        %v1880 = vunpack.c.l.b16 %v908
        %v1881 = vunpack.c.l.b16 %v932
        %v1882 = vpack.c.b16 %v1881, %v1880
        %v1883 = vunpack.c.l.b16 %v1290
        %v1884 = vunpack.c.l.b16 %v1314
        %v1885 = vpack.c.b16 %v1884, %v1883
        %v1887 = vsel %vm1703, %v1882, 0
        %v1890 = vsel %vm1703, %v1885, 0
        %1892 = vmatpush.bf16.xpose.msra.mxu0 0
        %1893 = vmatpush.bf16.xpose.msra.mxu0 0
        %1894 = vmatpush.bf16.xpose.msra.mxu0 0
        %1895 = vmatpush.bf16.xpose.msra.mxu0 0
        %1896 = vmatpush.bf16.xpose.msra.mxu0 0
        %1897 = vmatpush.bf16.xpose.msra.mxu0 0
        %1898 = vmatpush.bf16.xpose.msra.mxu0 0
        %1899 = vmatpush.bf16.xpose.msra.mxu0 %v1890
        %1900 = vmatmul.bf16.gmra.mxu0 %v1887
        %v1901 = vpop.f32.mrf.mxu0
        %v1902 = vadd.f32 0.0, %v1901
        %v1903 = vpop.f32.mrf.mxu0
        %v1904 = vadd.f32 0.0, %v1903
        %1905 = vdwg.mxu0
        %v1906 = vsel %vm1703, %v1720, -inf
        %1907 = vmax.xlane.f32.xlu0 %v1906
        %v1908 = vpop.xlane.xlu0 %1907
        %v1909 = vsel %vm1703, %v1722, -inf
        %1910 = vmax.xlane.f32.xlu0 %v1909
        %v1911 = vpop.xlane.xlu0 %1910
        %v1912 = vsel %vm1703, %v1746, -inf
        %1913 = vmax.xlane.f32.xlu0 %v1912
        %v1914 = vpop.xlane.xlu0 %1913
        %v1915 = vsel %vm1703, %v1748, -inf
        %1916 = vmax.xlane.f32.xlu0 %v1915
        %v1917 = vpop.xlane.xlu0 %1916
        %v1918 = vsel %vm1703, %v1772, -inf
        %1919 = vmax.xlane.f32.xlu0 %v1918
        %v1920 = vpop.xlane.xlu0 %1919
        %v1921 = vsel %vm1703, %v1774, -inf
        %1922 = vmax.xlane.f32.xlu0 %v1921
        %v1923 = vpop.xlane.xlu0 %1922
        %v1924 = vsel %vm1703, %v1798, -inf
        %1925 = vmax.xlane.f32.xlu0 %v1924
        %v1926 = vpop.xlane.xlu0 %1925
        %v1927 = vsel %vm1703, %v1800, -inf
        %1928 = vmax.xlane.f32.xlu0 %v1927
        %v1929 = vpop.xlane.xlu0 %1928
        %v1930 = vsel %vm1703, %v1824, -inf
        %1931 = vmax.xlane.f32.xlu0 %v1930
        %v1932 = vpop.xlane.xlu0 %1931
        %v1933 = vsel %vm1703, %v1826, -inf
        %1934 = vmax.xlane.f32.xlu0 %v1933
        %v1935 = vpop.xlane.xlu0 %1934
        %v1936 = vsel %vm1703, %v1850, -inf
        %1937 = vmax.xlane.f32.xlu0 %v1936
        %v1938 = vpop.xlane.xlu0 %1937
        %v1939 = vsel %vm1703, %v1852, -inf
        %1940 = vmax.xlane.f32.xlu0 %v1939
        %v1941 = vpop.xlane.xlu0 %1940
        %v1942 = vsel %vm1703, %v1876, -inf
        %1943 = vmax.xlane.f32.xlu0 %v1942
        %v1944 = vpop.xlane.xlu0 %1943
        %v1945 = vsel %vm1703, %v1878, -inf
        %1946 = vmax.xlane.f32.xlu0 %v1945
        %v1947 = vpop.xlane.xlu0 %1946
        %v1948 = vsel %vm1703, %v1902, -inf
        %1949 = vmax.xlane.f32.xlu0 %v1948
        %v1950 = vpop.xlane.xlu0 %1949
        %v1951 = vsel %vm1703, %v1904, -inf
        %1952 = vmax.xlane.f32.xlu0 %v1951
        %v1953 = vpop.xlane.xlu0 %1952
        %v1954 = vsub.f32 %v1720, %v1908
        %v1955 = vsub.f32 %v1722, %v1911
        %v1956 = vsub.f32 %v1746, %v1914
        %v1957 = vsub.f32 %v1748, %v1917
        %v1958 = vsub.f32 %v1772, %v1920
        %v1959 = vsub.f32 %v1774, %v1923
        %v1960 = vsub.f32 %v1798, %v1926
        %v1961 = vsub.f32 %v1800, %v1929
        %v1962 = vsub.f32 %v1824, %v1932
        %v1963 = vsub.f32 %v1826, %v1935
        %v1964 = vsub.f32 %v1850, %v1938
        %v1965 = vsub.f32 %v1852, %v1941
        %v1966 = vsub.f32 %v1876, %v1944
        %v1967 = vsub.f32 %v1878, %v1947
        %v1968 = vsub.f32 %v1902, %v1950
        %v1969 = vsub.f32 %v1904, %v1953
        %v1970 = vmul.f32 %v1954, 1.442695
        %v1971 = vpow.pop %v1970
        %v1972 = vmul.f32 %v1955, 1.442695
        %v1973 = vpow.pop %v1972
        %v1974 = vmul.f32 %v1956, 1.442695
        %v1975 = vpow.pop %v1974
        %v1976 = vmul.f32 %v1957, 1.442695
        %v1977 = vpow.pop %v1976
        %v1978 = vmul.f32 %v1958, 1.442695
        %v1979 = vpow.pop %v1978
        %v1980 = vmul.f32 %v1959, 1.442695
        %v1981 = vpow.pop %v1980
        %v1982 = vmul.f32 %v1960, 1.442695
        %v1983 = vpow.pop %v1982
        %v1984 = vmul.f32 %v1961, 1.442695
        %v1985 = vpow.pop %v1984
        %v1986 = vmul.f32 %v1962, 1.442695
        %v1987 = vpow.pop %v1986
        %v1988 = vmul.f32 %v1963, 1.442695
        %v1989 = vpow.pop %v1988
        %v1990 = vmul.f32 %v1964, 1.442695
        %v1991 = vpow.pop %v1990
        %v1992 = vmul.f32 %v1965, 1.442695
        %v1993 = vpow.pop %v1992
        %v1994 = vmul.f32 %v1966, 1.442695
        %v1995 = vpow.pop %v1994
        %v1996 = vmul.f32 %v1967, 1.442695
        %v1997 = vpow.pop %v1996
        %v1998 = vmul.f32 %v1968, 1.442695
        %v1999 = vpow.pop %v1998
        %v2000 = vmul.f32 %v1969, 1.442695
        %v2001 = vpow.pop %v2000
        %v2002 = vsel %vm1703, %v1971, 0.0
        %2003 = vadd.xlane.f32.xlu0 %v2002
        %v2004 = vpop.xlane.xlu0 %2003
        %v2005 = vsel %vm1703, %v1973, 0.0
        %2006 = vadd.xlane.f32.xlu0 %v2005
        %v2007 = vpop.xlane.xlu0 %2006
        %v2008 = vsel %vm1703, %v1975, 0.0
        %2009 = vadd.xlane.f32.xlu0 %v2008
        %v2010 = vpop.xlane.xlu0 %2009
        %v2011 = vsel %vm1703, %v1977, 0.0
        %2012 = vadd.xlane.f32.xlu0 %v2011
        %v2013 = vpop.xlane.xlu0 %2012
        %v2014 = vsel %vm1703, %v1979, 0.0
        %2015 = vadd.xlane.f32.xlu0 %v2014
        %v2016 = vpop.xlane.xlu0 %2015
        %v2017 = vsel %vm1703, %v1981, 0.0
        %2018 = vadd.xlane.f32.xlu0 %v2017
        %v2019 = vpop.xlane.xlu0 %2018
        %v2020 = vsel %vm1703, %v1983, 0.0
        %2021 = vadd.xlane.f32.xlu0 %v2020
        %v2022 = vpop.xlane.xlu0 %2021
        %v2023 = vsel %vm1703, %v1985, 0.0
        %2024 = vadd.xlane.f32.xlu0 %v2023
        %v2025 = vpop.xlane.xlu0 %2024
        %v2026 = vsel %vm1703, %v1987, 0.0
        %2027 = vadd.xlane.f32.xlu0 %v2026
        %v2028 = vpop.xlane.xlu0 %2027
        %v2029 = vsel %vm1703, %v1989, 0.0
        %2030 = vadd.xlane.f32.xlu0 %v2029
        %v2031 = vpop.xlane.xlu0 %2030
        %v2032 = vsel %vm1703, %v1991, 0.0
        %2033 = vadd.xlane.f32.xlu0 %v2032
        %v2034 = vpop.xlane.xlu0 %2033
        %v2035 = vsel %vm1703, %v1993, 0.0
        %2036 = vadd.xlane.f32.xlu0 %v2035
        %v2037 = vpop.xlane.xlu0 %2036
        %v2038 = vsel %vm1703, %v1995, 0.0
        %2039 = vadd.xlane.f32.xlu0 %v2038
        %v2040 = vpop.xlane.xlu0 %2039
        %v2041 = vsel %vm1703, %v1997, 0.0
        %2042 = vadd.xlane.f32.xlu0 %v2041
        %v2043 = vpop.xlane.xlu0 %2042
        %v2044 = vsel %vm1703, %v1999, 0.0
        %2045 = vadd.xlane.f32.xlu0 %v2044
        %v2046 = vpop.xlane.xlu0 %2045
        %v2047 = vsel %vm1703, %v2001, 0.0
        %2048 = vadd.xlane.f32.xlu0 %v2047
        %v2049 = vpop.xlane.xlu0 %2048
        %v2050 = vpack.c.bf16 %v1971, %v1971
        %v2051 = vpack.c.bf16 %v1973, %v1973
        %v2052 = vpack.c.bf16 %v1975, %v1975
        %v2053 = vpack.c.bf16 %v1977, %v1977
        %v2054 = vpack.c.bf16 %v1979, %v1979
        %v2055 = vpack.c.bf16 %v1981, %v1981
        %v2056 = vpack.c.bf16 %v1983, %v1983
        %v2057 = vpack.c.bf16 %v1985, %v1985
        %v2058 = vpack.c.bf16 %v1987, %v1987
        %v2059 = vpack.c.bf16 %v1989, %v1989
        %v2060 = vpack.c.bf16 %v1991, %v1991
        %v2061 = vpack.c.bf16 %v1993, %v1993
        %v2062 = vpack.c.bf16 %v1995, %v1995
        %v2063 = vpack.c.bf16 %v1997, %v1997
        %v2064 = vpack.c.bf16 %v1999, %v1999
        %v2065 = vpack.c.bf16 %v2001, %v2001
        %v2068 = vunpack.c.l.b16 %v2050
        %v2069 = vunpack.c.l.b16 %v2051
        %v2070 = vpack.c.b16 %v2069, %v2068
        %v2071 = vunpack.c.l.b16 %v1651
        %v2072 = vunpack.c.l.b16 %v1675
        %v2073 = vpack.c.b16 %v2072, %v2071
        %v2076 = vsel %vm1703, %v2070, 0
        %2078 = vmatpush.bf16.msra.mxu0 0
        %2079 = vmatpush.bf16.msra.mxu0 0
        %2080 = vmatpush.bf16.msra.mxu0 0
        %2081 = vmatpush.bf16.msra.mxu0 0
        %2082 = vmatpush.bf16.msra.mxu0 0
        %2083 = vmatpush.bf16.msra.mxu0 0
        %2084 = vmatpush.bf16.msra.mxu0 0
        %2085 = vmatpush.bf16.msra.mxu0 %v2073
        %2086 = vmatmul.bf16.gmra.mxu0 %v2076
        %v2087 = vpop.f32.mrf.mxu0
        %v2088 = vadd.f32 0.0, %v2087
        %v2089 = vpop.f32.mrf.mxu0
        %v2090 = vadd.f32 0.0, %v2089
        %2091 = vdwg.mxu0
        %v2094 = vunpack.c.l.b16 %v2052
        %v2095 = vunpack.c.l.b16 %v2053
        %v2096 = vpack.c.b16 %v2095, %v2094
        %v2097 = vunpack.c.l.b16 %v1654
        %v2098 = vunpack.c.l.b16 %v1678
        %v2099 = vpack.c.b16 %v2098, %v2097
        %v2102 = vsel %vm1703, %v2096, 0
        %2104 = vmatpush.bf16.msra.mxu0 0
        %2105 = vmatpush.bf16.msra.mxu0 0
        %2106 = vmatpush.bf16.msra.mxu0 0
        %2107 = vmatpush.bf16.msra.mxu0 0
        %2108 = vmatpush.bf16.msra.mxu0 0
        %2109 = vmatpush.bf16.msra.mxu0 0
        %2110 = vmatpush.bf16.msra.mxu0 0
        %2111 = vmatpush.bf16.msra.mxu0 %v2099
        %2112 = vmatmul.bf16.gmra.mxu0 %v2102
        %v2113 = vpop.f32.mrf.mxu0
        %v2114 = vadd.f32 0.0, %v2113
        %v2115 = vpop.f32.mrf.mxu0
        %v2116 = vadd.f32 0.0, %v2115
        %2117 = vdwg.mxu0
        %v2120 = vunpack.c.l.b16 %v2054
        %v2121 = vunpack.c.l.b16 %v2055
        %v2122 = vpack.c.b16 %v2121, %v2120
        %v2123 = vunpack.c.l.b16 %v1657
        %v2124 = vunpack.c.l.b16 %v1681
        %v2125 = vpack.c.b16 %v2124, %v2123
        %v2128 = vsel %vm1703, %v2122, 0
        %2130 = vmatpush.bf16.msra.mxu0 0
        %2131 = vmatpush.bf16.msra.mxu0 0
        %2132 = vmatpush.bf16.msra.mxu0 0
        %2133 = vmatpush.bf16.msra.mxu0 0
        %2134 = vmatpush.bf16.msra.mxu0 0
        %2135 = vmatpush.bf16.msra.mxu0 0
        %2136 = vmatpush.bf16.msra.mxu0 0
        %2137 = vmatpush.bf16.msra.mxu0 %v2125
        %2138 = vmatmul.bf16.gmra.mxu0 %v2128
        %v2139 = vpop.f32.mrf.mxu0
        %v2140 = vadd.f32 0.0, %v2139
        %v2141 = vpop.f32.mrf.mxu0
        %v2142 = vadd.f32 0.0, %v2141
        %2143 = vdwg.mxu0
        %v2146 = vunpack.c.l.b16 %v2056
        %v2147 = vunpack.c.l.b16 %v2057
        %v2148 = vpack.c.b16 %v2147, %v2146
        %v2149 = vunpack.c.l.b16 %v1660
        %v2150 = vunpack.c.l.b16 %v1684
        %v2151 = vpack.c.b16 %v2150, %v2149
        %v2154 = vsel %vm1703, %v2148, 0
        %2156 = vmatpush.bf16.msra.mxu0 0
        %2157 = vmatpush.bf16.msra.mxu0 0
        %2158 = vmatpush.bf16.msra.mxu0 0
        %2159 = vmatpush.bf16.msra.mxu0 0
        %2160 = vmatpush.bf16.msra.mxu0 0
        %2161 = vmatpush.bf16.msra.mxu0 0
        %2162 = vmatpush.bf16.msra.mxu0 0
        %2163 = vmatpush.bf16.msra.mxu0 %v2151
        %2164 = vmatmul.bf16.gmra.mxu0 %v2154
        %v2165 = vpop.f32.mrf.mxu0
        %v2166 = vadd.f32 0.0, %v2165
        %v2167 = vpop.f32.mrf.mxu0
        %v2168 = vadd.f32 0.0, %v2167
        %2169 = vdwg.mxu0
        %v2172 = vunpack.c.l.b16 %v2058
        %v2173 = vunpack.c.l.b16 %v2059
        %v2174 = vpack.c.b16 %v2173, %v2172
        %v2175 = vunpack.c.l.b16 %v1663
        %v2176 = vunpack.c.l.b16 %v1687
        %v2177 = vpack.c.b16 %v2176, %v2175
        %v2180 = vsel %vm1703, %v2174, 0
        %2182 = vmatpush.bf16.msra.mxu0 0
        %2183 = vmatpush.bf16.msra.mxu0 0
        %2184 = vmatpush.bf16.msra.mxu0 0
        %2185 = vmatpush.bf16.msra.mxu0 0
        %2186 = vmatpush.bf16.msra.mxu0 0
        %2187 = vmatpush.bf16.msra.mxu0 0
        %2188 = vmatpush.bf16.msra.mxu0 0
        %2189 = vmatpush.bf16.msra.mxu0 %v2177
        %2190 = vmatmul.bf16.gmra.mxu0 %v2180
        %v2191 = vpop.f32.mrf.mxu0
        %v2192 = vadd.f32 0.0, %v2191
        %v2193 = vpop.f32.mrf.mxu0
        %v2194 = vadd.f32 0.0, %v2193
        %2195 = vdwg.mxu0
        %v2198 = vunpack.c.l.b16 %v2060
        %v2199 = vunpack.c.l.b16 %v2061
        %v2200 = vpack.c.b16 %v2199, %v2198
        %v2201 = vunpack.c.l.b16 %v1666
        %v2202 = vunpack.c.l.b16 %v1690
        %v2203 = vpack.c.b16 %v2202, %v2201
        %v2206 = vsel %vm1703, %v2200, 0
        %2208 = vmatpush.bf16.msra.mxu0 0
        %2209 = vmatpush.bf16.msra.mxu0 0
        %2210 = vmatpush.bf16.msra.mxu0 0
        %2211 = vmatpush.bf16.msra.mxu0 0
        %2212 = vmatpush.bf16.msra.mxu0 0
        %2213 = vmatpush.bf16.msra.mxu0 0
        %2214 = vmatpush.bf16.msra.mxu0 0
        %2215 = vmatpush.bf16.msra.mxu0 %v2203
        %2216 = vmatmul.bf16.gmra.mxu0 %v2206
        %v2217 = vpop.f32.mrf.mxu0
        %v2218 = vadd.f32 0.0, %v2217
        %v2219 = vpop.f32.mrf.mxu0
        %v2220 = vadd.f32 0.0, %v2219
        %2221 = vdwg.mxu0
        %v2224 = vunpack.c.l.b16 %v2062
        %v2225 = vunpack.c.l.b16 %v2063
        %v2226 = vpack.c.b16 %v2225, %v2224
        %v2227 = vunpack.c.l.b16 %v1669
        %v2228 = vunpack.c.l.b16 %v1693
        %v2229 = vpack.c.b16 %v2228, %v2227
        %v2232 = vsel %vm1703, %v2226, 0
        %2234 = vmatpush.bf16.msra.mxu0 0
        %2235 = vmatpush.bf16.msra.mxu0 0
        %2236 = vmatpush.bf16.msra.mxu0 0
        %2237 = vmatpush.bf16.msra.mxu0 0
        %2238 = vmatpush.bf16.msra.mxu0 0
        %2239 = vmatpush.bf16.msra.mxu0 0
        %2240 = vmatpush.bf16.msra.mxu0 0
        %2241 = vmatpush.bf16.msra.mxu0 %v2229
        %2242 = vmatmul.bf16.gmra.mxu0 %v2232
        %v2243 = vpop.f32.mrf.mxu0
        %v2244 = vadd.f32 0.0, %v2243
        %v2245 = vpop.f32.mrf.mxu0
        %v2246 = vadd.f32 0.0, %v2245
        %2247 = vdwg.mxu0
        %v2250 = vunpack.c.l.b16 %v2064
        %v2251 = vunpack.c.l.b16 %v2065
        %v2252 = vpack.c.b16 %v2251, %v2250
        %v2253 = vunpack.c.l.b16 %v1672
        %v2254 = vunpack.c.l.b16 %v1696
        %v2255 = vpack.c.b16 %v2254, %v2253
        %v2258 = vsel %vm1703, %v2252, 0
        %2260 = vmatpush.bf16.msra.mxu0 0
        %2261 = vmatpush.bf16.msra.mxu0 0
        %2262 = vmatpush.bf16.msra.mxu0 0
        %2263 = vmatpush.bf16.msra.mxu0 0
        %2264 = vmatpush.bf16.msra.mxu0 0
        %2265 = vmatpush.bf16.msra.mxu0 0
        %2266 = vmatpush.bf16.msra.mxu0 0
        %2267 = vmatpush.bf16.msra.mxu0 %v2255
        %2268 = vmatmul.bf16.gmra.mxu0 %v2258
        %v2269 = vpop.f32.mrf.mxu0
        %v2270 = vadd.f32 0.0, %v2269
        %v2271 = vpop.f32.mrf.mxu0
        %v2272 = vadd.f32 0.0, %v2271
        %2273 = vdwg.mxu0
        %v2274 = vrcp.pop %v2004
        %v2275 = vrcp.pop %v2007
        %v2276 = vrcp.pop %v2010
        %v2277 = vrcp.pop %v2013
        %v2278 = vrcp.pop %v2016
        %v2279 = vrcp.pop %v2019
        %v2280 = vrcp.pop %v2022
        %v2281 = vrcp.pop %v2025
        %v2282 = vrcp.pop %v2028
        %v2283 = vrcp.pop %v2031
        %v2284 = vrcp.pop %v2034
        %v2285 = vrcp.pop %v2037
        %v2286 = vrcp.pop %v2040
        %v2287 = vrcp.pop %v2043
        %v2288 = vrcp.pop %v2046
        %v2289 = vrcp.pop %v2049
        %v2290 = vmul.f32 %v2088, %v2274
        %v2291 = vmul.f32 %v2090, %v2275
        %v2292 = vmul.f32 %v2114, %v2276
        %v2293 = vmul.f32 %v2116, %v2277
        %v2294 = vmul.f32 %v2140, %v2278
        %v2295 = vmul.f32 %v2142, %v2279
        %v2296 = vmul.f32 %v2166, %v2280
        %v2297 = vmul.f32 %v2168, %v2281
        %v2298 = vmul.f32 %v2192, %v2282
        %v2299 = vmul.f32 %v2194, %v2283
        %v2300 = vmul.f32 %v2218, %v2284
        %v2301 = vmul.f32 %v2220, %v2285
        %v2302 = vmul.f32 %v2244, %v2286
        %v2303 = vmul.f32 %v2246, %v2287
        %v2304 = vmul.f32 %v2270, %v2288
        %v2305 = vmul.f32 %v2272, %v2289
        %v2306 = vpack.c.bf16 %v2290, %v2290
        %v2307 = vpack.c.bf16 %v2291, %v2291
        %v2308 = vpack.c.bf16 %v2292, %v2292
        %v2309 = vpack.c.bf16 %v2293, %v2293
        %v2310 = vpack.c.bf16 %v2294, %v2294
        %v2311 = vpack.c.bf16 %v2295, %v2295
        %v2312 = vpack.c.bf16 %v2296, %v2296
        %v2313 = vpack.c.bf16 %v2297, %v2297
        %v2314 = vpack.c.bf16 %v2298, %v2298
        %v2315 = vpack.c.bf16 %v2299, %v2299
        %v2316 = vpack.c.bf16 %v2300, %v2300
        %v2317 = vpack.c.bf16 %v2301, %v2301
        %v2318 = vpack.c.bf16 %v2302, %v2302
        %v2319 = vpack.c.bf16 %v2303, %v2303
        %v2320 = vpack.c.bf16 %v2304, %v2304
        %v2321 = vpack.c.bf16 %v2305, %v2305
        %v2322 = vrot.slane %v2314, 4
        %v2323 = vsel %vm597, %v2322, %v2306
        %v2325 = vunpack.c.l.s4 1983009808
        %v2326 = vunpack.c.0.s8 %v2325
        %v2327 = vperm.slane %v2323, %v2326
        %v2328 = vrot.slane %v2318, 4
        %v2329 = vsel %vm597, %v2328, %v2310
        %v2331 = vunpack.c.l.s4 1983009808
        %v2332 = vunpack.c.0.s8 %v2331
        %v2333 = vperm.slane %v2329, %v2332
        %v2334 = vrot.slane %v2333, 4
        %v2335 = vsel %vm597, %v2334, %v2327
        %v2336 = vrot.slane %v2327, 4
        %v2337 = vsel %vm597, %v2333, %v2336
        %v2339 = vunpack.c.l.s4 1934713408
        %v2340 = vunpack.c.0.s8 %v2339
        %v2341 = vperm.slane %v2335, %v2340
        %v2343 = vunpack.c.l.s4 1934713408
        %v2344 = vunpack.c.0.s8 %v2343
        %v2345 = vperm.slane %v2337, %v2344
        %v2346 = vrot.slane %v2341, 4
        %v2347 = vsel %vm597, 0, %v2346
        %v2348 = vrot.slane %v2345, 4
        %v2349 = vsel %vm597, 0, %v2348
        %v2350 = vrot.slane %v2316, 4
        %v2351 = vsel %vm597, %v2350, %v2308
        %v2353 = vunpack.c.l.s4 1983009808
        %v2354 = vunpack.c.0.s8 %v2353
        %v2355 = vperm.slane %v2351, %v2354
        %v2356 = vrot.slane %v2320, 4
        %v2357 = vsel %vm597, %v2356, %v2312
        %v2359 = vunpack.c.l.s4 1983009808
        %v2360 = vunpack.c.0.s8 %v2359
        %v2361 = vperm.slane %v2357, %v2360
        %v2362 = vrot.slane %v2361, 4
        %v2363 = vsel %vm597, %v2362, %v2355
        %v2364 = vrot.slane %v2355, 4
        %v2365 = vsel %vm597, %v2361, %v2364
        %v2367 = vunpack.c.l.s4 1934713408
        %v2368 = vunpack.c.0.s8 %v2367
        %v2369 = vperm.slane %v2363, %v2368
        %v2371 = vunpack.c.l.s4 1934713408
        %v2372 = vunpack.c.0.s8 %v2371
        %v2373 = vperm.slane %v2365, %v2372
        %v2374 = vrot.slane %v2369, 4
        %v2375 = vsel %vm597, 0, %v2374
        %v2376 = vrot.slane %v2373, 4
        %v2377 = vsel %vm597, 0, %v2376
        %v2378 = vrot.slane %v2315, 4
        %v2379 = vsel %vm597, %v2378, %v2307
        %v2381 = vunpack.c.l.s4 1983009808
        %v2382 = vunpack.c.0.s8 %v2381
        %v2383 = vperm.slane %v2379, %v2382
        %v2384 = vrot.slane %v2319, 4
        %v2385 = vsel %vm597, %v2384, %v2311
        %v2387 = vunpack.c.l.s4 1983009808
        %v2388 = vunpack.c.0.s8 %v2387
        %v2389 = vperm.slane %v2385, %v2388
        %v2390 = vrot.slane %v2389, 4
        %v2391 = vsel %vm597, %v2390, %v2383
        %v2392 = vrot.slane %v2383, 4
        %v2393 = vsel %vm597, %v2389, %v2392
        %v2395 = vunpack.c.l.s4 1934713408
        %v2396 = vunpack.c.0.s8 %v2395
        %v2397 = vperm.slane %v2391, %v2396
        %v2399 = vunpack.c.l.s4 1934713408
        %v2400 = vunpack.c.0.s8 %v2399
        %v2401 = vperm.slane %v2393, %v2400
        %v2402 = vrot.slane %v2397, 4
        %v2403 = vsel %vm597, 0, %v2402
        %v2404 = vrot.slane %v2401, 4
        %v2405 = vsel %vm597, 0, %v2404
        %v2406 = vrot.slane %v2317, 4
        %v2407 = vsel %vm597, %v2406, %v2309
        %v2409 = vunpack.c.l.s4 1983009808
        %v2410 = vunpack.c.0.s8 %v2409
        %v2411 = vperm.slane %v2407, %v2410
        %v2412 = vrot.slane %v2321, 4
        %v2413 = vsel %vm597, %v2412, %v2313
        %v2415 = vunpack.c.l.s4 1983009808
        %v2416 = vunpack.c.0.s8 %v2415
        %v2417 = vperm.slane %v2413, %v2416
        %v2418 = vrot.slane %v2417, 4
        %v2419 = vsel %vm597, %v2418, %v2411
        %v2420 = vrot.slane %v2411, 4
        %v2421 = vsel %vm597, %v2417, %v2420
        %v2423 = vunpack.c.l.s4 1934713408
        %v2424 = vunpack.c.0.s8 %v2423
        %v2425 = vperm.slane %v2419, %v2424
        %v2427 = vunpack.c.l.s4 1934713408
        %v2428 = vunpack.c.0.s8 %v2427
        %v2429 = vperm.slane %v2421, %v2428
        %v2430 = vrot.slane %v2425, 4
        %v2431 = vsel %vm597, 0, %v2430
        %v2432 = vrot.slane %v2429, 4
        %v2433 = vsel %vm597, 0, %v2432
        %v2436 = vpack.i.b16 %v2369, %v2341
        %v2438 = vshrl.u32 %v2341, 16
        %v2439 = vshrl.u32 %v2369, 16
        %v2440 = vpack.i.b16 %v2439, %v2438
        %v2444 = vpack.i.b16 %v2375, %v2347
        %v2446 = vshrl.u32 %v2347, 16
        %v2447 = vshrl.u32 %v2375, 16
        %v2448 = vpack.i.b16 %v2447, %v2446
        %v2452 = vpack.i.b16 %v2373, %v2345
        %v2454 = vshrl.u32 %v2345, 16
        %v2455 = vshrl.u32 %v2373, 16
        %v2456 = vpack.i.b16 %v2455, %v2454
        %v2460 = vpack.i.b16 %v2377, %v2349
        %v2462 = vshrl.u32 %v2349, 16
        %v2463 = vshrl.u32 %v2377, 16
        %v2464 = vpack.i.b16 %v2463, %v2462
        %v2468 = vpack.i.b16 %v2425, %v2397
        %v2470 = vshrl.u32 %v2397, 16
        %v2471 = vshrl.u32 %v2425, 16
        %v2472 = vpack.i.b16 %v2471, %v2470
        %v2476 = vpack.i.b16 %v2431, %v2403
        %v2478 = vshrl.u32 %v2403, 16
        %v2479 = vshrl.u32 %v2431, 16
        %v2480 = vpack.i.b16 %v2479, %v2478
        %v2484 = vpack.i.b16 %v2429, %v2401
        %v2486 = vshrl.u32 %v2401, 16
        %v2487 = vshrl.u32 %v2429, 16
        %v2488 = vpack.i.b16 %v2487, %v2486
        %v2492 = vpack.i.b16 %v2433, %v2405
        %v2494 = vshrl.u32 %v2405, 16
        %v2495 = vshrl.u32 %v2433, 16
        %v2496 = vpack.i.b16 %v2495, %v2494
        %v2498 = vrot.slane %v2452, 4
        %v2499 = vsel %vm597, %v2498, %v2436
        %v2501 = vunpack.c.l.s4 1983009808
        %v2502 = vunpack.c.0.s8 %v2501
        %v2503 = vperm.slane %v2499, %v2502
        %v2504 = vrot.slane %v2460, 4
        %v2505 = vsel %vm597, %v2504, %v2444
        %v2507 = vunpack.c.l.s4 1983009808
        %v2508 = vunpack.c.0.s8 %v2507
        %v2509 = vperm.slane %v2505, %v2508
        %v2510 = vrot.slane %v2509, 4
        %v2511 = vsel %vm597, %v2510, %v2503
        %v2512 = vrot.slane %v2503, 4
        %v2513 = vsel %vm597, %v2509, %v2512
        %v2515 = vunpack.c.l.s4 1934713408
        %v2516 = vunpack.c.0.s8 %v2515
        %v2517 = vperm.slane %v2511, %v2516
        %v2519 = vunpack.c.l.s4 1934713408
        %v2520 = vunpack.c.0.s8 %v2519
        %v2521 = vperm.slane %v2513, %v2520
        %v2522 = vrot.slane %v2517, 4
        %v2523 = vsel %vm597, 0, %v2522
        %v2524 = vrot.slane %v2521, 4
        %v2525 = vsel %vm597, 0, %v2524
        %v2526 = vrot.slane %v2456, 4
        %v2527 = vsel %vm597, %v2526, %v2440
        %v2529 = vunpack.c.l.s4 1983009808
        %v2530 = vunpack.c.0.s8 %v2529
        %v2531 = vperm.slane %v2527, %v2530
        %v2532 = vrot.slane %v2464, 4
        %v2533 = vsel %vm597, %v2532, %v2448
        %v2535 = vunpack.c.l.s4 1983009808
        %v2536 = vunpack.c.0.s8 %v2535
        %v2537 = vperm.slane %v2533, %v2536
        %v2538 = vrot.slane %v2537, 4
        %v2539 = vsel %vm597, %v2538, %v2531
        %v2540 = vrot.slane %v2531, 4
        %v2541 = vsel %vm597, %v2537, %v2540
        %v2543 = vunpack.c.l.s4 1934713408
        %v2544 = vunpack.c.0.s8 %v2543
        %v2545 = vperm.slane %v2539, %v2544
        %v2547 = vunpack.c.l.s4 1934713408
        %v2548 = vunpack.c.0.s8 %v2547
        %v2549 = vperm.slane %v2541, %v2548
        %v2550 = vrot.slane %v2545, 4
        %v2551 = vsel %vm597, 0, %v2550
        %v2552 = vrot.slane %v2549, 4
        %v2553 = vsel %vm597, 0, %v2552
        %v2554 = vrot.slane %v2484, 4
        %v2555 = vsel %vm597, %v2554, %v2468
        %v2557 = vunpack.c.l.s4 1983009808
        %v2558 = vunpack.c.0.s8 %v2557
        %v2559 = vperm.slane %v2555, %v2558
        %v2560 = vrot.slane %v2492, 4
        %v2561 = vsel %vm597, %v2560, %v2476
        %v2563 = vunpack.c.l.s4 1983009808
        %v2564 = vunpack.c.0.s8 %v2563
        %v2565 = vperm.slane %v2561, %v2564
        %v2566 = vrot.slane %v2565, 4
        %v2567 = vsel %vm597, %v2566, %v2559
        %v2568 = vrot.slane %v2559, 4
        %v2569 = vsel %vm597, %v2565, %v2568
        %v2571 = vunpack.c.l.s4 1934713408
        %v2572 = vunpack.c.0.s8 %v2571
        %v2573 = vperm.slane %v2567, %v2572
        %v2575 = vunpack.c.l.s4 1934713408
        %v2576 = vunpack.c.0.s8 %v2575
        %v2577 = vperm.slane %v2569, %v2576
        %v2578 = vrot.slane %v2573, 4
        %v2579 = vsel %vm597, 0, %v2578
        %v2580 = vrot.slane %v2577, 4
        %v2581 = vsel %vm597, 0, %v2580
        %v2582 = vrot.slane %v2488, 4
        %v2583 = vsel %vm597, %v2582, %v2472
        %v2585 = vunpack.c.l.s4 1983009808
        %v2586 = vunpack.c.0.s8 %v2585
        %v2587 = vperm.slane %v2583, %v2586
        %v2588 = vrot.slane %v2496, 4
        %v2589 = vsel %vm597, %v2588, %v2480
        %v2591 = vunpack.c.l.s4 1983009808
        %v2592 = vunpack.c.0.s8 %v2591
        %v2593 = vperm.slane %v2589, %v2592
        %v2594 = vrot.slane %v2593, 4
        %v2595 = vsel %vm597, %v2594, %v2587
        %v2596 = vrot.slane %v2587, 4
        %v2597 = vsel %vm597, %v2593, %v2596
        %v2599 = vunpack.c.l.s4 1934713408
        %v2600 = vunpack.c.0.s8 %v2599
        %v2601 = vperm.slane %v2595, %v2600
        %v2603 = vunpack.c.l.s4 1934713408
        %v2604 = vunpack.c.0.s8 %v2603
        %v2605 = vperm.slane %v2597, %v2604
        %v2606 = vrot.slane %v2601, 4
        %v2607 = vsel %vm597, 0, %v2606
        %v2608 = vrot.slane %v2605, 4
        %v2609 = vsel %vm597, 0, %v2608
        %v2612 = vpack.i.b16 %v2545, %v2517
        %v2613 = vshrl.u32 %v2517, 16
        %v2614 = vshrl.u32 %v2545, 16
        %v2615 = vpack.i.b16 %v2614, %v2613
        %v2618 = vpack.i.b16 %v2551, %v2523
        %v2619 = vshrl.u32 %v2523, 16
        %v2620 = vshrl.u32 %v2551, 16
        %v2621 = vpack.i.b16 %v2620, %v2619
        %v2624 = vpack.i.b16 %v2549, %v2521
        %v2625 = vshrl.u32 %v2521, 16
        %v2626 = vshrl.u32 %v2549, 16
        %v2627 = vpack.i.b16 %v2626, %v2625
        %v2630 = vpack.i.b16 %v2553, %v2525
        %v2631 = vshrl.u32 %v2525, 16
        %v2632 = vshrl.u32 %v2553, 16
        %v2633 = vpack.i.b16 %v2632, %v2631
        %v2636 = vpack.i.b16 %v2601, %v2573
        %v2637 = vshrl.u32 %v2573, 16
        %v2638 = vshrl.u32 %v2601, 16
        %v2639 = vpack.i.b16 %v2638, %v2637
        %v2642 = vpack.i.b16 %v2607, %v2579
        %v2643 = vshrl.u32 %v2579, 16
        %v2644 = vshrl.u32 %v2607, 16
        %v2645 = vpack.i.b16 %v2644, %v2643
        %v2648 = vpack.i.b16 %v2605, %v2577
        %v2649 = vshrl.u32 %v2577, 16
        %v2650 = vshrl.u32 %v2605, 16
        %v2651 = vpack.i.b16 %v2650, %v2649
        %v2654 = vpack.i.b16 %v2609, %v2581
        %v2655 = vshrl.u32 %v2581, 16
        %v2656 = vshrl.u32 %v2609, 16
        %v2657 = vpack.i.b16 %v2656, %v2655
        %v2658 = vunpack.c.l.b16 %v2612
        %v2659 = vunpack.c.l.b16 %v2636
        %v2660 = vpack.c.b16 %v2659, %v2658
        %v2661 = vunpack.c.l.b16 %v2615
        %v2662 = vunpack.c.l.b16 %v2639
        %v2663 = vpack.c.b16 %v2662, %v2661
        %2664 = vrot.lane.b32.xlu0 %v2663, 16
        %v2665 = vpop.permute.xlu0 %2664
        %v2666 = vunpack.c.l.b16 %v2618
        %v2667 = vunpack.c.l.b16 %v2642
        %v2668 = vpack.c.b16 %v2667, %v2666
        %2669 = vrot.lane.b32.xlu0 %v2668, 32
        %v2670 = vpop.permute.xlu0 %2669
        %v2671 = vunpack.c.l.b16 %v2621
        %v2672 = vunpack.c.l.b16 %v2645
        %v2673 = vpack.c.b16 %v2672, %v2671
        %2674 = vrot.lane.b32.xlu0 %v2673, 48
        %v2675 = vpop.permute.xlu0 %2674
        %v2676 = vunpack.c.l.b16 %v2624
        %v2677 = vunpack.c.l.b16 %v2648
        %v2678 = vpack.c.b16 %v2677, %v2676
        %2679 = vrot.lane.b32.xlu0 %v2678, 64
        %v2680 = vpop.permute.xlu0 %2679
        %v2681 = vunpack.c.l.b16 %v2627
        %v2682 = vunpack.c.l.b16 %v2651
        %v2683 = vpack.c.b16 %v2682, %v2681
        %2684 = vrot.lane.b32.xlu0 %v2683, 80
        %v2685 = vpop.permute.xlu0 %2684
        %v2686 = vunpack.c.l.b16 %v2630
        %v2687 = vunpack.c.l.b16 %v2654
        %v2688 = vpack.c.b16 %v2687, %v2686
        %2689 = vrot.lane.b32.xlu0 %v2688, 96
        %v2690 = vpop.permute.xlu0 %2689
        %v2691 = vunpack.c.l.b16 %v2633
        %v2692 = vunpack.c.l.b16 %v2657
        %v2693 = vpack.c.b16 %v2692, %v2691
        %2694 = vrot.lane.b32.xlu0 %v2693, 112
        %v2695 = vpop.permute.xlu0 %2694
        %v2698 = vsel %vm1703, %v2660, %v2665
        %vm2699 = vcmask 261120
        %v2701 = vsel %vm2699, %v2698, %v2670
        %vm2702 = vcmask 392192
        %v2704 = vsel %vm2702, %v2701, %v2675
        %vm2705 = vcmask 523264
        %v2707 = vsel %vm2705, %v2704, %v2680
        %vm2708 = vcmask 654336
        %v2710 = vsel %vm2708, %v2707, %v2685
        %vm2711 = vcmask 785408
        %v2713 = vsel %vm2711, %v2710, %v2690
        %vm2714 = vcmask 916480
        %v2716 = vsel %vm2714, %v2713, %v2695
        %v2718 = vld [vmem:[#allocation10] sm:$0xf]
        %v2719 = vld [vmem:[#allocation10 + $0x4] sm:$0xf]
        %v2720 = vld [vmem:[#allocation10 + $0x8] sm:$0xf]
        %v2721 = vld [vmem:[#allocation10 + $0xc] sm:$0xf]
        %v2722 = vld [vmem:[#allocation10 + $0x10] sm:$0xf]
        %v2723 = vld [vmem:[#allocation10 + $0x14] sm:$0xf]
        %v2724 = vld [vmem:[#allocation10 + $0x18] sm:$0xf]
        %v2725 = vld [vmem:[#allocation10 + $0x1c] sm:$0xf]
        %v2726 = vld [vmem:[#allocation10 + $0x20] sm:$0xf]
        %v2727 = vld [vmem:[#allocation10 + $0x24] sm:$0xf]
        %v2728 = vld [vmem:[#allocation10 + $0x28] sm:$0xf]
        %v2729 = vld [vmem:[#allocation10 + $0x2c] sm:$0xf]
        %v2730 = vld [vmem:[#allocation10 + $0x30] sm:$0xf]
        %v2731 = vld [vmem:[#allocation10 + $0x34] sm:$0xf]
        %v2732 = vld [vmem:[#allocation10 + $0x38] sm:$0xf]
        %v2733 = vld [vmem:[#allocation10 + $0x3c] sm:$0xf]
        %v2734 = vld [vmem:[%s4] sm:$0x1]
        %v2736 = vperm.slane %v2734, 0
        %v2754 = vunpack.c.l.b16 %v2718
        %v2755 = vunpack.c.l.b16 %v2719
        %v2756 = vunpack.c.l.b16 %v2720
        %v2757 = vunpack.c.l.b16 %v2721
        %v2758 = vunpack.c.l.b16 %v2722
        %v2759 = vunpack.c.l.b16 %v2723
        %v2760 = vunpack.c.l.b16 %v2724
        %v2761 = vunpack.c.l.b16 %v2725
        %v2762 = vunpack.c.l.b16 %v2726
        %v2763 = vunpack.c.l.b16 %v2727
        %v2764 = vunpack.c.l.b16 %v2728
        %v2765 = vunpack.c.l.b16 %v2729
        %v2766 = vunpack.c.l.b16 %v2730
        %v2767 = vunpack.c.l.b16 %v2731
        %v2768 = vunpack.c.l.b16 %v2732
        %v2769 = vunpack.c.l.b16 %v2733
        %v2770 = vpack.c.b16 %v2755, %v2754
        %v2771 = vpack.c.b16 %v2757, %v2756
        %v2772 = vpack.c.b16 %v2759, %v2758
        %v2773 = vpack.c.b16 %v2761, %v2760
        %v2774 = vpack.c.b16 %v2763, %v2762
        %v2775 = vpack.c.b16 %v2765, %v2764
        %v2776 = vpack.c.b16 %v2767, %v2766
        %v2777 = vpack.c.b16 %v2769, %v2768
        %2786 = vmatpush.bf16.msra.mxu0 %v2777
        %2787 = vmatpush.bf16.msra.mxu0 %v2776
        %2788 = vmatpush.bf16.msra.mxu0 %v2775
        %2789 = vmatpush.bf16.msra.mxu0 %v2774
        %2790 = vmatpush.bf16.msra.mxu0 %v2773
        %2791 = vmatpush.bf16.msra.mxu0 %v2772
        %2792 = vmatpush.bf16.msra.mxu0 %v2771
        %2793 = vmatpush.bf16.msra.mxu0 %v2770
        %2794 = vmatmul.bf16.gmra.mxu0 %v2716
        %v2795 = vpop.f32.mrf.mxu0
        %v2796 = vadd.f32 %v2736, %v2795
        %v2797 = vpop.f32.mrf.mxu0
        %v2798 = vadd.f32 %v2736, %v2797
        %2799 = vdwg.mxu0
        %2800 = vst [vmem:[%s308] sm:$0xff] %v2796
        %2801 = vst [vmem:[%s308 + $0x8] sm:$0xff] %v2798
        %s2802 = sand.u32 %s156, 1
        %s2803 = scalar_lea.sflag [#allocation6], %s2802
        %s2804 = sand.u32 %s156, 1
        %s2805 = smul.addr %s2804, 16
        %s2806 = scalar_lea.vmem [#allocation12], %s2805
        // Predicated region
        $region61: #{tpu_custom_call.1} parent=39 // pred_check
          %p2807 = pneg %p166
        $region62: #{tpu_custom_call.1} parent=39 // pred_check_branch
          %2809 = sbr.rel (%p2807) target = $region64
        $region63: #{tpu_custom_call.1} parent=39 // pred_region
          %s2810 = smul.u32 2, %s29
          %2812 = vsyncadd %s2803, 0
          %s2813 = smul.addr %s28, 2
          %s2814 = sadd.s32 %s2810, %s2813
          %s2815 = smul.addr %s2814, 8
          %s2816 = scalar_lea.hbm %s5, %s2815
          %s2817 = sshll.u32 %s2806, 4
          %s2818 = int_to_ptr.vmem [resolvable:$true] %s2817
          %s2819 = sshll.u32 %s2816, 4
          %s2820 = int_to_ptr.hbm [resolvable:$true] %s2819
          %2825 = dma.vmem_to_hbm [thread:$0]  %s2818, 256, %s2820, %s2803, 128, 128, 8
        $region64: #{tpu_custom_call.1} parent=39 // pred_fallthru
          _
      $region40: #{tpu_custom_call.1} parent=5 // pred_fallthru
        _
      %p2826 = scmp.le.s32.totalorder 2, %s19
      // Predicated region
      $region65: #{tpu_custom_call.1} parent=5 // pred_check
        %p2827 = pneg %p2826
      $region66: #{tpu_custom_call.1} parent=5 // pred_check_branch
        %2829 = sbr.rel (%p2827) target = $region68
      $region67: #{tpu_custom_call.1} parent=5 // pred_region
        %s2830 = ssub.s32 %s19, 2
        // Predicated region
        $region69: #{tpu_custom_call.1} parent=67 // pred_check
          %p2831 = pneg %p172
        $region70: #{tpu_custom_call.1} parent=67 // pred_check_branch
          %2833 = sbr.rel (%p2831) target = $region72
        $region71: #{tpu_custom_call.1} parent=67 // pred_region
          %s2834 = sand.u32 %s157, 1
          %s2835 = scalar_lea.sflag [#allocation6], %s2834
          %s2836 = sand.u32 %s157, 1
          %s2837 = smul.addr %s2836, 16
          %s2838 = scalar_lea.vmem [#allocation12], %s2837
          %2840 = dma.done %s2835, 256
        $region72: #{tpu_custom_call.1} parent=67 // pred_fallthru
          _
      $region68: #{tpu_custom_call.1} parent=5 // pred_fallthru
        _
    $region6: #{tpu_custom_call.1} parent=1 // loop_footer
      %s23 = sadd.s32 1, %s19
    $region7: #{tpu_custom_call.1} parent=1 // loop_footer_branch
      %18 = sbr.rel target = $region3
    $region8: #{tpu_custom_call.1} parent=1 // loop_exit
      _
    %2841 = vsyncpa [#allocation5], 1
    %s2842 = scalar_lea.sflag [#allocation5], 1
    %2843 = vsyncpa %s2842, 1
    %2844 = vsyncpa [#allocation8], 1
    %2845 = vsyncpa [#allocation11], 1
    %2846 = vsyncpa [#allocation6], 1
    %s2847 = scalar_lea.sflag [#allocation6], 1
    %2848 = vsyncpa %s2847, 1

// kernel: tpu_custom_call.1
$region0: #{tpu_custom_call.1}
  #allocation0 [shape = 'u32[]', space=smem, size = 0x4, offset = 0x4, fixed_abs, tag = 'smem constant byte address 0x4 - core index']
  #allocation1 [shape = 'u32[72,128]{1,0:T(1,128)}', space=vmem, size = 0x9000, scoped, tag = 'internal scratch']
  #allocation2 [shape = 'bf16[16,128]{1,0:T(8,128)(2,1)}', space=vmem, size = 0x1000, scoped, tag = 'scratch operand']
  #allocation3 [shape = 'bf16[16,128]{1,0:T(8,128)(2,1)}', space=vmem, size = 0x1000, scoped, tag = 'scratch operand']
  %s0 = inlined_call_operand.hbm [shape: bf16[2,16,128], index: 0, kind: input, shape index: {}]
  %s1 = inlined_call_operand.hbm [shape: bf16[128,128], index: 1, kind: input, shape index: {}]
  %s2 = inlined_call_operand.hbm [shape: bf16[128,256], index: 2, kind: input, shape index: {}]
  %s3 = inlined_call_operand.hbm [shape: bf16[128,128], index: 3, kind: input, shape index: {}]
  %s4 = inlined_call_operand.vmem [shape: f32[1,128], index: 4, kind: input, shape index: {}]
  %s5 = inlined_call_operand.hbm [shape: f32[2,16,128], index: 5, kind: output, shape index: {}]
  %s6 = sld [smem:[#allocation0]]
  $region73: #{tpu_custom_call.1} parent=0
    _
  %s8 = ssub.s32 1, %s6
  %s9 = scalar_select 0, %s8, %s6
  $region1: #{tpu_custom_call.1} parent=0
    #allocation4 [shape = 'u8[8192]{0}', space=vmem, size = 0x2000, scoped, tag = 'input window, operand 0']
    #allocation5 [shape = 's32[2]{0}', space=sflag, size = 0x8, scoped, tag = 'scoped memory for tpu_custom_call.1']
    #allocation6 [shape = 's32[2]{0}', space=sflag, size = 0x8, scoped, tag = 'scoped memory for tpu_custom_call.1']
    #allocation7 [shape = 'u8[32768]{0}', space=vmem, size = 0x8000, scoped, tag = 'input window, operand 1, single buffered']
    #allocation8 [shape = 's32[1]{0}', space=sflag, size = 0x4, scoped, tag = 'scoped memory for tpu_custom_call.1']
    #allocation9 [shape = 'u8[65536]{0}', space=vmem, size = 0x10000, scoped, tag = 'input window, operand 2, single buffered']
    #allocation10 [shape = 'u8[32768]{0}', space=vmem, size = 0x8000, scoped, tag = 'input window, operand 3, single buffered']
    #allocation11 [shape = 's32[1]{0}', space=sflag, size = 0x4, scoped, tag = 'scoped memory for tpu_custom_call.1']
    #allocation12 [shape = 'u8[16384]{0}', space=vmem, size = 0x4000, scoped, tag = 'output window, operand 0']
    %10 = vsyncpa [#allocation5], 0
    %s11 = scalar_lea.sflag [#allocation5], 1
    %12 = vsyncpa %s11, 0
    %13 = vsyncpa [#allocation8], 0
    %14 = vsyncpa [#allocation11], 0
    %15 = vsyncpa [#allocation6], 0
    %s16 = scalar_lea.sflag [#allocation6], 1
    %17 = vsyncpa %s16, 0
    loop: start=0, step=1, limit=4
    $region2: #{tpu_custom_call.1} parent=1 // loop_pre_header
      _
    $region3: #{tpu_custom_call.1} parent=1 // loop_header
      %s19 = sphi 0, %s23
      %p20 = scmp.ge.s32.totalorder %s19, 4
      %s26 = sphi 0, %s38
      %s27 = sphi 0, %s34
      %s28 = sphi 0, %s26
      %s29 = sphi 0, %s27
      %s30 = sphi 0, %s28
      %s31 = sphi 0, %s29
      %s41 = sphi 0, %s43
      %s44 = sphi 0, %s41
      %s45 = sphi 0, %s44
      %s61 = sphi 0, %s45
      %s65 = sphi 0, %s65
      %s67 = sphi 0, %s65
      %s68 = sphi 0, %s67
      %s82 = sphi 0, %s68
      %s86 = sphi 0, %s86
      %s88 = sphi 0, %s86
      %s89 = sphi 0, %s88
      %s103 = sphi 0, %s89
      %s107 = sphi 0, %s107
      %s109 = sphi 0, %s107
      %s110 = sphi 0, %s109
      %s124 = sphi 0, %s110
      %s128 = sphi 0, %s128
      %s130 = sphi 0, %s128
      %s131 = sphi 0, %s130
      %s145 = sphi 0, %s131
      %s153 = sphi 0, %s155
      %s156 = sphi 0, %s153
      %s157 = sphi 0, %s156
      %s173 = sphi 0, %s157
    $region4: #{tpu_custom_call.1} parent=1 // loop_header_branch
      %22 = sbr.rel (%p20) target = $region8
    $region5: #{tpu_custom_call.1} parent=1 // loop_body
      %s24 = ssub.s32 %s19, 1
      %s25 = ssub.s32 %s19, 2
      %s32 = sadd.s32 1, %s27
      %p33 = scmp.ge.s32.totalorder %s32, 1
      %s34 = scalar_select %p33, 0, %s32
      %s35 = sadd.s32 1, %s26
      %s36 = scalar_select %p33, %s35, %s26
      %p37 = scmp.ge.s32.totalorder %s36, 2
      %s38 = scalar_select %p37, 0, %s36
      %s39 = ssub.s32 %s26, %s38
      %p40 = scmp.eq.s32.totalorder %s39, 0
      %s42 = sadd.s32 %s41, 1
      %s43 = scalar_select %p40, %s41, %s42
      %p46 = pneg %p40
      %p47 = scmp.eq.s32.totalorder %s19, 1
      %p48 = por %p46, %p47
      %p49 = scmp.ne.s32.totalorder %s41, %s44
      %p50 = scmp.eq.s32.totalorder %s19, 0
      %p51 = por %p49, %p50
      %p52 = scmp.ne.s32.totalorder %s41, %s44
      %p53 = scmp.eq.s32.totalorder %s24, 1
      %p54 = por %p52, %p53
      %p55 = scmp.ne.s32.totalorder %s44, %s45
      %p56 = scmp.eq.s32.totalorder %s24, 0
      %p57 = por %p55, %p56
      %p58 = scmp.ne.s32.totalorder %s44, %s45
      %p59 = scmp.eq.s32.totalorder %s25, 1
      %p60 = por %p58, %p59
      %p62 = scmp.ne.s32.totalorder %s45, %s61
      %p63 = scmp.eq.s32.totalorder %s25, 0
      %p64 = por %p62, %p63
      %s66 = sadd.s32 %s65, 1
      %p69 = scmp.eq.s32.totalorder %s19, 1
      %p70 = scmp.ne.s32.totalorder %s65, %s67
      %p71 = scmp.eq.s32.totalorder %s19, 0
      %p72 = por %p70, %p71
      %p73 = scmp.ne.s32.totalorder %s65, %s67
      %p74 = scmp.eq.s32.totalorder %s24, 1
      %p75 = por %p73, %p74
      %p76 = scmp.ne.s32.totalorder %s67, %s68
      %p77 = scmp.eq.s32.totalorder %s24, 0
      %p78 = por %p76, %p77
      %p79 = scmp.ne.s32.totalorder %s67, %s68
      %p80 = scmp.eq.s32.totalorder %s25, 1
      %p81 = por %p79, %p80
      %p83 = scmp.ne.s32.totalorder %s68, %s82
      %p84 = scmp.eq.s32.totalorder %s25, 0
      %p85 = por %p83, %p84
      %s87 = sadd.s32 %s86, 1
      %p90 = scmp.eq.s32.totalorder %s19, 1
      %p91 = scmp.ne.s32.totalorder %s86, %s88
      %p92 = scmp.eq.s32.totalorder %s19, 0
      %p93 = por %p91, %p92
      %p94 = scmp.ne.s32.totalorder %s86, %s88
      %p95 = scmp.eq.s32.totalorder %s24, 1
      %p96 = por %p94, %p95
      %p97 = scmp.ne.s32.totalorder %s88, %s89
      %p98 = scmp.eq.s32.totalorder %s24, 0
      %p99 = por %p97, %p98
      %p100 = scmp.ne.s32.totalorder %s88, %s89
      %p101 = scmp.eq.s32.totalorder %s25, 1
      %p102 = por %p100, %p101
      %p104 = scmp.ne.s32.totalorder %s89, %s103
      %p105 = scmp.eq.s32.totalorder %s25, 0
      %p106 = por %p104, %p105
      %s108 = sadd.s32 %s107, 1
      %p111 = scmp.eq.s32.totalorder %s19, 1
      %p112 = scmp.ne.s32.totalorder %s107, %s109
      %p113 = scmp.eq.s32.totalorder %s19, 0
      %p114 = por %p112, %p113
      %p115 = scmp.ne.s32.totalorder %s107, %s109
      %p116 = scmp.eq.s32.totalorder %s24, 1
      %p117 = por %p115, %p116
      %p118 = scmp.ne.s32.totalorder %s109, %s110
      %p119 = scmp.eq.s32.totalorder %s24, 0
      %p120 = por %p118, %p119
      %p121 = scmp.ne.s32.totalorder %s109, %s110
      %p122 = scmp.eq.s32.totalorder %s25, 1
      %p123 = por %p121, %p122
      %p125 = scmp.ne.s32.totalorder %s110, %s124
      %p126 = scmp.eq.s32.totalorder %s25, 0
      %p127 = por %p125, %p126
      %s129 = sadd.s32 %s128, 1
      %p132 = scmp.eq.s32.totalorder %s19, 1
      %p133 = scmp.ne.s32.totalorder %s128, %s130
      %p134 = scmp.eq.s32.totalorder %s19, 0
      %p135 = por %p133, %p134
      %p136 = scmp.ne.s32.totalorder %s128, %s130
      %p137 = scmp.eq.s32.totalorder %s24, 1
      %p138 = por %p136, %p137
      %p139 = scmp.ne.s32.totalorder %s130, %s131
      %p140 = scmp.eq.s32.totalorder %s24, 0
      %p141 = por %p139, %p140
      %p142 = scmp.ne.s32.totalorder %s130, %s131
      %p143 = scmp.eq.s32.totalorder %s25, 1
      %p144 = por %p142, %p143
      %p146 = scmp.ne.s32.totalorder %s131, %s145
      %p147 = scmp.eq.s32.totalorder %s25, 0
      %p148 = por %p146, %p147
      %s149 = ssub.s32 %s26, %s38
      %s150 = ssub.s32 %s27, %s34
      %s151 = sor.u32 %s149, %s150
      %p152 = scmp.eq.s32.totalorder %s151, 0
      %s154 = sadd.s32 %s153, 1
      %s155 = scalar_select %p152, %s153, %s154
      %p158 = pneg %p152
      %p159 = scmp.eq.s32.totalorder %s19, 1
      %p160 = por %p158, %p159
      %p161 = scmp.ne.s32.totalorder %s153, %s156
      %p162 = scmp.eq.s32.totalorder %s19, 0
      %p163 = por %p161, %p162
      %p164 = scmp.ne.s32.totalorder %s153, %s156
      %p165 = scmp.eq.s32.totalorder %s24, 1
      %p166 = por %p164, %p165
      %p167 = scmp.ne.s32.totalorder %s156, %s157
      %p168 = scmp.eq.s32.totalorder %s24, 0
      %p169 = por %p167, %p168
      %p170 = scmp.ne.s32.totalorder %s156, %s157
      %p171 = scmp.eq.s32.totalorder %s25, 1
      %p172 = por %p170, %p171
      %p174 = scmp.ne.s32.totalorder %s157, %s173
      %p175 = scmp.eq.s32.totalorder %s25, 0
      %p176 = por %p174, %p175
      %p177 = scmp.le.s32.totalorder 1, %s19
      %p178 = scmp.lt.s32.totalorder %s19, 3
      %p179 = pnand %p177, %p178
      %p180 = pneg %p179
      // Predicated region
      $region9: #{tpu_custom_call.1} parent=5 // pred_check
        _
      $region10: #{tpu_custom_call.1} parent=5 // pred_check_branch
        %182 = sbr.rel (%p179) target = $region12
      $region11: #{tpu_custom_call.1} parent=5 // pred_region
        %s183 = ssub.s32 %s19, 1
        // Predicated region
        $region13: #{tpu_custom_call.1} parent=11 // pred_check
          %p184 = pneg %p78
        $region14: #{tpu_custom_call.1} parent=11 // pred_check_branch
          %186 = sbr.rel (%p184) target = $region16
        $region15: #{tpu_custom_call.1} parent=11 // pred_region
          %188 = vsyncadd [#allocation8], 0
          %s189 = sshll.u32 %s1, 4
          %s190 = int_to_ptr.hbm [resolvable:$true] %s189
          %s191 = sshll.u32 [#allocation7], 4
          %s192 = int_to_ptr.vmem [resolvable:$true] %s191
          %197 = dma.hbm_to_vmem [thread:$0]  %s190, 1024, %s192, [#allocation8], 64, 64, 4
        $region16: #{tpu_custom_call.1} parent=11 // pred_fallthru
          _
        // Predicated region
        $region17: #{tpu_custom_call.1} parent=11 // pred_check
          %p198 = pneg %p99
        $region18: #{tpu_custom_call.1} parent=11 // pred_check_branch
          %200 = sbr.rel (%p198) target = $region20
        $region19: #{tpu_custom_call.1} parent=11 // pred_region
          %202 = vsyncadd [#allocation8], 0
          %s203 = sshll.u32 %s2, 4
          %s204 = int_to_ptr.hbm [resolvable:$true] %s203
          %s205 = sshll.u32 [#allocation9], 4
          %s206 = int_to_ptr.vmem [resolvable:$true] %s205
          %211 = dma.hbm_to_vmem [thread:$0]  %s204, 2048, %s206, [#allocation8], 128, 128, 8
        $region20: #{tpu_custom_call.1} parent=11 // pred_fallthru
          _
        // Predicated region
        $region21: #{tpu_custom_call.1} parent=11 // pred_check
          %p212 = pneg %p120
        $region22: #{tpu_custom_call.1} parent=11 // pred_check_branch
          %214 = sbr.rel (%p212) target = $region24
        $region23: #{tpu_custom_call.1} parent=11 // pred_region
          %216 = vsyncadd [#allocation11], 0
          %s217 = sshll.u32 %s3, 4
          %s218 = int_to_ptr.hbm [resolvable:$true] %s217
          %s219 = sshll.u32 [#allocation10], 4
          %s220 = int_to_ptr.vmem [resolvable:$true] %s219
          %225 = dma.hbm_to_vmem [thread:$0]  %s218, 1024, %s220, [#allocation11], 64, 64, 4
        $region24: #{tpu_custom_call.1} parent=11 // pred_fallthru
          _
        // Predicated region
        $region25: #{tpu_custom_call.1} parent=11 // pred_check
          %p226 = pneg %p141
        $region26: #{tpu_custom_call.1} parent=11 // pred_check_branch
          %228 = sbr.rel (%p226) target = $region28
        $region27: #{tpu_custom_call.1} parent=11 // pred_region
          _
        $region28: #{tpu_custom_call.1} parent=11 // pred_fallthru
          _
      $region12: #{tpu_custom_call.1} parent=5 // pred_fallthru
        _
      %p229 = scmp.lt.s32.totalorder %s19, 2
      // Predicated region
      $region29: #{tpu_custom_call.1} parent=5 // pred_check
        %p230 = pneg %p229
      $region30: #{tpu_custom_call.1} parent=5 // pred_check_branch
        %232 = sbr.rel (%p230) target = $region32
      $region31: #{tpu_custom_call.1} parent=5 // pred_region
        // Predicated region
        $region33: #{tpu_custom_call.1} parent=31 // pred_check
          %p233 = pneg %p51
        $region34: #{tpu_custom_call.1} parent=31 // pred_check_branch
          %235 = sbr.rel (%p233) target = $region36
        $region35: #{tpu_custom_call.1} parent=31 // pred_region
          %s236 = sand.u32 %s41, 1
          %s237 = scalar_lea.sflag [#allocation5], %s236
          %s238 = sand.u32 %s41, 1
          %s239 = smul.addr %s238, 8
          %s240 = scalar_lea.vmem [#allocation4], %s239
          %242 = vsyncadd %s237, 0
          %s243 = smul.addr %s26, 2
          %s244 = smul.addr %s243, 4
          %s245 = scalar_lea.hbm %s0, %s244
          %s246 = sshll.u32 %s245, 4
          %s247 = int_to_ptr.hbm [resolvable:$true] %s246
          %s248 = sshll.u32 %s240, 4
          %s249 = int_to_ptr.vmem [resolvable:$true] %s248
          %254 = dma.hbm_to_vmem [thread:$0]  %s247, 128, %s249, %s237, 64, 64, 4
        $region36: #{tpu_custom_call.1} parent=31 // pred_fallthru
          _
      $region32: #{tpu_custom_call.1} parent=5 // pred_fallthru
        _
      %p255 = scmp.le.s32.totalorder 1, %s19
      %p256 = scmp.lt.s32.totalorder %s19, 3
      %p257 = pnand %p255, %p256
      %p258 = pneg %p257
      // Predicated region
      $region37: #{tpu_custom_call.1} parent=5 // pred_check
        _
      $region38: #{tpu_custom_call.1} parent=5 // pred_check_branch
        %260 = sbr.rel (%p257) target = $region40
      $region39: #{tpu_custom_call.1} parent=5 // pred_region
        %s261 = ssub.s32 %s19, 1
        %s262 = sand.u32 %s44, 1
        %s263 = scalar_lea.sflag [#allocation5], %s262
        %s264 = sand.u32 %s44, 1
        %s265 = smul.addr %s264, 8
        %s266 = scalar_lea.vmem [#allocation4], %s265
        // Predicated region
        $region41: #{tpu_custom_call.1} parent=39 // pred_check
          %p267 = pneg %p57
        $region42: #{tpu_custom_call.1} parent=39 // pred_check_branch
          %269 = sbr.rel (%p267) target = $region44
        $region43: #{tpu_custom_call.1} parent=39 // pred_region
          %271 = dma.done %s263, 128
        $region44: #{tpu_custom_call.1} parent=39 // pred_fallthru
          _
        // Predicated region
        $region45: #{tpu_custom_call.1} parent=39 // pred_check
          %p272 = pneg %p78
        $region46: #{tpu_custom_call.1} parent=39 // pred_check_branch
          %274 = sbr.rel (%p272) target = $region48
        $region47: #{tpu_custom_call.1} parent=39 // pred_region
          %276 = dma.done [#allocation8], 1024
        $region48: #{tpu_custom_call.1} parent=39 // pred_fallthru
          _
        // Predicated region
        $region49: #{tpu_custom_call.1} parent=39 // pred_check
          %p277 = pneg %p99
        $region50: #{tpu_custom_call.1} parent=39 // pred_check_branch
          %279 = sbr.rel (%p277) target = $region52
        $region51: #{tpu_custom_call.1} parent=39 // pred_region
          %281 = dma.done [#allocation8], 2048
        $region52: #{tpu_custom_call.1} parent=39 // pred_fallthru
          _
        // Predicated region
        $region53: #{tpu_custom_call.1} parent=39 // pred_check
          %p282 = pneg %p120
        $region54: #{tpu_custom_call.1} parent=39 // pred_check_branch
          %284 = sbr.rel (%p282) target = $region56
        $region55: #{tpu_custom_call.1} parent=39 // pred_region
          %286 = dma.done [#allocation11], 1024
        $region56: #{tpu_custom_call.1} parent=39 // pred_fallthru
          _
        %s287 = sand.u32 %s44, 1
        %s288 = scalar_lea.sflag [#allocation5], %s287
        %s289 = sand.u32 %s44, 1
        %s290 = smul.addr %s289, 8
        %s291 = scalar_lea.vmem [#allocation4], %s290
        %p292 = pneg %p57
        %p293 = pneg %p54
        %p294 = pneg %p78
        %p295 = pneg %p75
        %p296 = pneg %p99
        %p297 = pneg %p96
        %p298 = pneg %p120
        %p299 = pneg %p117
        %p300 = pneg %p141
        %p301 = pneg %p138
        %p302 = pneg %p169
        %p303 = pneg %p166
        %s304 = sand.u32 %s156, 1
        %s305 = scalar_lea.sflag [#allocation6], %s304
        %s306 = sand.u32 %s156, 1
        %s307 = smul.addr %s306, 16
        %s308 = scalar_lea.vmem [#allocation12], %s307
        %s309 = smul.u32 2, %s29
        %p311 = scmp.eq.s32.totalorder %s29, 0
        // Predicated region
        $region57: #{tpu_custom_call.1} parent=39 // pred_check
          %p312 = pneg %p311
        $region58: #{tpu_custom_call.1} parent=39 // pred_check_branch
          %314 = sbr.rel (%p312) target = $region60
        $region59: #{tpu_custom_call.1} parent=39 // pred_region
          %v315 = vld [vmem:[%s266] sm:$0xf]
          %v316 = vld [vmem:[%s266 + $0x4] sm:$0xf]
          %v317 = vld [vmem:[#allocation9] sm:$0xff]
          %v318 = vld [vmem:[#allocation9 + $0x8] sm:$0xff]
          %v319 = vld [vmem:[#allocation9 + $0x10] sm:$0xff]
          %v320 = vld [vmem:[#allocation9 + $0x18] sm:$0xff]
          %v321 = vld [vmem:[#allocation9 + $0x20] sm:$0xff]
          %v322 = vld [vmem:[#allocation9 + $0x28] sm:$0xff]
          %v323 = vld [vmem:[#allocation9 + $0x30] sm:$0xff]
          %v324 = vld [vmem:[#allocation9 + $0x38] sm:$0xff]
          %v325 = vld [vmem:[#allocation9 + $0x40] sm:$0xff]
          %v326 = vld [vmem:[#allocation9 + $0x48] sm:$0xff]
          %v327 = vld [vmem:[#allocation9 + $0x50] sm:$0xff]
          %v328 = vld [vmem:[#allocation9 + $0x58] sm:$0xff]
          %v329 = vld [vmem:[#allocation9 + $0x60] sm:$0xff]
          %v330 = vld [vmem:[#allocation9 + $0x68] sm:$0xff]
          %v331 = vld [vmem:[#allocation9 + $0x70] sm:$0xff]
          %v332 = vld [vmem:[#allocation9 + $0x78] sm:$0xff]
          %v335 = vunpack.c.l.b16 %v315
          %v336 = vunpack.c.l.b16 %v316
          %v337 = vpack.c.b16 %v336, %v335
          %v355 = vunpack.c.l.b16 %v317
          %v356 = vunpack.c.h.b16 %v317
          %v357 = vunpack.c.l.b16 %v318
          %v358 = vunpack.c.h.b16 %v318
          %v359 = vunpack.c.l.b16 %v319
          %v360 = vunpack.c.h.b16 %v319
          %v361 = vunpack.c.l.b16 %v320
          %v362 = vunpack.c.h.b16 %v320
          %v363 = vunpack.c.l.b16 %v321
          %v364 = vunpack.c.h.b16 %v321
          %v365 = vunpack.c.l.b16 %v322
          %v366 = vunpack.c.h.b16 %v322
          %v367 = vunpack.c.l.b16 %v323
          %v368 = vunpack.c.h.b16 %v323
          %v369 = vunpack.c.l.b16 %v324
          %v370 = vunpack.c.h.b16 %v324
          %v371 = vunpack.c.l.b16 %v325
          %v372 = vunpack.c.h.b16 %v325
          %v373 = vunpack.c.l.b16 %v326
          %v374 = vunpack.c.h.b16 %v326
          %v375 = vunpack.c.l.b16 %v327
          %v376 = vunpack.c.h.b16 %v327
          %v377 = vunpack.c.l.b16 %v328
          %v378 = vunpack.c.h.b16 %v328
          %v379 = vunpack.c.l.b16 %v329
          %v380 = vunpack.c.h.b16 %v329
          %v381 = vunpack.c.l.b16 %v330
          %v382 = vunpack.c.h.b16 %v330
          %v383 = vunpack.c.l.b16 %v331
          %v384 = vunpack.c.h.b16 %v331
          %v385 = vunpack.c.l.b16 %v332
          %v386 = vunpack.c.h.b16 %v332
          %v387 = vpack.c.b16 %v357, %v355
          %v388 = vpack.c.b16 %v358, %v356
          %v389 = vpack.c.b16 %v361, %v359
          %v390 = vpack.c.b16 %v362, %v360
          %v391 = vpack.c.b16 %v365, %v363
          %v392 = vpack.c.b16 %v366, %v364
          %v393 = vpack.c.b16 %v369, %v367
          %v394 = vpack.c.b16 %v370, %v368
          %v395 = vpack.c.b16 %v373, %v371
          %v396 = vpack.c.b16 %v374, %v372
          %v397 = vpack.c.b16 %v377, %v375
          %v398 = vpack.c.b16 %v378, %v376
          %v399 = vpack.c.b16 %v381, %v379
          %v400 = vpack.c.b16 %v382, %v380
          %v401 = vpack.c.b16 %v385, %v383
          %v402 = vpack.c.b16 %v386, %v384
          %419 = vmatpush.bf16.msra.mxu0 %v401
          %420 = vmatpush.bf16.msra.mxu0 %v399
          %421 = vmatpush.bf16.msra.mxu0 %v397
          %422 = vmatpush.bf16.msra.mxu0 %v395
          %423 = vmatpush.bf16.msra.mxu0 %v393
          %424 = vmatpush.bf16.msra.mxu0 %v391
          %425 = vmatpush.bf16.msra.mxu0 %v389
          %426 = vmatpush.bf16.msra.mxu0 %v387
          %427 = vmatmul.bf16.gmra.mxu0 %v337
          %v428 = vpop.f32.mrf.mxu0
          %v429 = vadd.f32 0.0, %v428
          %v430 = vpop.f32.mrf.mxu0
          %v431 = vadd.f32 0.0, %v430
          %432 = vdwg.mxu0
          %433 = vmatpush.bf16.msra.mxu0 %v402
          %434 = vmatpush.bf16.msra.mxu0 %v400
          %435 = vmatpush.bf16.msra.mxu0 %v398
          %436 = vmatpush.bf16.msra.mxu0 %v396
          %437 = vmatpush.bf16.msra.mxu0 %v394
          %438 = vmatpush.bf16.msra.mxu0 %v392
          %439 = vmatpush.bf16.msra.mxu0 %v390
          %440 = vmatpush.bf16.msra.mxu0 %v388
          %441 = vmatmul.bf16.gmra.mxu0 %v337
          %v442 = vpop.f32.mrf.mxu0
          %v443 = vadd.f32 0.0, %v442
          %v444 = vpop.f32.mrf.mxu0
          %v445 = vadd.f32 0.0, %v444
          %446 = vdwg.mxu0
          %v447 = vpack.c.bf16 %v443, %v429
          %v448 = vpack.c.bf16 %v445, %v431
          %449 = vst [vmem:[#allocation2] sm:$0xf] %v447
          %450 = vst [vmem:[#allocation2 + $0x4] sm:$0xf] %v448
          %v453 = vrot.slane %v447, 4
          %v454 = vrot.slane %v448, 4
          %457 = vst [vmem:[#allocation3] sm:$0xf] %v453
          %458 = vst [vmem:[#allocation3 + $0x4] sm:$0xf] %v454
        $region60: #{tpu_custom_call.1} parent=39 // pred_fallthru
          _
        %s459 = smul.u32 %s29, 16
        %s460 = sshra.s32 %s459, 3
        %s461 = sand.u32 %s459, 7
        %s462 = smul.addr %s460, 4
        %s463 = scalar_lea.vmem %s266, %s462 [#allocation4]
        %v464 = vld [vmem:[%s463] sm:$0xf]
        %v465 = vld [vmem:[%s463 + $0x4] sm:$0xf]
        %v466 = vld [vmem:[#allocation7] sm:$0xf]
        %v467 = vld [vmem:[#allocation7 + $0x4] sm:$0xf]
        %v468 = vld [vmem:[#allocation7 + $0x8] sm:$0xf]
        %v469 = vld [vmem:[#allocation7 + $0xc] sm:$0xf]
        %v470 = vld [vmem:[#allocation7 + $0x10] sm:$0xf]
        %v471 = vld [vmem:[#allocation7 + $0x14] sm:$0xf]
        %v472 = vld [vmem:[#allocation7 + $0x18] sm:$0xf]
        %v473 = vld [vmem:[#allocation7 + $0x1c] sm:$0xf]
        %v474 = vld [vmem:[#allocation7 + $0x20] sm:$0xf]
        %v475 = vld [vmem:[#allocation7 + $0x24] sm:$0xf]
        %v476 = vld [vmem:[#allocation7 + $0x28] sm:$0xf]
        %v477 = vld [vmem:[#allocation7 + $0x2c] sm:$0xf]
        %v478 = vld [vmem:[#allocation7 + $0x30] sm:$0xf]
        %v479 = vld [vmem:[#allocation7 + $0x34] sm:$0xf]
        %v480 = vld [vmem:[#allocation7 + $0x38] sm:$0xf]
        %v481 = vld [vmem:[#allocation7 + $0x3c] sm:$0xf]
        %v484 = vunpack.c.l.b16 %v464
        %v485 = vunpack.c.l.b16 %v465
        %v486 = vpack.c.b16 %v485, %v484
        %v504 = vunpack.c.l.b16 %v466
        %v505 = vunpack.c.l.b16 %v467
        %v506 = vunpack.c.l.b16 %v468
        %v507 = vunpack.c.l.b16 %v469
        %v508 = vunpack.c.l.b16 %v470
        %v509 = vunpack.c.l.b16 %v471
        %v510 = vunpack.c.l.b16 %v472
        %v511 = vunpack.c.l.b16 %v473
        %v512 = vunpack.c.l.b16 %v474
        %v513 = vunpack.c.l.b16 %v475
        %v514 = vunpack.c.l.b16 %v476
        %v515 = vunpack.c.l.b16 %v477
        %v516 = vunpack.c.l.b16 %v478
        %v517 = vunpack.c.l.b16 %v479
        %v518 = vunpack.c.l.b16 %v480
        %v519 = vunpack.c.l.b16 %v481
        %v520 = vpack.c.b16 %v505, %v504
        %v521 = vpack.c.b16 %v507, %v506
        %v522 = vpack.c.b16 %v509, %v508
        %v523 = vpack.c.b16 %v511, %v510
        %v524 = vpack.c.b16 %v513, %v512
        %v525 = vpack.c.b16 %v515, %v514
        %v526 = vpack.c.b16 %v517, %v516
        %v527 = vpack.c.b16 %v519, %v518
        %536 = vmatpush.bf16.msra.mxu0 %v527
        %537 = vmatpush.bf16.msra.mxu0 %v526
        %538 = vmatpush.bf16.msra.mxu0 %v525
        %539 = vmatpush.bf16.msra.mxu0 %v524
        %540 = vmatpush.bf16.msra.mxu0 %v523
        %541 = vmatpush.bf16.msra.mxu0 %v522
        %542 = vmatpush.bf16.msra.mxu0 %v521
        %543 = vmatpush.bf16.msra.mxu0 %v520
        %544 = vmatmul.bf16.gmra.mxu0 %v486
        %v545 = vpop.f32.mrf.mxu0
        %v546 = vadd.f32 0.0, %v545
        %v547 = vpop.f32.mrf.mxu0
        %v548 = vadd.f32 0.0, %v547
        %549 = vdwg.mxu0
        %v550 = vpack.c.bf16 %v546, %v546
        %v551 = vpack.c.bf16 %v548, %v548
        %554 = vrot.lane.b32.xlu0 %v550, 112
        %v555 = vpop.permute.xlu0 %554
        %556 = vrot.lane.b32.xlu0 %v551, 112
        %v557 = vpop.permute.xlu0 %556
        %560 = vrot.lane.b32.xlu0 %v550, 96
        %v561 = vpop.permute.xlu0 %560
        %562 = vrot.lane.b32.xlu0 %v551, 96
        %v563 = vpop.permute.xlu0 %562
        %566 = vrot.lane.b32.xlu0 %v550, 80
        %v567 = vpop.permute.xlu0 %566
        %568 = vrot.lane.b32.xlu0 %v551, 80
        %v569 = vpop.permute.xlu0 %568
        %572 = vrot.lane.b32.xlu0 %v550, 64
        %v573 = vpop.permute.xlu0 %572
        %574 = vrot.lane.b32.xlu0 %v551, 64
        %v575 = vpop.permute.xlu0 %574
        %578 = vrot.lane.b32.xlu0 %v550, 48
        %v579 = vpop.permute.xlu0 %578
        %580 = vrot.lane.b32.xlu0 %v551, 48
        %v581 = vpop.permute.xlu0 %580
        %584 = vrot.lane.b32.xlu0 %v550, 32
        %v585 = vpop.permute.xlu0 %584
        %586 = vrot.lane.b32.xlu0 %v551, 32
        %v587 = vpop.permute.xlu0 %586
        %590 = vrot.lane.b32.xlu0 %v550, 16
        %v591 = vpop.permute.xlu0 %590
        %592 = vrot.lane.b32.xlu0 %v551, 16
        %v593 = vpop.permute.xlu0 %592
        %v596 = vrot.slane %v573, 4
        %vm597 = vcmask 1047556
        %v598 = vsel %vm597, %v596, %v550
        %v600 = vunpack.c.l.s4 1983009808
        %v601 = vunpack.c.0.s8 %v600
        %v602 = vperm.slane %v598, %v601
        %v603 = vrot.slane %v585, 4
        %v604 = vsel %vm597, %v603, %v561
        %v606 = vunpack.c.l.s4 1983009808
        %v607 = vunpack.c.0.s8 %v606
        %v608 = vperm.slane %v604, %v607
        %v609 = vrot.slane %v608, 4
        %v610 = vsel %vm597, %v609, %v602
        %v611 = vrot.slane %v602, 4
        %v612 = vsel %vm597, %v608, %v611
        %v614 = vunpack.c.l.s4 1934713408
        %v615 = vunpack.c.0.s8 %v614
        %v616 = vperm.slane %v610, %v615
        %v618 = vunpack.c.l.s4 1934713408
        %v619 = vunpack.c.0.s8 %v618
        %v620 = vperm.slane %v612, %v619
        %v621 = vrot.slane %v616, 4
        %v622 = vsel %vm597, 0, %v621
        %v623 = vrot.slane %v620, 4
        %v624 = vsel %vm597, 0, %v623
        %v625 = vrot.slane %v579, 4
        %v626 = vsel %vm597, %v625, %v555
        %v628 = vunpack.c.l.s4 1983009808
        %v629 = vunpack.c.0.s8 %v628
        %v630 = vperm.slane %v626, %v629
        %v631 = vrot.slane %v591, 4
        %v632 = vsel %vm597, %v631, %v567
        %v634 = vunpack.c.l.s4 1983009808
        %v635 = vunpack.c.0.s8 %v634
        %v636 = vperm.slane %v632, %v635
        %v637 = vrot.slane %v636, 4
        %v638 = vsel %vm597, %v637, %v630
        %v639 = vrot.slane %v630, 4
        %v640 = vsel %vm597, %v636, %v639
        %v642 = vunpack.c.l.s4 1934713408
        %v643 = vunpack.c.0.s8 %v642
        %v644 = vperm.slane %v638, %v643
        %v646 = vunpack.c.l.s4 1934713408
        %v647 = vunpack.c.0.s8 %v646
        %v648 = vperm.slane %v640, %v647
        %v649 = vrot.slane %v644, 4
        %v650 = vsel %vm597, 0, %v649
        %v651 = vrot.slane %v648, 4
        %v652 = vsel %vm597, 0, %v651
        %v653 = vrot.slane %v575, 4
        %v654 = vsel %vm597, %v653, %v551
        %v656 = vunpack.c.l.s4 1983009808
        %v657 = vunpack.c.0.s8 %v656
        %v658 = vperm.slane %v654, %v657
        %v659 = vrot.slane %v587, 4
        %v660 = vsel %vm597, %v659, %v563
        %v662 = vunpack.c.l.s4 1983009808
        %v663 = vunpack.c.0.s8 %v662
        %v664 = vperm.slane %v660, %v663
        %v665 = vrot.slane %v664, 4
        %v666 = vsel %vm597, %v665, %v658
        %v667 = vrot.slane %v658, 4
        %v668 = vsel %vm597, %v664, %v667
        %v670 = vunpack.c.l.s4 1934713408
        %v671 = vunpack.c.0.s8 %v670
        %v672 = vperm.slane %v666, %v671
        %v674 = vunpack.c.l.s4 1934713408
        %v675 = vunpack.c.0.s8 %v674
        %v676 = vperm.slane %v668, %v675
        %v677 = vrot.slane %v672, 4
        %v678 = vsel %vm597, 0, %v677
        %v679 = vrot.slane %v676, 4
        %v680 = vsel %vm597, 0, %v679
        %v681 = vrot.slane %v581, 4
        %v682 = vsel %vm597, %v681, %v557
        %v684 = vunpack.c.l.s4 1983009808
        %v685 = vunpack.c.0.s8 %v684
        %v686 = vperm.slane %v682, %v685
        %v687 = vrot.slane %v593, 4
        %v688 = vsel %vm597, %v687, %v569
        %v690 = vunpack.c.l.s4 1983009808
        %v691 = vunpack.c.0.s8 %v690
        %v692 = vperm.slane %v688, %v691
        %v693 = vrot.slane %v692, 4
        %v694 = vsel %vm597, %v693, %v686
        %v695 = vrot.slane %v686, 4
        %v696 = vsel %vm597, %v692, %v695
        %v698 = vunpack.c.l.s4 1934713408
        %v699 = vunpack.c.0.s8 %v698
        %v700 = vperm.slane %v694, %v699
        %v702 = vunpack.c.l.s4 1934713408
        %v703 = vunpack.c.0.s8 %v702
        %v704 = vperm.slane %v696, %v703
        %v705 = vrot.slane %v700, 4
        %v706 = vsel %vm597, 0, %v705
        %v707 = vrot.slane %v704, 4
        %v708 = vsel %vm597, 0, %v707
        %v711 = vpack.i.b16 %v644, %v616
        %v713 = vshrl.u32 %v616, 16
        %v714 = vshrl.u32 %v644, 16
        %v715 = vpack.i.b16 %v714, %v713
        %v719 = vpack.i.b16 %v650, %v622
        %v721 = vshrl.u32 %v622, 16
        %v722 = vshrl.u32 %v650, 16
        %v723 = vpack.i.b16 %v722, %v721
        %v727 = vpack.i.b16 %v648, %v620
        %v729 = vshrl.u32 %v620, 16
        %v730 = vshrl.u32 %v648, 16
        %v731 = vpack.i.b16 %v730, %v729
        %v735 = vpack.i.b16 %v652, %v624
        %v737 = vshrl.u32 %v624, 16
        %v738 = vshrl.u32 %v652, 16
        %v739 = vpack.i.b16 %v738, %v737
        %v743 = vpack.i.b16 %v700, %v672
        %v745 = vshrl.u32 %v672, 16
        %v746 = vshrl.u32 %v700, 16
        %v747 = vpack.i.b16 %v746, %v745
        %v751 = vpack.i.b16 %v706, %v678
        %v753 = vshrl.u32 %v678, 16
        %v754 = vshrl.u32 %v706, 16
        %v755 = vpack.i.b16 %v754, %v753
        %v759 = vpack.i.b16 %v704, %v676
        %v761 = vshrl.u32 %v676, 16
        %v762 = vshrl.u32 %v704, 16
        %v763 = vpack.i.b16 %v762, %v761
        %v767 = vpack.i.b16 %v708, %v680
        %v769 = vshrl.u32 %v680, 16
        %v770 = vshrl.u32 %v708, 16
        %v771 = vpack.i.b16 %v770, %v769
        %v773 = vrot.slane %v727, 4
        %v774 = vsel %vm597, %v773, %v711
        %v776 = vunpack.c.l.s4 1983009808
        %v777 = vunpack.c.0.s8 %v776
        %v778 = vperm.slane %v774, %v777
        %v779 = vrot.slane %v735, 4
        %v780 = vsel %vm597, %v779, %v719
        %v782 = vunpack.c.l.s4 1983009808
        %v783 = vunpack.c.0.s8 %v782
        %v784 = vperm.slane %v780, %v783
        %v785 = vrot.slane %v784, 4
        %v786 = vsel %vm597, %v785, %v778
        %v787 = vrot.slane %v778, 4
        %v788 = vsel %vm597, %v784, %v787
        %v790 = vunpack.c.l.s4 1934713408
        %v791 = vunpack.c.0.s8 %v790
        %v792 = vperm.slane %v786, %v791
        %v794 = vunpack.c.l.s4 1934713408
        %v795 = vunpack.c.0.s8 %v794
        %v796 = vperm.slane %v788, %v795
        %v797 = vrot.slane %v792, 4
        %v798 = vsel %vm597, 0, %v797
        %v799 = vrot.slane %v796, 4
        %v800 = vsel %vm597, 0, %v799
        %v801 = vrot.slane %v731, 4
        %v802 = vsel %vm597, %v801, %v715
        %v804 = vunpack.c.l.s4 1983009808
        %v805 = vunpack.c.0.s8 %v804
        %v806 = vperm.slane %v802, %v805
        %v807 = vrot.slane %v739, 4
        %v808 = vsel %vm597, %v807, %v723
        %v810 = vunpack.c.l.s4 1983009808
        %v811 = vunpack.c.0.s8 %v810
        %v812 = vperm.slane %v808, %v811
        %v813 = vrot.slane %v812, 4
        %v814 = vsel %vm597, %v813, %v806
        %v815 = vrot.slane %v806, 4
        %v816 = vsel %vm597, %v812, %v815
        %v818 = vunpack.c.l.s4 1934713408
        %v819 = vunpack.c.0.s8 %v818
        %v820 = vperm.slane %v814, %v819
        %v822 = vunpack.c.l.s4 1934713408
        %v823 = vunpack.c.0.s8 %v822
        %v824 = vperm.slane %v816, %v823
        %v825 = vrot.slane %v820, 4
        %v826 = vsel %vm597, 0, %v825
        %v827 = vrot.slane %v824, 4
        %v828 = vsel %vm597, 0, %v827
        %v829 = vrot.slane %v759, 4
        %v830 = vsel %vm597, %v829, %v743
        %v832 = vunpack.c.l.s4 1983009808
        %v833 = vunpack.c.0.s8 %v832
        %v834 = vperm.slane %v830, %v833
        %v835 = vrot.slane %v767, 4
        %v836 = vsel %vm597, %v835, %v751
        %v838 = vunpack.c.l.s4 1983009808
        %v839 = vunpack.c.0.s8 %v838
        %v840 = vperm.slane %v836, %v839
        %v841 = vrot.slane %v840, 4
        %v842 = vsel %vm597, %v841, %v834
        %v843 = vrot.slane %v834, 4
        %v844 = vsel %vm597, %v840, %v843
        %v846 = vunpack.c.l.s4 1934713408
        %v847 = vunpack.c.0.s8 %v846
        %v848 = vperm.slane %v842, %v847
        %v850 = vunpack.c.l.s4 1934713408
        %v851 = vunpack.c.0.s8 %v850
        %v852 = vperm.slane %v844, %v851
        %v853 = vrot.slane %v848, 4
        %v854 = vsel %vm597, 0, %v853
        %v855 = vrot.slane %v852, 4
        %v856 = vsel %vm597, 0, %v855
        %v857 = vrot.slane %v763, 4
        %v858 = vsel %vm597, %v857, %v747
        %v860 = vunpack.c.l.s4 1983009808
        %v861 = vunpack.c.0.s8 %v860
        %v862 = vperm.slane %v858, %v861
        %v863 = vrot.slane %v771, 4
        %v864 = vsel %vm597, %v863, %v755
        %v866 = vunpack.c.l.s4 1983009808
        %v867 = vunpack.c.0.s8 %v866
        %v868 = vperm.slane %v864, %v867
        %v869 = vrot.slane %v868, 4
        %v870 = vsel %vm597, %v869, %v862
        %v871 = vrot.slane %v862, 4
        %v872 = vsel %vm597, %v868, %v871
        %v874 = vunpack.c.l.s4 1934713408
        %v875 = vunpack.c.0.s8 %v874
        %v876 = vperm.slane %v870, %v875
        %v878 = vunpack.c.l.s4 1934713408
        %v879 = vunpack.c.0.s8 %v878
        %v880 = vperm.slane %v872, %v879
        %v881 = vrot.slane %v876, 4
        %v882 = vsel %vm597, 0, %v881
        %v883 = vrot.slane %v880, 4
        %v884 = vsel %vm597, 0, %v883
        %v887 = vpack.i.b16 %v820, %v792
        %v888 = vshrl.u32 %v792, 16
        %v889 = vshrl.u32 %v820, 16
        %v890 = vpack.i.b16 %v889, %v888
        %v893 = vpack.i.b16 %v826, %v798
        %v894 = vshrl.u32 %v798, 16
        %v895 = vshrl.u32 %v826, 16
        %v896 = vpack.i.b16 %v895, %v894
        %v899 = vpack.i.b16 %v824, %v796
        %v900 = vshrl.u32 %v796, 16
        %v901 = vshrl.u32 %v824, 16
        %v902 = vpack.i.b16 %v901, %v900
        %v905 = vpack.i.b16 %v828, %v800
        %v906 = vshrl.u32 %v800, 16
        %v907 = vshrl.u32 %v828, 16
        %v908 = vpack.i.b16 %v907, %v906
        %v911 = vpack.i.b16 %v876, %v848
        %v912 = vshrl.u32 %v848, 16
        %v913 = vshrl.u32 %v876, 16
        %v914 = vpack.i.b16 %v913, %v912
        %v917 = vpack.i.b16 %v882, %v854
        %v918 = vshrl.u32 %v854, 16
        %v919 = vshrl.u32 %v882, 16
        %v920 = vpack.i.b16 %v919, %v918
        %v923 = vpack.i.b16 %v880, %v852
        %v924 = vshrl.u32 %v852, 16
        %v925 = vshrl.u32 %v880, 16
        %v926 = vpack.i.b16 %v925, %v924
        %v929 = vpack.i.b16 %v884, %v856
        %v930 = vshrl.u32 %v856, 16
        %v931 = vshrl.u32 %v884, 16
        %v932 = vpack.i.b16 %v931, %v930
        %v933 = vld [vmem:[#allocation2] sm:$0xf]
        %v934 = vld [vmem:[#allocation2 + $0x4] sm:$0xf]
        %937 = vrot.lane.b32.xlu0 %v933, 112
        %v938 = vpop.permute.xlu0 %937
        %939 = vrot.lane.b32.xlu0 %v934, 112
        %v940 = vpop.permute.xlu0 %939
        %943 = vrot.lane.b32.xlu0 %v933, 96
        %v944 = vpop.permute.xlu0 %943
        %945 = vrot.lane.b32.xlu0 %v934, 96
        %v946 = vpop.permute.xlu0 %945
        %949 = vrot.lane.b32.xlu0 %v933, 80
        %v950 = vpop.permute.xlu0 %949
        %951 = vrot.lane.b32.xlu0 %v934, 80
        %v952 = vpop.permute.xlu0 %951
        %955 = vrot.lane.b32.xlu0 %v933, 64
        %v956 = vpop.permute.xlu0 %955
        %957 = vrot.lane.b32.xlu0 %v934, 64
        %v958 = vpop.permute.xlu0 %957
        %961 = vrot.lane.b32.xlu0 %v933, 48
        %v962 = vpop.permute.xlu0 %961
        %963 = vrot.lane.b32.xlu0 %v934, 48
        %v964 = vpop.permute.xlu0 %963
        %967 = vrot.lane.b32.xlu0 %v933, 32
        %v968 = vpop.permute.xlu0 %967
        %969 = vrot.lane.b32.xlu0 %v934, 32
        %v970 = vpop.permute.xlu0 %969
        %973 = vrot.lane.b32.xlu0 %v933, 16
        %v974 = vpop.permute.xlu0 %973
        %975 = vrot.lane.b32.xlu0 %v934, 16
        %v976 = vpop.permute.xlu0 %975
        %v979 = vrot.slane %v956, 4
        %v980 = vsel %vm597, %v979, %v933
        %v982 = vunpack.c.l.s4 1983009808
        %v983 = vunpack.c.0.s8 %v982
        %v984 = vperm.slane %v980, %v983
        %v985 = vrot.slane %v968, 4
        %v986 = vsel %vm597, %v985, %v944
        %v988 = vunpack.c.l.s4 1983009808
        %v989 = vunpack.c.0.s8 %v988
        %v990 = vperm.slane %v986, %v989
        %v991 = vrot.slane %v990, 4
        %v992 = vsel %vm597, %v991, %v984
        %v993 = vrot.slane %v984, 4
        %v994 = vsel %vm597, %v990, %v993
        %v996 = vunpack.c.l.s4 1934713408
        %v997 = vunpack.c.0.s8 %v996
        %v998 = vperm.slane %v992, %v997
        %v1000 = vunpack.c.l.s4 1934713408
        %v1001 = vunpack.c.0.s8 %v1000
        %v1002 = vperm.slane %v994, %v1001
        %v1003 = vrot.slane %v998, 4
        %v1004 = vsel %vm597, 0, %v1003
        %v1005 = vrot.slane %v1002, 4
        %v1006 = vsel %vm597, 0, %v1005
        %v1007 = vrot.slane %v962, 4
        %v1008 = vsel %vm597, %v1007, %v938
        %v1010 = vunpack.c.l.s4 1983009808
        %v1011 = vunpack.c.0.s8 %v1010
        %v1012 = vperm.slane %v1008, %v1011
        %v1013 = vrot.slane %v974, 4
        %v1014 = vsel %vm597, %v1013, %v950
        %v1016 = vunpack.c.l.s4 1983009808
        %v1017 = vunpack.c.0.s8 %v1016
        %v1018 = vperm.slane %v1014, %v1017
        %v1019 = vrot.slane %v1018, 4
        %v1020 = vsel %vm597, %v1019, %v1012
        %v1021 = vrot.slane %v1012, 4
        %v1022 = vsel %vm597, %v1018, %v1021
        %v1024 = vunpack.c.l.s4 1934713408
        %v1025 = vunpack.c.0.s8 %v1024
        %v1026 = vperm.slane %v1020, %v1025
        %v1028 = vunpack.c.l.s4 1934713408
        %v1029 = vunpack.c.0.s8 %v1028
        %v1030 = vperm.slane %v1022, %v1029
        %v1031 = vrot.slane %v1026, 4
        %v1032 = vsel %vm597, 0, %v1031
        %v1033 = vrot.slane %v1030, 4
        %v1034 = vsel %vm597, 0, %v1033
        %v1035 = vrot.slane %v958, 4
        %v1036 = vsel %vm597, %v1035, %v934
        %v1038 = vunpack.c.l.s4 1983009808
        %v1039 = vunpack.c.0.s8 %v1038
        %v1040 = vperm.slane %v1036, %v1039
        %v1041 = vrot.slane %v970, 4
        %v1042 = vsel %vm597, %v1041, %v946
        %v1044 = vunpack.c.l.s4 1983009808
        %v1045 = vunpack.c.0.s8 %v1044
        %v1046 = vperm.slane %v1042, %v1045
        %v1047 = vrot.slane %v1046, 4
        %v1048 = vsel %vm597, %v1047, %v1040
        %v1049 = vrot.slane %v1040, 4
        %v1050 = vsel %vm597, %v1046, %v1049
        %v1052 = vunpack.c.l.s4 1934713408
        %v1053 = vunpack.c.0.s8 %v1052
        %v1054 = vperm.slane %v1048, %v1053
        %v1056 = vunpack.c.l.s4 1934713408
        %v1057 = vunpack.c.0.s8 %v1056
        %v1058 = vperm.slane %v1050, %v1057
        %v1059 = vrot.slane %v1054, 4
        %v1060 = vsel %vm597, 0, %v1059
        %v1061 = vrot.slane %v1058, 4
        %v1062 = vsel %vm597, 0, %v1061
        %v1063 = vrot.slane %v964, 4
        %v1064 = vsel %vm597, %v1063, %v940
        %v1066 = vunpack.c.l.s4 1983009808
        %v1067 = vunpack.c.0.s8 %v1066
        %v1068 = vperm.slane %v1064, %v1067
        %v1069 = vrot.slane %v976, 4
        %v1070 = vsel %vm597, %v1069, %v952
        %v1072 = vunpack.c.l.s4 1983009808
        %v1073 = vunpack.c.0.s8 %v1072
        %v1074 = vperm.slane %v1070, %v1073
        %v1075 = vrot.slane %v1074, 4
        %v1076 = vsel %vm597, %v1075, %v1068
        %v1077 = vrot.slane %v1068, 4
        %v1078 = vsel %vm597, %v1074, %v1077
        %v1080 = vunpack.c.l.s4 1934713408
        %v1081 = vunpack.c.0.s8 %v1080
        %v1082 = vperm.slane %v1076, %v1081
        %v1084 = vunpack.c.l.s4 1934713408
        %v1085 = vunpack.c.0.s8 %v1084
        %v1086 = vperm.slane %v1078, %v1085
        %v1087 = vrot.slane %v1082, 4
        %v1088 = vsel %vm597, 0, %v1087
        %v1089 = vrot.slane %v1086, 4
        %v1090 = vsel %vm597, 0, %v1089
        %v1093 = vpack.i.b16 %v1026, %v998
        %v1095 = vshrl.u32 %v998, 16
        %v1096 = vshrl.u32 %v1026, 16
        %v1097 = vpack.i.b16 %v1096, %v1095
        %v1101 = vpack.i.b16 %v1032, %v1004
        %v1103 = vshrl.u32 %v1004, 16
        %v1104 = vshrl.u32 %v1032, 16
        %v1105 = vpack.i.b16 %v1104, %v1103
        %v1109 = vpack.i.b16 %v1030, %v1002
        %v1111 = vshrl.u32 %v1002, 16
        %v1112 = vshrl.u32 %v1030, 16
        %v1113 = vpack.i.b16 %v1112, %v1111
        %v1117 = vpack.i.b16 %v1034, %v1006
        %v1119 = vshrl.u32 %v1006, 16
        %v1120 = vshrl.u32 %v1034, 16
        %v1121 = vpack.i.b16 %v1120, %v1119
        %v1125 = vpack.i.b16 %v1082, %v1054
        %v1127 = vshrl.u32 %v1054, 16
        %v1128 = vshrl.u32 %v1082, 16
        %v1129 = vpack.i.b16 %v1128, %v1127
        %v1133 = vpack.i.b16 %v1088, %v1060
        %v1135 = vshrl.u32 %v1060, 16
        %v1136 = vshrl.u32 %v1088, 16
        %v1137 = vpack.i.b16 %v1136, %v1135
        %v1141 = vpack.i.b16 %v1086, %v1058
        %v1143 = vshrl.u32 %v1058, 16
        %v1144 = vshrl.u32 %v1086, 16
        %v1145 = vpack.i.b16 %v1144, %v1143
        %v1149 = vpack.i.b16 %v1090, %v1062
        %v1151 = vshrl.u32 %v1062, 16
        %v1152 = vshrl.u32 %v1090, 16
        %v1153 = vpack.i.b16 %v1152, %v1151
        %v1155 = vrot.slane %v1109, 4
        %v1156 = vsel %vm597, %v1155, %v1093
        %v1158 = vunpack.c.l.s4 1983009808
        %v1159 = vunpack.c.0.s8 %v1158
        %v1160 = vperm.slane %v1156, %v1159
        %v1161 = vrot.slane %v1117, 4
        %v1162 = vsel %vm597, %v1161, %v1101
        %v1164 = vunpack.c.l.s4 1983009808
        %v1165 = vunpack.c.0.s8 %v1164
        %v1166 = vperm.slane %v1162, %v1165
        %v1167 = vrot.slane %v1166, 4
        %v1168 = vsel %vm597, %v1167, %v1160
        %v1169 = vrot.slane %v1160, 4
        %v1170 = vsel %vm597, %v1166, %v1169
        %v1172 = vunpack.c.l.s4 1934713408
        %v1173 = vunpack.c.0.s8 %v1172
        %v1174 = vperm.slane %v1168, %v1173
        %v1176 = vunpack.c.l.s4 1934713408
        %v1177 = vunpack.c.0.s8 %v1176
        %v1178 = vperm.slane %v1170, %v1177
        %v1179 = vrot.slane %v1174, 4
        %v1180 = vsel %vm597, 0, %v1179
        %v1181 = vrot.slane %v1178, 4
        %v1182 = vsel %vm597, 0, %v1181
        %v1183 = vrot.slane %v1113, 4
        %v1184 = vsel %vm597, %v1183, %v1097
        %v1186 = vunpack.c.l.s4 1983009808
        %v1187 = vunpack.c.0.s8 %v1186
        %v1188 = vperm.slane %v1184, %v1187
        %v1189 = vrot.slane %v1121, 4
        %v1190 = vsel %vm597, %v1189, %v1105
        %v1192 = vunpack.c.l.s4 1983009808
        %v1193 = vunpack.c.0.s8 %v1192
        %v1194 = vperm.slane %v1190, %v1193
        %v1195 = vrot.slane %v1194, 4
        %v1196 = vsel %vm597, %v1195, %v1188
        %v1197 = vrot.slane %v1188, 4
        %v1198 = vsel %vm597, %v1194, %v1197
        %v1200 = vunpack.c.l.s4 1934713408
        %v1201 = vunpack.c.0.s8 %v1200
        %v1202 = vperm.slane %v1196, %v1201
        %v1204 = vunpack.c.l.s4 1934713408
        %v1205 = vunpack.c.0.s8 %v1204
        %v1206 = vperm.slane %v1198, %v1205
        %v1207 = vrot.slane %v1202, 4
        %v1208 = vsel %vm597, 0, %v1207
        %v1209 = vrot.slane %v1206, 4
        %v1210 = vsel %vm597, 0, %v1209
        %v1211 = vrot.slane %v1141, 4
        %v1212 = vsel %vm597, %v1211, %v1125
        %v1214 = vunpack.c.l.s4 1983009808
        %v1215 = vunpack.c.0.s8 %v1214
        %v1216 = vperm.slane %v1212, %v1215
        %v1217 = vrot.slane %v1149, 4
        %v1218 = vsel %vm597, %v1217, %v1133
        %v1220 = vunpack.c.l.s4 1983009808
        %v1221 = vunpack.c.0.s8 %v1220
        %v1222 = vperm.slane %v1218, %v1221
        %v1223 = vrot.slane %v1222, 4
        %v1224 = vsel %vm597, %v1223, %v1216
        %v1225 = vrot.slane %v1216, 4
        %v1226 = vsel %vm597, %v1222, %v1225
        %v1228 = vunpack.c.l.s4 1934713408
        %v1229 = vunpack.c.0.s8 %v1228
        %v1230 = vperm.slane %v1224, %v1229
        %v1232 = vunpack.c.l.s4 1934713408
        %v1233 = vunpack.c.0.s8 %v1232
        %v1234 = vperm.slane %v1226, %v1233
        %v1235 = vrot.slane %v1230, 4
        %v1236 = vsel %vm597, 0, %v1235
        %v1237 = vrot.slane %v1234, 4
        %v1238 = vsel %vm597, 0, %v1237
        %v1239 = vrot.slane %v1145, 4
        %v1240 = vsel %vm597, %v1239, %v1129
        %v1242 = vunpack.c.l.s4 1983009808
        %v1243 = vunpack.c.0.s8 %v1242
        %v1244 = vperm.slane %v1240, %v1243
        %v1245 = vrot.slane %v1153, 4
        %v1246 = vsel %vm597, %v1245, %v1137
        %v1248 = vunpack.c.l.s4 1983009808
        %v1249 = vunpack.c.0.s8 %v1248
        %v1250 = vperm.slane %v1246, %v1249
        %v1251 = vrot.slane %v1250, 4
        %v1252 = vsel %vm597, %v1251, %v1244
        %v1253 = vrot.slane %v1244, 4
        %v1254 = vsel %vm597, %v1250, %v1253
        %v1256 = vunpack.c.l.s4 1934713408
        %v1257 = vunpack.c.0.s8 %v1256
        %v1258 = vperm.slane %v1252, %v1257
        %v1260 = vunpack.c.l.s4 1934713408
        %v1261 = vunpack.c.0.s8 %v1260
        %v1262 = vperm.slane %v1254, %v1261
        %v1263 = vrot.slane %v1258, 4
        %v1264 = vsel %vm597, 0, %v1263
        %v1265 = vrot.slane %v1262, 4
        %v1266 = vsel %vm597, 0, %v1265
        %v1269 = vpack.i.b16 %v1202, %v1174
        %v1270 = vshrl.u32 %v1174, 16
        %v1271 = vshrl.u32 %v1202, 16
        %v1272 = vpack.i.b16 %v1271, %v1270
        %v1275 = vpack.i.b16 %v1208, %v1180
        %v1276 = vshrl.u32 %v1180, 16
        %v1277 = vshrl.u32 %v1208, 16
        %v1278 = vpack.i.b16 %v1277, %v1276
        %v1281 = vpack.i.b16 %v1206, %v1178
        %v1282 = vshrl.u32 %v1178, 16
        %v1283 = vshrl.u32 %v1206, 16
        %v1284 = vpack.i.b16 %v1283, %v1282
        %v1287 = vpack.i.b16 %v1210, %v1182
        %v1288 = vshrl.u32 %v1182, 16
        %v1289 = vshrl.u32 %v1210, 16
        %v1290 = vpack.i.b16 %v1289, %v1288
        %v1293 = vpack.i.b16 %v1258, %v1230
        %v1294 = vshrl.u32 %v1230, 16
        %v1295 = vshrl.u32 %v1258, 16
        %v1296 = vpack.i.b16 %v1295, %v1294
        %v1299 = vpack.i.b16 %v1264, %v1236
        %v1300 = vshrl.u32 %v1236, 16
        %v1301 = vshrl.u32 %v1264, 16
        %v1302 = vpack.i.b16 %v1301, %v1300
        %v1305 = vpack.i.b16 %v1262, %v1234
        %v1306 = vshrl.u32 %v1234, 16
        %v1307 = vshrl.u32 %v1262, 16
        %v1308 = vpack.i.b16 %v1307, %v1306
        %v1311 = vpack.i.b16 %v1266, %v1238
        %v1312 = vshrl.u32 %v1238, 16
        %v1313 = vshrl.u32 %v1266, 16
        %v1314 = vpack.i.b16 %v1313, %v1312
        %v1315 = vld [vmem:[#allocation3] sm:$0xf]
        %v1316 = vld [vmem:[#allocation3 + $0x4] sm:$0xf]
        %1319 = vrot.lane.b32.xlu0 %v1315, 112
        %v1320 = vpop.permute.xlu0 %1319
        %1321 = vrot.lane.b32.xlu0 %v1316, 112
        %v1322 = vpop.permute.xlu0 %1321
        %1325 = vrot.lane.b32.xlu0 %v1315, 96
        %v1326 = vpop.permute.xlu0 %1325
        %1327 = vrot.lane.b32.xlu0 %v1316, 96
        %v1328 = vpop.permute.xlu0 %1327
        %1331 = vrot.lane.b32.xlu0 %v1315, 80
        %v1332 = vpop.permute.xlu0 %1331
        %1333 = vrot.lane.b32.xlu0 %v1316, 80
        %v1334 = vpop.permute.xlu0 %1333
        %1337 = vrot.lane.b32.xlu0 %v1315, 64
        %v1338 = vpop.permute.xlu0 %1337
        %1339 = vrot.lane.b32.xlu0 %v1316, 64
        %v1340 = vpop.permute.xlu0 %1339
        %1343 = vrot.lane.b32.xlu0 %v1315, 48
        %v1344 = vpop.permute.xlu0 %1343
        %1345 = vrot.lane.b32.xlu0 %v1316, 48
        %v1346 = vpop.permute.xlu0 %1345
        %1349 = vrot.lane.b32.xlu0 %v1315, 32
        %v1350 = vpop.permute.xlu0 %1349
        %1351 = vrot.lane.b32.xlu0 %v1316, 32
        %v1352 = vpop.permute.xlu0 %1351
        %1355 = vrot.lane.b32.xlu0 %v1315, 16
        %v1356 = vpop.permute.xlu0 %1355
        %1357 = vrot.lane.b32.xlu0 %v1316, 16
        %v1358 = vpop.permute.xlu0 %1357
        %v1361 = vrot.slane %v1338, 4
        %v1362 = vsel %vm597, %v1361, %v1315
        %v1364 = vunpack.c.l.s4 1983009808
        %v1365 = vunpack.c.0.s8 %v1364
        %v1366 = vperm.slane %v1362, %v1365
        %v1367 = vrot.slane %v1350, 4
        %v1368 = vsel %vm597, %v1367, %v1326
        %v1370 = vunpack.c.l.s4 1983009808
        %v1371 = vunpack.c.0.s8 %v1370
        %v1372 = vperm.slane %v1368, %v1371
        %v1373 = vrot.slane %v1372, 4
        %v1374 = vsel %vm597, %v1373, %v1366
        %v1375 = vrot.slane %v1366, 4
        %v1376 = vsel %vm597, %v1372, %v1375
        %v1378 = vunpack.c.l.s4 1934713408
        %v1379 = vunpack.c.0.s8 %v1378
        %v1380 = vperm.slane %v1374, %v1379
        %v1382 = vunpack.c.l.s4 1934713408
        %v1383 = vunpack.c.0.s8 %v1382
        %v1384 = vperm.slane %v1376, %v1383
        %v1385 = vrot.slane %v1380, 4
        %v1386 = vsel %vm597, 0, %v1385
        %v1387 = vrot.slane %v1384, 4
        %v1388 = vsel %vm597, 0, %v1387
        %v1389 = vrot.slane %v1344, 4
        %v1390 = vsel %vm597, %v1389, %v1320
        %v1392 = vunpack.c.l.s4 1983009808
        %v1393 = vunpack.c.0.s8 %v1392
        %v1394 = vperm.slane %v1390, %v1393
        %v1395 = vrot.slane %v1356, 4
        %v1396 = vsel %vm597, %v1395, %v1332
        %v1398 = vunpack.c.l.s4 1983009808
        %v1399 = vunpack.c.0.s8 %v1398
        %v1400 = vperm.slane %v1396, %v1399
        %v1401 = vrot.slane %v1400, 4
        %v1402 = vsel %vm597, %v1401, %v1394
        %v1403 = vrot.slane %v1394, 4
        %v1404 = vsel %vm597, %v1400, %v1403
        %v1406 = vunpack.c.l.s4 1934713408
        %v1407 = vunpack.c.0.s8 %v1406
        %v1408 = vperm.slane %v1402, %v1407
        %v1410 = vunpack.c.l.s4 1934713408
        %v1411 = vunpack.c.0.s8 %v1410
        %v1412 = vperm.slane %v1404, %v1411
        %v1413 = vrot.slane %v1408, 4
        %v1414 = vsel %vm597, 0, %v1413
        %v1415 = vrot.slane %v1412, 4
        %v1416 = vsel %vm597, 0, %v1415
        %v1417 = vrot.slane %v1340, 4
        %v1418 = vsel %vm597, %v1417, %v1316
        %v1420 = vunpack.c.l.s4 1983009808
        %v1421 = vunpack.c.0.s8 %v1420
        %v1422 = vperm.slane %v1418, %v1421
        %v1423 = vrot.slane %v1352, 4
        %v1424 = vsel %vm597, %v1423, %v1328
        %v1426 = vunpack.c.l.s4 1983009808
        %v1427 = vunpack.c.0.s8 %v1426
        %v1428 = vperm.slane %v1424, %v1427
        %v1429 = vrot.slane %v1428, 4
        %v1430 = vsel %vm597, %v1429, %v1422
        %v1431 = vrot.slane %v1422, 4
        %v1432 = vsel %vm597, %v1428, %v1431
        %v1434 = vunpack.c.l.s4 1934713408
        %v1435 = vunpack.c.0.s8 %v1434
        %v1436 = vperm.slane %v1430, %v1435
        %v1438 = vunpack.c.l.s4 1934713408
        %v1439 = vunpack.c.0.s8 %v1438
        %v1440 = vperm.slane %v1432, %v1439
        %v1441 = vrot.slane %v1436, 4
        %v1442 = vsel %vm597, 0, %v1441
        %v1443 = vrot.slane %v1440, 4
        %v1444 = vsel %vm597, 0, %v1443
        %v1445 = vrot.slane %v1346, 4
        %v1446 = vsel %vm597, %v1445, %v1322
        %v1448 = vunpack.c.l.s4 1983009808
        %v1449 = vunpack.c.0.s8 %v1448
        %v1450 = vperm.slane %v1446, %v1449
        %v1451 = vrot.slane %v1358, 4
        %v1452 = vsel %vm597, %v1451, %v1334
        %v1454 = vunpack.c.l.s4 1983009808
        %v1455 = vunpack.c.0.s8 %v1454
        %v1456 = vperm.slane %v1452, %v1455
        %v1457 = vrot.slane %v1456, 4
        %v1458 = vsel %vm597, %v1457, %v1450
        %v1459 = vrot.slane %v1450, 4
        %v1460 = vsel %vm597, %v1456, %v1459
        %v1462 = vunpack.c.l.s4 1934713408
        %v1463 = vunpack.c.0.s8 %v1462
        %v1464 = vperm.slane %v1458, %v1463
        %v1466 = vunpack.c.l.s4 1934713408
        %v1467 = vunpack.c.0.s8 %v1466
        %v1468 = vperm.slane %v1460, %v1467
        %v1469 = vrot.slane %v1464, 4
        %v1470 = vsel %vm597, 0, %v1469
        %v1471 = vrot.slane %v1468, 4
        %v1472 = vsel %vm597, 0, %v1471
        %v1475 = vpack.i.b16 %v1408, %v1380
        %v1477 = vshrl.u32 %v1380, 16
        %v1478 = vshrl.u32 %v1408, 16
        %v1479 = vpack.i.b16 %v1478, %v1477
        %v1483 = vpack.i.b16 %v1414, %v1386
        %v1485 = vshrl.u32 %v1386, 16
        %v1486 = vshrl.u32 %v1414, 16
        %v1487 = vpack.i.b16 %v1486, %v1485
        %v1491 = vpack.i.b16 %v1412, %v1384
        %v1493 = vshrl.u32 %v1384, 16
        %v1494 = vshrl.u32 %v1412, 16
        %v1495 = vpack.i.b16 %v1494, %v1493
        %v1499 = vpack.i.b16 %v1416, %v1388
        %v1501 = vshrl.u32 %v1388, 16
        %v1502 = vshrl.u32 %v1416, 16
        %v1503 = vpack.i.b16 %v1502, %v1501
        %v1507 = vpack.i.b16 %v1464, %v1436
        %v1509 = vshrl.u32 %v1436, 16
        %v1510 = vshrl.u32 %v1464, 16
        %v1511 = vpack.i.b16 %v1510, %v1509
        %v1515 = vpack.i.b16 %v1470, %v1442
        %v1517 = vshrl.u32 %v1442, 16
        %v1518 = vshrl.u32 %v1470, 16
        %v1519 = vpack.i.b16 %v1518, %v1517
        %v1523 = vpack.i.b16 %v1468, %v1440
        %v1525 = vshrl.u32 %v1440, 16
        %v1526 = vshrl.u32 %v1468, 16
        %v1527 = vpack.i.b16 %v1526, %v1525
        %v1531 = vpack.i.b16 %v1472, %v1444
        %v1533 = vshrl.u32 %v1444, 16
        %v1534 = vshrl.u32 %v1472, 16
        %v1535 = vpack.i.b16 %v1534, %v1533
        %v1537 = vrot.slane %v1491, 4
        %v1538 = vsel %vm597, %v1537, %v1475
        %v1540 = vunpack.c.l.s4 1983009808
        %v1541 = vunpack.c.0.s8 %v1540
        %v1542 = vperm.slane %v1538, %v1541
        %v1543 = vrot.slane %v1499, 4
        %v1544 = vsel %vm597, %v1543, %v1483
        %v1546 = vunpack.c.l.s4 1983009808
        %v1547 = vunpack.c.0.s8 %v1546
        %v1548 = vperm.slane %v1544, %v1547
        %v1549 = vrot.slane %v1548, 4
        %v1550 = vsel %vm597, %v1549, %v1542
        %v1551 = vrot.slane %v1542, 4
        %v1552 = vsel %vm597, %v1548, %v1551
        %v1554 = vunpack.c.l.s4 1934713408
        %v1555 = vunpack.c.0.s8 %v1554
        %v1556 = vperm.slane %v1550, %v1555
        %v1558 = vunpack.c.l.s4 1934713408
        %v1559 = vunpack.c.0.s8 %v1558
        %v1560 = vperm.slane %v1552, %v1559
        %v1561 = vrot.slane %v1556, 4
        %v1562 = vsel %vm597, 0, %v1561
        %v1563 = vrot.slane %v1560, 4
        %v1564 = vsel %vm597, 0, %v1563
        %v1565 = vrot.slane %v1495, 4
        %v1566 = vsel %vm597, %v1565, %v1479
        %v1568 = vunpack.c.l.s4 1983009808
        %v1569 = vunpack.c.0.s8 %v1568
        %v1570 = vperm.slane %v1566, %v1569
        %v1571 = vrot.slane %v1503, 4
        %v1572 = vsel %vm597, %v1571, %v1487
        %v1574 = vunpack.c.l.s4 1983009808
        %v1575 = vunpack.c.0.s8 %v1574
        %v1576 = vperm.slane %v1572, %v1575
        %v1577 = vrot.slane %v1576, 4
        %v1578 = vsel %vm597, %v1577, %v1570
        %v1579 = vrot.slane %v1570, 4
        %v1580 = vsel %vm597, %v1576, %v1579
        %v1582 = vunpack.c.l.s4 1934713408
        %v1583 = vunpack.c.0.s8 %v1582
        %v1584 = vperm.slane %v1578, %v1583
        %v1586 = vunpack.c.l.s4 1934713408
        %v1587 = vunpack.c.0.s8 %v1586
        %v1588 = vperm.slane %v1580, %v1587
        %v1589 = vrot.slane %v1584, 4
        %v1590 = vsel %vm597, 0, %v1589
        %v1591 = vrot.slane %v1588, 4
        %v1592 = vsel %vm597, 0, %v1591
        %v1593 = vrot.slane %v1523, 4
        %v1594 = vsel %vm597, %v1593, %v1507
        %v1596 = vunpack.c.l.s4 1983009808
        %v1597 = vunpack.c.0.s8 %v1596
        %v1598 = vperm.slane %v1594, %v1597
        %v1599 = vrot.slane %v1531, 4
        %v1600 = vsel %vm597, %v1599, %v1515
        %v1602 = vunpack.c.l.s4 1983009808
        %v1603 = vunpack.c.0.s8 %v1602
        %v1604 = vperm.slane %v1600, %v1603
        %v1605 = vrot.slane %v1604, 4
        %v1606 = vsel %vm597, %v1605, %v1598
        %v1607 = vrot.slane %v1598, 4
        %v1608 = vsel %vm597, %v1604, %v1607
        %v1610 = vunpack.c.l.s4 1934713408
        %v1611 = vunpack.c.0.s8 %v1610
        %v1612 = vperm.slane %v1606, %v1611
        %v1614 = vunpack.c.l.s4 1934713408
        %v1615 = vunpack.c.0.s8 %v1614
        %v1616 = vperm.slane %v1608, %v1615
        %v1617 = vrot.slane %v1612, 4
        %v1618 = vsel %vm597, 0, %v1617
        %v1619 = vrot.slane %v1616, 4
        %v1620 = vsel %vm597, 0, %v1619
        %v1621 = vrot.slane %v1527, 4
        %v1622 = vsel %vm597, %v1621, %v1511
        %v1624 = vunpack.c.l.s4 1983009808
        %v1625 = vunpack.c.0.s8 %v1624
        %v1626 = vperm.slane %v1622, %v1625
        %v1627 = vrot.slane %v1535, 4
        %v1628 = vsel %vm597, %v1627, %v1519
        %v1630 = vunpack.c.l.s4 1983009808
        %v1631 = vunpack.c.0.s8 %v1630
        %v1632 = vperm.slane %v1628, %v1631
        %v1633 = vrot.slane %v1632, 4
        %v1634 = vsel %vm597, %v1633, %v1626
        %v1635 = vrot.slane %v1626, 4
        %v1636 = vsel %vm597, %v1632, %v1635
        %v1638 = vunpack.c.l.s4 1934713408
        %v1639 = vunpack.c.0.s8 %v1638
        %v1640 = vperm.slane %v1634, %v1639
        %v1642 = vunpack.c.l.s4 1934713408
        %v1643 = vunpack.c.0.s8 %v1642
        %v1644 = vperm.slane %v1636, %v1643
        %v1645 = vrot.slane %v1640, 4
        %v1646 = vsel %vm597, 0, %v1645
        %v1647 = vrot.slane %v1644, 4
        %v1648 = vsel %vm597, 0, %v1647
        %v1651 = vpack.i.b16 %v1584, %v1556
        %v1652 = vshrl.u32 %v1556, 16
        %v1653 = vshrl.u32 %v1584, 16
        %v1654 = vpack.i.b16 %v1653, %v1652
        %v1657 = vpack.i.b16 %v1590, %v1562
        %v1658 = vshrl.u32 %v1562, 16
        %v1659 = vshrl.u32 %v1590, 16
        %v1660 = vpack.i.b16 %v1659, %v1658
        %v1663 = vpack.i.b16 %v1588, %v1560
        %v1664 = vshrl.u32 %v1560, 16
        %v1665 = vshrl.u32 %v1588, 16
        %v1666 = vpack.i.b16 %v1665, %v1664
        %v1669 = vpack.i.b16 %v1592, %v1564
        %v1670 = vshrl.u32 %v1564, 16
        %v1671 = vshrl.u32 %v1592, 16
        %v1672 = vpack.i.b16 %v1671, %v1670
        %v1675 = vpack.i.b16 %v1640, %v1612
        %v1676 = vshrl.u32 %v1612, 16
        %v1677 = vshrl.u32 %v1640, 16
        %v1678 = vpack.i.b16 %v1677, %v1676
        %v1681 = vpack.i.b16 %v1646, %v1618
        %v1682 = vshrl.u32 %v1618, 16
        %v1683 = vshrl.u32 %v1646, 16
        %v1684 = vpack.i.b16 %v1683, %v1682
        %v1687 = vpack.i.b16 %v1644, %v1616
        %v1688 = vshrl.u32 %v1616, 16
        %v1689 = vshrl.u32 %v1644, 16
        %v1690 = vpack.i.b16 %v1689, %v1688
        %v1693 = vpack.i.b16 %v1648, %v1620
        %v1694 = vshrl.u32 %v1620, 16
        %v1695 = vshrl.u32 %v1648, 16
        %v1696 = vpack.i.b16 %v1695, %v1694
        %v1697 = vunpack.c.l.b16 %v887
        %v1698 = vunpack.c.l.b16 %v911
        %v1699 = vpack.c.b16 %v1698, %v1697
        %v1700 = vunpack.c.l.b16 %v1269
        %v1701 = vunpack.c.l.b16 %v1293
        %v1702 = vpack.c.b16 %v1701, %v1700
        %vm1703 = vcmask 130048
        %v1705 = vsel %vm1703, %v1699, 0
        %v1708 = vsel %vm1703, %v1702, 0
        %1710 = vmatpush.bf16.xpose.msra.mxu0 0
        %1711 = vmatpush.bf16.xpose.msra.mxu0 0
        %1712 = vmatpush.bf16.xpose.msra.mxu0 0
        %1713 = vmatpush.bf16.xpose.msra.mxu0 0
        %1714 = vmatpush.bf16.xpose.msra.mxu0 0
        %1715 = vmatpush.bf16.xpose.msra.mxu0 0
        %1716 = vmatpush.bf16.xpose.msra.mxu0 0
        %1717 = vmatpush.bf16.xpose.msra.mxu0 %v1708
        %1718 = vmatmul.bf16.gmra.mxu0 %v1705
        %v1719 = vpop.f32.mrf.mxu0
        %v1720 = vadd.f32 0.0, %v1719
        %v1721 = vpop.f32.mrf.mxu0
        %v1722 = vadd.f32 0.0, %v1721
        %1723 = vdwg.mxu0
        %v1724 = vunpack.c.l.b16 %v890
        %v1725 = vunpack.c.l.b16 %v914
        %v1726 = vpack.c.b16 %v1725, %v1724
        %v1727 = vunpack.c.l.b16 %v1272
        %v1728 = vunpack.c.l.b16 %v1296
        %v1729 = vpack.c.b16 %v1728, %v1727
        %v1731 = vsel %vm1703, %v1726, 0
        %v1734 = vsel %vm1703, %v1729, 0
        %1736 = vmatpush.bf16.xpose.msra.mxu0 0
        %1737 = vmatpush.bf16.xpose.msra.mxu0 0
        %1738 = vmatpush.bf16.xpose.msra.mxu0 0
        %1739 = vmatpush.bf16.xpose.msra.mxu0 0
        %1740 = vmatpush.bf16.xpose.msra.mxu0 0
        %1741 = vmatpush.bf16.xpose.msra.mxu0 0
        %1742 = vmatpush.bf16.xpose.msra.mxu0 0
        %1743 = vmatpush.bf16.xpose.msra.mxu0 %v1734
        %1744 = vmatmul.bf16.gmra.mxu0 %v1731
        %v1745 = vpop.f32.mrf.mxu0
        %v1746 = vadd.f32 0.0, %v1745
        %v1747 = vpop.f32.mrf.mxu0
        %v1748 = vadd.f32 0.0, %v1747
        %1749 = vdwg.mxu0
        %v1750 = vunpack.c.l.b16 %v893
        %v1751 = vunpack.c.l.b16 %v917
        %v1752 = vpack.c.b16 %v1751, %v1750
        %v1753 = vunpack.c.l.b16 %v1275
        %v1754 = vunpack.c.l.b16 %v1299
        %v1755 = vpack.c.b16 %v1754, %v1753
        %v1757 = vsel %vm1703, %v1752, 0
        %v1760 = vsel %vm1703, %v1755, 0
        %1762 = vmatpush.bf16.xpose.msra.mxu0 0
        %1763 = vmatpush.bf16.xpose.msra.mxu0 0
        %1764 = vmatpush.bf16.xpose.msra.mxu0 0
        %1765 = vmatpush.bf16.xpose.msra.mxu0 0
        %1766 = vmatpush.bf16.xpose.msra.mxu0 0
        %1767 = vmatpush.bf16.xpose.msra.mxu0 0
        %1768 = vmatpush.bf16.xpose.msra.mxu0 0
        %1769 = vmatpush.bf16.xpose.msra.mxu0 %v1760
        %1770 = vmatmul.bf16.gmra.mxu0 %v1757
        %v1771 = vpop.f32.mrf.mxu0
        %v1772 = vadd.f32 0.0, %v1771
        %v1773 = vpop.f32.mrf.mxu0
        %v1774 = vadd.f32 0.0, %v1773
        %1775 = vdwg.mxu0
        %v1776 = vunpack.c.l.b16 %v896
        %v1777 = vunpack.c.l.b16 %v920
        %v1778 = vpack.c.b16 %v1777, %v1776
        %v1779 = vunpack.c.l.b16 %v1278
        %v1780 = vunpack.c.l.b16 %v1302
        %v1781 = vpack.c.b16 %v1780, %v1779
        %v1783 = vsel %vm1703, %v1778, 0
        %v1786 = vsel %vm1703, %v1781, 0
        %1788 = vmatpush.bf16.xpose.msra.mxu0 0
        %1789 = vmatpush.bf16.xpose.msra.mxu0 0
        %1790 = vmatpush.bf16.xpose.msra.mxu0 0
        %1791 = vmatpush.bf16.xpose.msra.mxu0 0
        %1792 = vmatpush.bf16.xpose.msra.mxu0 0
        %1793 = vmatpush.bf16.xpose.msra.mxu0 0
        %1794 = vmatpush.bf16.xpose.msra.mxu0 0
        %1795 = vmatpush.bf16.xpose.msra.mxu0 %v1786
        %1796 = vmatmul.bf16.gmra.mxu0 %v1783
        %v1797 = vpop.f32.mrf.mxu0
        %v1798 = vadd.f32 0.0, %v1797
        %v1799 = vpop.f32.mrf.mxu0
        %v1800 = vadd.f32 0.0, %v1799
        %1801 = vdwg.mxu0
        %v1802 = vunpack.c.l.b16 %v899
        %v1803 = vunpack.c.l.b16 %v923
        %v1804 = vpack.c.b16 %v1803, %v1802
        %v1805 = vunpack.c.l.b16 %v1281
        %v1806 = vunpack.c.l.b16 %v1305
        %v1807 = vpack.c.b16 %v1806, %v1805
        %v1809 = vsel %vm1703, %v1804, 0
        %v1812 = vsel %vm1703, %v1807, 0
        %1814 = vmatpush.bf16.xpose.msra.mxu0 0
        %1815 = vmatpush.bf16.xpose.msra.mxu0 0
        %1816 = vmatpush.bf16.xpose.msra.mxu0 0
        %1817 = vmatpush.bf16.xpose.msra.mxu0 0
        %1818 = vmatpush.bf16.xpose.msra.mxu0 0
        %1819 = vmatpush.bf16.xpose.msra.mxu0 0
        %1820 = vmatpush.bf16.xpose.msra.mxu0 0
        %1821 = vmatpush.bf16.xpose.msra.mxu0 %v1812
        %1822 = vmatmul.bf16.gmra.mxu0 %v1809
        %v1823 = vpop.f32.mrf.mxu0
        %v1824 = vadd.f32 0.0, %v1823
        %v1825 = vpop.f32.mrf.mxu0
        %v1826 = vadd.f32 0.0, %v1825
        %1827 = vdwg.mxu0
        %v1828 = vunpack.c.l.b16 %v902
        %v1829 = vunpack.c.l.b16 %v926
        %v1830 = vpack.c.b16 %v1829, %v1828
        %v1831 = vunpack.c.l.b16 %v1284
        %v1832 = vunpack.c.l.b16 %v1308
        %v1833 = vpack.c.b16 %v1832, %v1831
        %v1835 = vsel %vm1703, %v1830, 0
        %v1838 = vsel %vm1703, %v1833, 0
        %1840 = vmatpush.bf16.xpose.msra.mxu0 0
        %1841 = vmatpush.bf16.xpose.msra.mxu0 0
        %1842 = vmatpush.bf16.xpose.msra.mxu0 0
        %1843 = vmatpush.bf16.xpose.msra.mxu0 0
        %1844 = vmatpush.bf16.xpose.msra.mxu0 0
        %1845 = vmatpush.bf16.xpose.msra.mxu0 0
        %1846 = vmatpush.bf16.xpose.msra.mxu0 0
        %1847 = vmatpush.bf16.xpose.msra.mxu0 %v1838
        %1848 = vmatmul.bf16.gmra.mxu0 %v1835
        %v1849 = vpop.f32.mrf.mxu0
        %v1850 = vadd.f32 0.0, %v1849
        %v1851 = vpop.f32.mrf.mxu0
        %v1852 = vadd.f32 0.0, %v1851
        %1853 = vdwg.mxu0
        %v1854 = vunpack.c.l.b16 %v905
        %v1855 = vunpack.c.l.b16 %v929
        %v1856 = vpack.c.b16 %v1855, %v1854
        %v1857 = vunpack.c.l.b16 %v1287
        %v1858 = vunpack.c.l.b16 %v1311
        %v1859 = vpack.c.b16 %v1858, %v1857
        %v1861 = vsel %vm1703, %v1856, 0
        %v1864 = vsel %vm1703, %v1859, 0
        %1866 = vmatpush.bf16.xpose.msra.mxu0 0
        %1867 = vmatpush.bf16.xpose.msra.mxu0 0
        %1868 = vmatpush.bf16.xpose.msra.mxu0 0
        %1869 = vmatpush.bf16.xpose.msra.mxu0 0
        %1870 = vmatpush.bf16.xpose.msra.mxu0 0
        %1871 = vmatpush.bf16.xpose.msra.mxu0 0
        %1872 = vmatpush.bf16.xpose.msra.mxu0 0
        %1873 = vmatpush.bf16.xpose.msra.mxu0 %v1864
        %1874 = vmatmul.bf16.gmra.mxu0 %v1861
        %v1875 = vpop.f32.mrf.mxu0
        %v1876 = vadd.f32 0.0, %v1875
        %v1877 = vpop.f32.mrf.mxu0
        %v1878 = vadd.f32 0.0, %v1877
        %1879 = vdwg.mxu0
        %v1880 = vunpack.c.l.b16 %v908
        %v1881 = vunpack.c.l.b16 %v932
        %v1882 = vpack.c.b16 %v1881, %v1880
        %v1883 = vunpack.c.l.b16 %v1290
        %v1884 = vunpack.c.l.b16 %v1314
        %v1885 = vpack.c.b16 %v1884, %v1883
        %v1887 = vsel %vm1703, %v1882, 0
        %v1890 = vsel %vm1703, %v1885, 0
        %1892 = vmatpush.bf16.xpose.msra.mxu0 0
        %1893 = vmatpush.bf16.xpose.msra.mxu0 0
        %1894 = vmatpush.bf16.xpose.msra.mxu0 0
        %1895 = vmatpush.bf16.xpose.msra.mxu0 0
        %1896 = vmatpush.bf16.xpose.msra.mxu0 0
        %1897 = vmatpush.bf16.xpose.msra.mxu0 0
        %1898 = vmatpush.bf16.xpose.msra.mxu0 0
        %1899 = vmatpush.bf16.xpose.msra.mxu0 %v1890
        %1900 = vmatmul.bf16.gmra.mxu0 %v1887
        %v1901 = vpop.f32.mrf.mxu0
        %v1902 = vadd.f32 0.0, %v1901
        %v1903 = vpop.f32.mrf.mxu0
        %v1904 = vadd.f32 0.0, %v1903
        %1905 = vdwg.mxu0
        %v1906 = vsel %vm1703, %v1720, -inf
        %1907 = vmax.xlane.f32.xlu0 %v1906
        %v1908 = vpop.xlane.xlu0 %1907
        %v1909 = vsel %vm1703, %v1722, -inf
        %1910 = vmax.xlane.f32.xlu0 %v1909
        %v1911 = vpop.xlane.xlu0 %1910
        %v1912 = vsel %vm1703, %v1746, -inf
        %1913 = vmax.xlane.f32.xlu0 %v1912
        %v1914 = vpop.xlane.xlu0 %1913
        %v1915 = vsel %vm1703, %v1748, -inf
        %1916 = vmax.xlane.f32.xlu0 %v1915
        %v1917 = vpop.xlane.xlu0 %1916
        %v1918 = vsel %vm1703, %v1772, -inf
        %1919 = vmax.xlane.f32.xlu0 %v1918
        %v1920 = vpop.xlane.xlu0 %1919
        %v1921 = vsel %vm1703, %v1774, -inf
        %1922 = vmax.xlane.f32.xlu0 %v1921
        %v1923 = vpop.xlane.xlu0 %1922
        %v1924 = vsel %vm1703, %v1798, -inf
        %1925 = vmax.xlane.f32.xlu0 %v1924
        %v1926 = vpop.xlane.xlu0 %1925
        %v1927 = vsel %vm1703, %v1800, -inf
        %1928 = vmax.xlane.f32.xlu0 %v1927
        %v1929 = vpop.xlane.xlu0 %1928
        %v1930 = vsel %vm1703, %v1824, -inf
        %1931 = vmax.xlane.f32.xlu0 %v1930
        %v1932 = vpop.xlane.xlu0 %1931
        %v1933 = vsel %vm1703, %v1826, -inf
        %1934 = vmax.xlane.f32.xlu0 %v1933
        %v1935 = vpop.xlane.xlu0 %1934
        %v1936 = vsel %vm1703, %v1850, -inf
        %1937 = vmax.xlane.f32.xlu0 %v1936
        %v1938 = vpop.xlane.xlu0 %1937
        %v1939 = vsel %vm1703, %v1852, -inf
        %1940 = vmax.xlane.f32.xlu0 %v1939
        %v1941 = vpop.xlane.xlu0 %1940
        %v1942 = vsel %vm1703, %v1876, -inf
        %1943 = vmax.xlane.f32.xlu0 %v1942
        %v1944 = vpop.xlane.xlu0 %1943
        %v1945 = vsel %vm1703, %v1878, -inf
        %1946 = vmax.xlane.f32.xlu0 %v1945
        %v1947 = vpop.xlane.xlu0 %1946
        %v1948 = vsel %vm1703, %v1902, -inf
        %1949 = vmax.xlane.f32.xlu0 %v1948
        %v1950 = vpop.xlane.xlu0 %1949
        %v1951 = vsel %vm1703, %v1904, -inf
        %1952 = vmax.xlane.f32.xlu0 %v1951
        %v1953 = vpop.xlane.xlu0 %1952
        %v1954 = vsub.f32 %v1720, %v1908
        %v1955 = vsub.f32 %v1722, %v1911
        %v1956 = vsub.f32 %v1746, %v1914
        %v1957 = vsub.f32 %v1748, %v1917
        %v1958 = vsub.f32 %v1772, %v1920
        %v1959 = vsub.f32 %v1774, %v1923
        %v1960 = vsub.f32 %v1798, %v1926
        %v1961 = vsub.f32 %v1800, %v1929
        %v1962 = vsub.f32 %v1824, %v1932
        %v1963 = vsub.f32 %v1826, %v1935
        %v1964 = vsub.f32 %v1850, %v1938
        %v1965 = vsub.f32 %v1852, %v1941
        %v1966 = vsub.f32 %v1876, %v1944
        %v1967 = vsub.f32 %v1878, %v1947
        %v1968 = vsub.f32 %v1902, %v1950
        %v1969 = vsub.f32 %v1904, %v1953
        %v1970 = vmul.f32 %v1954, 1.442695
        %v1971 = vpow.pop %v1970
        %v1972 = vmul.f32 %v1955, 1.442695
        %v1973 = vpow.pop %v1972
        %v1974 = vmul.f32 %v1956, 1.442695
        %v1975 = vpow.pop %v1974
        %v1976 = vmul.f32 %v1957, 1.442695
        %v1977 = vpow.pop %v1976
        %v1978 = vmul.f32 %v1958, 1.442695
        %v1979 = vpow.pop %v1978
        %v1980 = vmul.f32 %v1959, 1.442695
        %v1981 = vpow.pop %v1980
        %v1982 = vmul.f32 %v1960, 1.442695
        %v1983 = vpow.pop %v1982
        %v1984 = vmul.f32 %v1961, 1.442695
        %v1985 = vpow.pop %v1984
        %v1986 = vmul.f32 %v1962, 1.442695
        %v1987 = vpow.pop %v1986
        %v1988 = vmul.f32 %v1963, 1.442695
        %v1989 = vpow.pop %v1988
        %v1990 = vmul.f32 %v1964, 1.442695
        %v1991 = vpow.pop %v1990
        %v1992 = vmul.f32 %v1965, 1.442695
        %v1993 = vpow.pop %v1992
        %v1994 = vmul.f32 %v1966, 1.442695
        %v1995 = vpow.pop %v1994
        %v1996 = vmul.f32 %v1967, 1.442695
        %v1997 = vpow.pop %v1996
        %v1998 = vmul.f32 %v1968, 1.442695
        %v1999 = vpow.pop %v1998
        %v2000 = vmul.f32 %v1969, 1.442695
        %v2001 = vpow.pop %v2000
        %v2002 = vsel %vm1703, %v1971, 0.0
        %2003 = vadd.xlane.f32.xlu0 %v2002
        %v2004 = vpop.xlane.xlu0 %2003
        %v2005 = vsel %vm1703, %v1973, 0.0
        %2006 = vadd.xlane.f32.xlu0 %v2005
        %v2007 = vpop.xlane.xlu0 %2006
        %v2008 = vsel %vm1703, %v1975, 0.0
        %2009 = vadd.xlane.f32.xlu0 %v2008
        %v2010 = vpop.xlane.xlu0 %2009
        %v2011 = vsel %vm1703, %v1977, 0.0
        %2012 = vadd.xlane.f32.xlu0 %v2011
        %v2013 = vpop.xlane.xlu0 %2012
        %v2014 = vsel %vm1703, %v1979, 0.0
        %2015 = vadd.xlane.f32.xlu0 %v2014
        %v2016 = vpop.xlane.xlu0 %2015
        %v2017 = vsel %vm1703, %v1981, 0.0
        %2018 = vadd.xlane.f32.xlu0 %v2017
        %v2019 = vpop.xlane.xlu0 %2018
        %v2020 = vsel %vm1703, %v1983, 0.0
        %2021 = vadd.xlane.f32.xlu0 %v2020
        %v2022 = vpop.xlane.xlu0 %2021
        %v2023 = vsel %vm1703, %v1985, 0.0
        %2024 = vadd.xlane.f32.xlu0 %v2023
        %v2025 = vpop.xlane.xlu0 %2024
        %v2026 = vsel %vm1703, %v1987, 0.0
        %2027 = vadd.xlane.f32.xlu0 %v2026
        %v2028 = vpop.xlane.xlu0 %2027
        %v2029 = vsel %vm1703, %v1989, 0.0
        %2030 = vadd.xlane.f32.xlu0 %v2029
        %v2031 = vpop.xlane.xlu0 %2030
        %v2032 = vsel %vm1703, %v1991, 0.0
        %2033 = vadd.xlane.f32.xlu0 %v2032
        %v2034 = vpop.xlane.xlu0 %2033
        %v2035 = vsel %vm1703, %v1993, 0.0
        %2036 = vadd.xlane.f32.xlu0 %v2035
        %v2037 = vpop.xlane.xlu0 %2036
        %v2038 = vsel %vm1703, %v1995, 0.0
        %2039 = vadd.xlane.f32.xlu0 %v2038
        %v2040 = vpop.xlane.xlu0 %2039
        %v2041 = vsel %vm1703, %v1997, 0.0
        %2042 = vadd.xlane.f32.xlu0 %v2041
        %v2043 = vpop.xlane.xlu0 %2042
        %v2044 = vsel %vm1703, %v1999, 0.0
        %2045 = vadd.xlane.f32.xlu0 %v2044
        %v2046 = vpop.xlane.xlu0 %2045
        %v2047 = vsel %vm1703, %v2001, 0.0
        %2048 = vadd.xlane.f32.xlu0 %v2047
        %v2049 = vpop.xlane.xlu0 %2048
        %v2050 = vpack.c.bf16 %v1971, %v1971
        %v2051 = vpack.c.bf16 %v1973, %v1973
        %v2052 = vpack.c.bf16 %v1975, %v1975
        %v2053 = vpack.c.bf16 %v1977, %v1977
        %v2054 = vpack.c.bf16 %v1979, %v1979
        %v2055 = vpack.c.bf16 %v1981, %v1981
        %v2056 = vpack.c.bf16 %v1983, %v1983
        %v2057 = vpack.c.bf16 %v1985, %v1985
        %v2058 = vpack.c.bf16 %v1987, %v1987
        %v2059 = vpack.c.bf16 %v1989, %v1989
        %v2060 = vpack.c.bf16 %v1991, %v1991
        %v2061 = vpack.c.bf16 %v1993, %v1993
        %v2062 = vpack.c.bf16 %v1995, %v1995
        %v2063 = vpack.c.bf16 %v1997, %v1997
        %v2064 = vpack.c.bf16 %v1999, %v1999
        %v2065 = vpack.c.bf16 %v2001, %v2001
        %v2068 = vunpack.c.l.b16 %v2050
        %v2069 = vunpack.c.l.b16 %v2051
        %v2070 = vpack.c.b16 %v2069, %v2068
        %v2071 = vunpack.c.l.b16 %v1651
        %v2072 = vunpack.c.l.b16 %v1675
        %v2073 = vpack.c.b16 %v2072, %v2071
        %v2076 = vsel %vm1703, %v2070, 0
        %2078 = vmatpush.bf16.msra.mxu0 0
        %2079 = vmatpush.bf16.msra.mxu0 0
        %2080 = vmatpush.bf16.msra.mxu0 0
        %2081 = vmatpush.bf16.msra.mxu0 0
        %2082 = vmatpush.bf16.msra.mxu0 0
        %2083 = vmatpush.bf16.msra.mxu0 0
        %2084 = vmatpush.bf16.msra.mxu0 0
        %2085 = vmatpush.bf16.msra.mxu0 %v2073
        %2086 = vmatmul.bf16.gmra.mxu0 %v2076
        %v2087 = vpop.f32.mrf.mxu0
        %v2088 = vadd.f32 0.0, %v2087
        %v2089 = vpop.f32.mrf.mxu0
        %v2090 = vadd.f32 0.0, %v2089
        %2091 = vdwg.mxu0
        %v2094 = vunpack.c.l.b16 %v2052
        %v2095 = vunpack.c.l.b16 %v2053
        %v2096 = vpack.c.b16 %v2095, %v2094
        %v2097 = vunpack.c.l.b16 %v1654
        %v2098 = vunpack.c.l.b16 %v1678
        %v2099 = vpack.c.b16 %v2098, %v2097
        %v2102 = vsel %vm1703, %v2096, 0
        %2104 = vmatpush.bf16.msra.mxu0 0
        %2105 = vmatpush.bf16.msra.mxu0 0
        %2106 = vmatpush.bf16.msra.mxu0 0
        %2107 = vmatpush.bf16.msra.mxu0 0
        %2108 = vmatpush.bf16.msra.mxu0 0
        %2109 = vmatpush.bf16.msra.mxu0 0
        %2110 = vmatpush.bf16.msra.mxu0 0
        %2111 = vmatpush.bf16.msra.mxu0 %v2099
        %2112 = vmatmul.bf16.gmra.mxu0 %v2102
        %v2113 = vpop.f32.mrf.mxu0
        %v2114 = vadd.f32 0.0, %v2113
        %v2115 = vpop.f32.mrf.mxu0
        %v2116 = vadd.f32 0.0, %v2115
        %2117 = vdwg.mxu0
        %v2120 = vunpack.c.l.b16 %v2054
        %v2121 = vunpack.c.l.b16 %v2055
        %v2122 = vpack.c.b16 %v2121, %v2120
        %v2123 = vunpack.c.l.b16 %v1657
        %v2124 = vunpack.c.l.b16 %v1681
        %v2125 = vpack.c.b16 %v2124, %v2123
        %v2128 = vsel %vm1703, %v2122, 0
        %2130 = vmatpush.bf16.msra.mxu0 0
        %2131 = vmatpush.bf16.msra.mxu0 0
        %2132 = vmatpush.bf16.msra.mxu0 0
        %2133 = vmatpush.bf16.msra.mxu0 0
        %2134 = vmatpush.bf16.msra.mxu0 0
        %2135 = vmatpush.bf16.msra.mxu0 0
        %2136 = vmatpush.bf16.msra.mxu0 0
        %2137 = vmatpush.bf16.msra.mxu0 %v2125
        %2138 = vmatmul.bf16.gmra.mxu0 %v2128
        %v2139 = vpop.f32.mrf.mxu0
        %v2140 = vadd.f32 0.0, %v2139
        %v2141 = vpop.f32.mrf.mxu0
        %v2142 = vadd.f32 0.0, %v2141
        %2143 = vdwg.mxu0
        %v2146 = vunpack.c.l.b16 %v2056
        %v2147 = vunpack.c.l.b16 %v2057
        %v2148 = vpack.c.b16 %v2147, %v2146
        %v2149 = vunpack.c.l.b16 %v1660
        %v2150 = vunpack.c.l.b16 %v1684
        %v2151 = vpack.c.b16 %v2150, %v2149
        %v2154 = vsel %vm1703, %v2148, 0
        %2156 = vmatpush.bf16.msra.mxu0 0
        %2157 = vmatpush.bf16.msra.mxu0 0
        %2158 = vmatpush.bf16.msra.mxu0 0
        %2159 = vmatpush.bf16.msra.mxu0 0
        %2160 = vmatpush.bf16.msra.mxu0 0
        %2161 = vmatpush.bf16.msra.mxu0 0
        %2162 = vmatpush.bf16.msra.mxu0 0
        %2163 = vmatpush.bf16.msra.mxu0 %v2151
        %2164 = vmatmul.bf16.gmra.mxu0 %v2154
        %v2165 = vpop.f32.mrf.mxu0
        %v2166 = vadd.f32 0.0, %v2165
        %v2167 = vpop.f32.mrf.mxu0
        %v2168 = vadd.f32 0.0, %v2167
        %2169 = vdwg.mxu0
        %v2172 = vunpack.c.l.b16 %v2058
        %v2173 = vunpack.c.l.b16 %v2059
        %v2174 = vpack.c.b16 %v2173, %v2172
        %v2175 = vunpack.c.l.b16 %v1663
        %v2176 = vunpack.c.l.b16 %v1687
        %v2177 = vpack.c.b16 %v2176, %v2175
        %v2180 = vsel %vm1703, %v2174, 0
        %2182 = vmatpush.bf16.msra.mxu0 0
        %2183 = vmatpush.bf16.msra.mxu0 0
        %2184 = vmatpush.bf16.msra.mxu0 0
        %2185 = vmatpush.bf16.msra.mxu0 0
        %2186 = vmatpush.bf16.msra.mxu0 0
        %2187 = vmatpush.bf16.msra.mxu0 0
        %2188 = vmatpush.bf16.msra.mxu0 0
        %2189 = vmatpush.bf16.msra.mxu0 %v2177
        %2190 = vmatmul.bf16.gmra.mxu0 %v2180
        %v2191 = vpop.f32.mrf.mxu0
        %v2192 = vadd.f32 0.0, %v2191
        %v2193 = vpop.f32.mrf.mxu0
        %v2194 = vadd.f32 0.0, %v2193
        %2195 = vdwg.mxu0
        %v2198 = vunpack.c.l.b16 %v2060
        %v2199 = vunpack.c.l.b16 %v2061
        %v2200 = vpack.c.b16 %v2199, %v2198
        %v2201 = vunpack.c.l.b16 %v1666
        %v2202 = vunpack.c.l.b16 %v1690
        %v2203 = vpack.c.b16 %v2202, %v2201
        %v2206 = vsel %vm1703, %v2200, 0
        %2208 = vmatpush.bf16.msra.mxu0 0
        %2209 = vmatpush.bf16.msra.mxu0 0
        %2210 = vmatpush.bf16.msra.mxu0 0
        %2211 = vmatpush.bf16.msra.mxu0 0
        %2212 = vmatpush.bf16.msra.mxu0 0
        %2213 = vmatpush.bf16.msra.mxu0 0
        %2214 = vmatpush.bf16.msra.mxu0 0
        %2215 = vmatpush.bf16.msra.mxu0 %v2203
        %2216 = vmatmul.bf16.gmra.mxu0 %v2206
        %v2217 = vpop.f32.mrf.mxu0
        %v2218 = vadd.f32 0.0, %v2217
        %v2219 = vpop.f32.mrf.mxu0
        %v2220 = vadd.f32 0.0, %v2219
        %2221 = vdwg.mxu0
        %v2224 = vunpack.c.l.b16 %v2062
        %v2225 = vunpack.c.l.b16 %v2063
        %v2226 = vpack.c.b16 %v2225, %v2224
        %v2227 = vunpack.c.l.b16 %v1669
        %v2228 = vunpack.c.l.b16 %v1693
        %v2229 = vpack.c.b16 %v2228, %v2227
        %v2232 = vsel %vm1703, %v2226, 0
        %2234 = vmatpush.bf16.msra.mxu0 0
        %2235 = vmatpush.bf16.msra.mxu0 0
        %2236 = vmatpush.bf16.msra.mxu0 0
        %2237 = vmatpush.bf16.msra.mxu0 0
        %2238 = vmatpush.bf16.msra.mxu0 0
        %2239 = vmatpush.bf16.msra.mxu0 0
        %2240 = vmatpush.bf16.msra.mxu0 0
        %2241 = vmatpush.bf16.msra.mxu0 %v2229
        %2242 = vmatmul.bf16.gmra.mxu0 %v2232
        %v2243 = vpop.f32.mrf.mxu0
        %v2244 = vadd.f32 0.0, %v2243
        %v2245 = vpop.f32.mrf.mxu0
        %v2246 = vadd.f32 0.0, %v2245
        %2247 = vdwg.mxu0
        %v2250 = vunpack.c.l.b16 %v2064
        %v2251 = vunpack.c.l.b16 %v2065
        %v2252 = vpack.c.b16 %v2251, %v2250
        %v2253 = vunpack.c.l.b16 %v1672
        %v2254 = vunpack.c.l.b16 %v1696
        %v2255 = vpack.c.b16 %v2254, %v2253
        %v2258 = vsel %vm1703, %v2252, 0
        %2260 = vmatpush.bf16.msra.mxu0 0
        %2261 = vmatpush.bf16.msra.mxu0 0
        %2262 = vmatpush.bf16.msra.mxu0 0
        %2263 = vmatpush.bf16.msra.mxu0 0
        %2264 = vmatpush.bf16.msra.mxu0 0
        %2265 = vmatpush.bf16.msra.mxu0 0
        %2266 = vmatpush.bf16.msra.mxu0 0
        %2267 = vmatpush.bf16.msra.mxu0 %v2255
        %2268 = vmatmul.bf16.gmra.mxu0 %v2258
        %v2269 = vpop.f32.mrf.mxu0
        %v2270 = vadd.f32 0.0, %v2269
        %v2271 = vpop.f32.mrf.mxu0
        %v2272 = vadd.f32 0.0, %v2271
        %2273 = vdwg.mxu0
        %v2274 = vrcp.pop %v2004
        %v2275 = vrcp.pop %v2007
        %v2276 = vrcp.pop %v2010
        %v2277 = vrcp.pop %v2013
        %v2278 = vrcp.pop %v2016
        %v2279 = vrcp.pop %v2019
        %v2280 = vrcp.pop %v2022
        %v2281 = vrcp.pop %v2025
        %v2282 = vrcp.pop %v2028
        %v2283 = vrcp.pop %v2031
        %v2284 = vrcp.pop %v2034
        %v2285 = vrcp.pop %v2037
        %v2286 = vrcp.pop %v2040
        %v2287 = vrcp.pop %v2043
        %v2288 = vrcp.pop %v2046
        %v2289 = vrcp.pop %v2049
        %v2290 = vmul.f32 %v2088, %v2274
        %v2291 = vmul.f32 %v2090, %v2275
        %v2292 = vmul.f32 %v2114, %v2276
        %v2293 = vmul.f32 %v2116, %v2277
        %v2294 = vmul.f32 %v2140, %v2278
        %v2295 = vmul.f32 %v2142, %v2279
        %v2296 = vmul.f32 %v2166, %v2280
        %v2297 = vmul.f32 %v2168, %v2281
        %v2298 = vmul.f32 %v2192, %v2282
        %v2299 = vmul.f32 %v2194, %v2283
        %v2300 = vmul.f32 %v2218, %v2284
        %v2301 = vmul.f32 %v2220, %v2285
        %v2302 = vmul.f32 %v2244, %v2286
        %v2303 = vmul.f32 %v2246, %v2287
        %v2304 = vmul.f32 %v2270, %v2288
        %v2305 = vmul.f32 %v2272, %v2289
        %v2306 = vpack.c.bf16 %v2290, %v2290
        %v2307 = vpack.c.bf16 %v2291, %v2291
        %v2308 = vpack.c.bf16 %v2292, %v2292
        %v2309 = vpack.c.bf16 %v2293, %v2293
        %v2310 = vpack.c.bf16 %v2294, %v2294
        %v2311 = vpack.c.bf16 %v2295, %v2295
        %v2312 = vpack.c.bf16 %v2296, %v2296
        %v2313 = vpack.c.bf16 %v2297, %v2297
        %v2314 = vpack.c.bf16 %v2298, %v2298
        %v2315 = vpack.c.bf16 %v2299, %v2299
        %v2316 = vpack.c.bf16 %v2300, %v2300
        %v2317 = vpack.c.bf16 %v2301, %v2301
        %v2318 = vpack.c.bf16 %v2302, %v2302
        %v2319 = vpack.c.bf16 %v2303, %v2303
        %v2320 = vpack.c.bf16 %v2304, %v2304
        %v2321 = vpack.c.bf16 %v2305, %v2305
        %v2322 = vrot.slane %v2314, 4
        %v2323 = vsel %vm597, %v2322, %v2306
        %v2325 = vunpack.c.l.s4 1983009808
        %v2326 = vunpack.c.0.s8 %v2325
        %v2327 = vperm.slane %v2323, %v2326
        %v2328 = vrot.slane %v2318, 4
        %v2329 = vsel %vm597, %v2328, %v2310
        %v2331 = vunpack.c.l.s4 1983009808
        %v2332 = vunpack.c.0.s8 %v2331
        %v2333 = vperm.slane %v2329, %v2332
        %v2334 = vrot.slane %v2333, 4
        %v2335 = vsel %vm597, %v2334, %v2327
        %v2336 = vrot.slane %v2327, 4
        %v2337 = vsel %vm597, %v2333, %v2336
        %v2339 = vunpack.c.l.s4 1934713408
        %v2340 = vunpack.c.0.s8 %v2339
        %v2341 = vperm.slane %v2335, %v2340
        %v2343 = vunpack.c.l.s4 1934713408
        %v2344 = vunpack.c.0.s8 %v2343
        %v2345 = vperm.slane %v2337, %v2344
        %v2346 = vrot.slane %v2341, 4
        %v2347 = vsel %vm597, 0, %v2346
        %v2348 = vrot.slane %v2345, 4
        %v2349 = vsel %vm597, 0, %v2348
        %v2350 = vrot.slane %v2316, 4
        %v2351 = vsel %vm597, %v2350, %v2308
        %v2353 = vunpack.c.l.s4 1983009808
        %v2354 = vunpack.c.0.s8 %v2353
        %v2355 = vperm.slane %v2351, %v2354
        %v2356 = vrot.slane %v2320, 4
        %v2357 = vsel %vm597, %v2356, %v2312
        %v2359 = vunpack.c.l.s4 1983009808
        %v2360 = vunpack.c.0.s8 %v2359
        %v2361 = vperm.slane %v2357, %v2360
        %v2362 = vrot.slane %v2361, 4
        %v2363 = vsel %vm597, %v2362, %v2355
        %v2364 = vrot.slane %v2355, 4
        %v2365 = vsel %vm597, %v2361, %v2364
        %v2367 = vunpack.c.l.s4 1934713408
        %v2368 = vunpack.c.0.s8 %v2367
        %v2369 = vperm.slane %v2363, %v2368
        %v2371 = vunpack.c.l.s4 1934713408
        %v2372 = vunpack.c.0.s8 %v2371
        %v2373 = vperm.slane %v2365, %v2372
        %v2374 = vrot.slane %v2369, 4
        %v2375 = vsel %vm597, 0, %v2374
        %v2376 = vrot.slane %v2373, 4
        %v2377 = vsel %vm597, 0, %v2376
        %v2378 = vrot.slane %v2315, 4
        %v2379 = vsel %vm597, %v2378, %v2307
        %v2381 = vunpack.c.l.s4 1983009808
        %v2382 = vunpack.c.0.s8 %v2381
        %v2383 = vperm.slane %v2379, %v2382
        %v2384 = vrot.slane %v2319, 4
        %v2385 = vsel %vm597, %v2384, %v2311
        %v2387 = vunpack.c.l.s4 1983009808
        %v2388 = vunpack.c.0.s8 %v2387
        %v2389 = vperm.slane %v2385, %v2388
        %v2390 = vrot.slane %v2389, 4
        %v2391 = vsel %vm597, %v2390, %v2383
        %v2392 = vrot.slane %v2383, 4
        %v2393 = vsel %vm597, %v2389, %v2392
        %v2395 = vunpack.c.l.s4 1934713408
        %v2396 = vunpack.c.0.s8 %v2395
        %v2397 = vperm.slane %v2391, %v2396
        %v2399 = vunpack.c.l.s4 1934713408
        %v2400 = vunpack.c.0.s8 %v2399
        %v2401 = vperm.slane %v2393, %v2400
        %v2402 = vrot.slane %v2397, 4
        %v2403 = vsel %vm597, 0, %v2402
        %v2404 = vrot.slane %v2401, 4
        %v2405 = vsel %vm597, 0, %v2404
        %v2406 = vrot.slane %v2317, 4
        %v2407 = vsel %vm597, %v2406, %v2309
        %v2409 = vunpack.c.l.s4 1983009808
        %v2410 = vunpack.c.0.s8 %v2409
        %v2411 = vperm.slane %v2407, %v2410
        %v2412 = vrot.slane %v2321, 4
        %v2413 = vsel %vm597, %v2412, %v2313
        %v2415 = vunpack.c.l.s4 1983009808
        %v2416 = vunpack.c.0.s8 %v2415
        %v2417 = vperm.slane %v2413, %v2416
        %v2418 = vrot.slane %v2417, 4
        %v2419 = vsel %vm597, %v2418, %v2411
        %v2420 = vrot.slane %v2411, 4
        %v2421 = vsel %vm597, %v2417, %v2420
        %v2423 = vunpack.c.l.s4 1934713408
        %v2424 = vunpack.c.0.s8 %v2423
        %v2425 = vperm.slane %v2419, %v2424
        %v2427 = vunpack.c.l.s4 1934713408
        %v2428 = vunpack.c.0.s8 %v2427
        %v2429 = vperm.slane %v2421, %v2428
        %v2430 = vrot.slane %v2425, 4
        %v2431 = vsel %vm597, 0, %v2430
        %v2432 = vrot.slane %v2429, 4
        %v2433 = vsel %vm597, 0, %v2432
        %v2436 = vpack.i.b16 %v2369, %v2341
        %v2438 = vshrl.u32 %v2341, 16
        %v2439 = vshrl.u32 %v2369, 16
        %v2440 = vpack.i.b16 %v2439, %v2438
        %v2444 = vpack.i.b16 %v2375, %v2347
        %v2446 = vshrl.u32 %v2347, 16
        %v2447 = vshrl.u32 %v2375, 16
        %v2448 = vpack.i.b16 %v2447, %v2446
        %v2452 = vpack.i.b16 %v2373, %v2345
        %v2454 = vshrl.u32 %v2345, 16
        %v2455 = vshrl.u32 %v2373, 16
        %v2456 = vpack.i.b16 %v2455, %v2454
        %v2460 = vpack.i.b16 %v2377, %v2349
        %v2462 = vshrl.u32 %v2349, 16
        %v2463 = vshrl.u32 %v2377, 16
        %v2464 = vpack.i.b16 %v2463, %v2462
        %v2468 = vpack.i.b16 %v2425, %v2397
        %v2470 = vshrl.u32 %v2397, 16
        %v2471 = vshrl.u32 %v2425, 16
        %v2472 = vpack.i.b16 %v2471, %v2470
        %v2476 = vpack.i.b16 %v2431, %v2403
        %v2478 = vshrl.u32 %v2403, 16
        %v2479 = vshrl.u32 %v2431, 16
        %v2480 = vpack.i.b16 %v2479, %v2478
        %v2484 = vpack.i.b16 %v2429, %v2401
        %v2486 = vshrl.u32 %v2401, 16
        %v2487 = vshrl.u32 %v2429, 16
        %v2488 = vpack.i.b16 %v2487, %v2486
        %v2492 = vpack.i.b16 %v2433, %v2405
        %v2494 = vshrl.u32 %v2405, 16
        %v2495 = vshrl.u32 %v2433, 16
        %v2496 = vpack.i.b16 %v2495, %v2494
        %v2498 = vrot.slane %v2452, 4
        %v2499 = vsel %vm597, %v2498, %v2436
        %v2501 = vunpack.c.l.s4 1983009808
        %v2502 = vunpack.c.0.s8 %v2501
        %v2503 = vperm.slane %v2499, %v2502
        %v2504 = vrot.slane %v2460, 4
        %v2505 = vsel %vm597, %v2504, %v2444
        %v2507 = vunpack.c.l.s4 1983009808
        %v2508 = vunpack.c.0.s8 %v2507
        %v2509 = vperm.slane %v2505, %v2508
        %v2510 = vrot.slane %v2509, 4
        %v2511 = vsel %vm597, %v2510, %v2503
        %v2512 = vrot.slane %v2503, 4
        %v2513 = vsel %vm597, %v2509, %v2512
        %v2515 = vunpack.c.l.s4 1934713408
        %v2516 = vunpack.c.0.s8 %v2515
        %v2517 = vperm.slane %v2511, %v2516
        %v2519 = vunpack.c.l.s4 1934713408
        %v2520 = vunpack.c.0.s8 %v2519
        %v2521 = vperm.slane %v2513, %v2520
        %v2522 = vrot.slane %v2517, 4
        %v2523 = vsel %vm597, 0, %v2522
        %v2524 = vrot.slane %v2521, 4
        %v2525 = vsel %vm597, 0, %v2524
        %v2526 = vrot.slane %v2456, 4
        %v2527 = vsel %vm597, %v2526, %v2440
        %v2529 = vunpack.c.l.s4 1983009808
        %v2530 = vunpack.c.0.s8 %v2529
        %v2531 = vperm.slane %v2527, %v2530
        %v2532 = vrot.slane %v2464, 4
        %v2533 = vsel %vm597, %v2532, %v2448
        %v2535 = vunpack.c.l.s4 1983009808
        %v2536 = vunpack.c.0.s8 %v2535
        %v2537 = vperm.slane %v2533, %v2536
        %v2538 = vrot.slane %v2537, 4
        %v2539 = vsel %vm597, %v2538, %v2531
        %v2540 = vrot.slane %v2531, 4
        %v2541 = vsel %vm597, %v2537, %v2540
        %v2543 = vunpack.c.l.s4 1934713408
        %v2544 = vunpack.c.0.s8 %v2543
        %v2545 = vperm.slane %v2539, %v2544
        %v2547 = vunpack.c.l.s4 1934713408
        %v2548 = vunpack.c.0.s8 %v2547
        %v2549 = vperm.slane %v2541, %v2548
        %v2550 = vrot.slane %v2545, 4
        %v2551 = vsel %vm597, 0, %v2550
        %v2552 = vrot.slane %v2549, 4
        %v2553 = vsel %vm597, 0, %v2552
        %v2554 = vrot.slane %v2484, 4
        %v2555 = vsel %vm597, %v2554, %v2468
        %v2557 = vunpack.c.l.s4 1983009808
        %v2558 = vunpack.c.0.s8 %v2557
        %v2559 = vperm.slane %v2555, %v2558
        %v2560 = vrot.slane %v2492, 4
        %v2561 = vsel %vm597, %v2560, %v2476
        %v2563 = vunpack.c.l.s4 1983009808
        %v2564 = vunpack.c.0.s8 %v2563
        %v2565 = vperm.slane %v2561, %v2564
        %v2566 = vrot.slane %v2565, 4
        %v2567 = vsel %vm597, %v2566, %v2559
        %v2568 = vrot.slane %v2559, 4
        %v2569 = vsel %vm597, %v2565, %v2568
        %v2571 = vunpack.c.l.s4 1934713408
        %v2572 = vunpack.c.0.s8 %v2571
        %v2573 = vperm.slane %v2567, %v2572
        %v2575 = vunpack.c.l.s4 1934713408
        %v2576 = vunpack.c.0.s8 %v2575
        %v2577 = vperm.slane %v2569, %v2576
        %v2578 = vrot.slane %v2573, 4
        %v2579 = vsel %vm597, 0, %v2578
        %v2580 = vrot.slane %v2577, 4
        %v2581 = vsel %vm597, 0, %v2580
        %v2582 = vrot.slane %v2488, 4
        %v2583 = vsel %vm597, %v2582, %v2472
        %v2585 = vunpack.c.l.s4 1983009808
        %v2586 = vunpack.c.0.s8 %v2585
        %v2587 = vperm.slane %v2583, %v2586
        %v2588 = vrot.slane %v2496, 4
        %v2589 = vsel %vm597, %v2588, %v2480
        %v2591 = vunpack.c.l.s4 1983009808
        %v2592 = vunpack.c.0.s8 %v2591
        %v2593 = vperm.slane %v2589, %v2592
        %v2594 = vrot.slane %v2593, 4
        %v2595 = vsel %vm597, %v2594, %v2587
        %v2596 = vrot.slane %v2587, 4
        %v2597 = vsel %vm597, %v2593, %v2596
        %v2599 = vunpack.c.l.s4 1934713408
        %v2600 = vunpack.c.0.s8 %v2599
        %v2601 = vperm.slane %v2595, %v2600
        %v2603 = vunpack.c.l.s4 1934713408
        %v2604 = vunpack.c.0.s8 %v2603
        %v2605 = vperm.slane %v2597, %v2604
        %v2606 = vrot.slane %v2601, 4
        %v2607 = vsel %vm597, 0, %v2606
        %v2608 = vrot.slane %v2605, 4
        %v2609 = vsel %vm597, 0, %v2608
        %v2612 = vpack.i.b16 %v2545, %v2517
        %v2613 = vshrl.u32 %v2517, 16
        %v2614 = vshrl.u32 %v2545, 16
        %v2615 = vpack.i.b16 %v2614, %v2613
        %v2618 = vpack.i.b16 %v2551, %v2523
        %v2619 = vshrl.u32 %v2523, 16
        %v2620 = vshrl.u32 %v2551, 16
        %v2621 = vpack.i.b16 %v2620, %v2619
        %v2624 = vpack.i.b16 %v2549, %v2521
        %v2625 = vshrl.u32 %v2521, 16
        %v2626 = vshrl.u32 %v2549, 16
        %v2627 = vpack.i.b16 %v2626, %v2625
        %v2630 = vpack.i.b16 %v2553, %v2525
        %v2631 = vshrl.u32 %v2525, 16
        %v2632 = vshrl.u32 %v2553, 16
        %v2633 = vpack.i.b16 %v2632, %v2631
        %v2636 = vpack.i.b16 %v2601, %v2573
        %v2637 = vshrl.u32 %v2573, 16
        %v2638 = vshrl.u32 %v2601, 16
        %v2639 = vpack.i.b16 %v2638, %v2637
        %v2642 = vpack.i.b16 %v2607, %v2579
        %v2643 = vshrl.u32 %v2579, 16
        %v2644 = vshrl.u32 %v2607, 16
        %v2645 = vpack.i.b16 %v2644, %v2643
        %v2648 = vpack.i.b16 %v2605, %v2577
        %v2649 = vshrl.u32 %v2577, 16
        %v2650 = vshrl.u32 %v2605, 16
        %v2651 = vpack.i.b16 %v2650, %v2649
        %v2654 = vpack.i.b16 %v2609, %v2581
        %v2655 = vshrl.u32 %v2581, 16
        %v2656 = vshrl.u32 %v2609, 16
        %v2657 = vpack.i.b16 %v2656, %v2655
        %v2658 = vunpack.c.l.b16 %v2612
        %v2659 = vunpack.c.l.b16 %v2636
        %v2660 = vpack.c.b16 %v2659, %v2658
        %v2661 = vunpack.c.l.b16 %v2615
        %v2662 = vunpack.c.l.b16 %v2639
        %v2663 = vpack.c.b16 %v2662, %v2661
        %2664 = vrot.lane.b32.xlu0 %v2663, 16
        %v2665 = vpop.permute.xlu0 %2664
        %v2666 = vunpack.c.l.b16 %v2618
        %v2667 = vunpack.c.l.b16 %v2642
        %v2668 = vpack.c.b16 %v2667, %v2666
        %2669 = vrot.lane.b32.xlu0 %v2668, 32
        %v2670 = vpop.permute.xlu0 %2669
        %v2671 = vunpack.c.l.b16 %v2621
        %v2672 = vunpack.c.l.b16 %v2645
        %v2673 = vpack.c.b16 %v2672, %v2671
        %2674 = vrot.lane.b32.xlu0 %v2673, 48
        %v2675 = vpop.permute.xlu0 %2674
        %v2676 = vunpack.c.l.b16 %v2624
        %v2677 = vunpack.c.l.b16 %v2648
        %v2678 = vpack.c.b16 %v2677, %v2676
        %2679 = vrot.lane.b32.xlu0 %v2678, 64
        %v2680 = vpop.permute.xlu0 %2679
        %v2681 = vunpack.c.l.b16 %v2627
        %v2682 = vunpack.c.l.b16 %v2651
        %v2683 = vpack.c.b16 %v2682, %v2681
        %2684 = vrot.lane.b32.xlu0 %v2683, 80
        %v2685 = vpop.permute.xlu0 %2684
        %v2686 = vunpack.c.l.b16 %v2630
        %v2687 = vunpack.c.l.b16 %v2654
        %v2688 = vpack.c.b16 %v2687, %v2686
        %2689 = vrot.lane.b32.xlu0 %v2688, 96
        %v2690 = vpop.permute.xlu0 %2689
        %v2691 = vunpack.c.l.b16 %v2633
        %v2692 = vunpack.c.l.b16 %v2657
        %v2693 = vpack.c.b16 %v2692, %v2691
        %2694 = vrot.lane.b32.xlu0 %v2693, 112
        %v2695 = vpop.permute.xlu0 %2694
        %v2698 = vsel %vm1703, %v2660, %v2665
        %vm2699 = vcmask 261120
        %v2701 = vsel %vm2699, %v2698, %v2670
        %vm2702 = vcmask 392192
        %v2704 = vsel %vm2702, %v2701, %v2675
        %vm2705 = vcmask 523264
        %v2707 = vsel %vm2705, %v2704, %v2680
        %vm2708 = vcmask 654336
        %v2710 = vsel %vm2708, %v2707, %v2685
        %vm2711 = vcmask 785408
        %v2713 = vsel %vm2711, %v2710, %v2690
        %vm2714 = vcmask 916480
        %v2716 = vsel %vm2714, %v2713, %v2695
        %v2718 = vld [vmem:[#allocation10] sm:$0xf]
        %v2719 = vld [vmem:[#allocation10 + $0x4] sm:$0xf]
        %v2720 = vld [vmem:[#allocation10 + $0x8] sm:$0xf]
        %v2721 = vld [vmem:[#allocation10 + $0xc] sm:$0xf]
        %v2722 = vld [vmem:[#allocation10 + $0x10] sm:$0xf]
        %v2723 = vld [vmem:[#allocation10 + $0x14] sm:$0xf]
        %v2724 = vld [vmem:[#allocation10 + $0x18] sm:$0xf]
        %v2725 = vld [vmem:[#allocation10 + $0x1c] sm:$0xf]
        %v2726 = vld [vmem:[#allocation10 + $0x20] sm:$0xf]
        %v2727 = vld [vmem:[#allocation10 + $0x24] sm:$0xf]
        %v2728 = vld [vmem:[#allocation10 + $0x28] sm:$0xf]
        %v2729 = vld [vmem:[#allocation10 + $0x2c] sm:$0xf]
        %v2730 = vld [vmem:[#allocation10 + $0x30] sm:$0xf]
        %v2731 = vld [vmem:[#allocation10 + $0x34] sm:$0xf]
        %v2732 = vld [vmem:[#allocation10 + $0x38] sm:$0xf]
        %v2733 = vld [vmem:[#allocation10 + $0x3c] sm:$0xf]
        %v2734 = vld [vmem:[%s4] sm:$0x1]
        %v2736 = vperm.slane %v2734, 0
        %v2754 = vunpack.c.l.b16 %v2718
        %v2755 = vunpack.c.l.b16 %v2719
        %v2756 = vunpack.c.l.b16 %v2720
        %v2757 = vunpack.c.l.b16 %v2721
        %v2758 = vunpack.c.l.b16 %v2722
        %v2759 = vunpack.c.l.b16 %v2723
        %v2760 = vunpack.c.l.b16 %v2724
        %v2761 = vunpack.c.l.b16 %v2725
        %v2762 = vunpack.c.l.b16 %v2726
        %v2763 = vunpack.c.l.b16 %v2727
        %v2764 = vunpack.c.l.b16 %v2728
        %v2765 = vunpack.c.l.b16 %v2729
        %v2766 = vunpack.c.l.b16 %v2730
        %v2767 = vunpack.c.l.b16 %v2731
        %v2768 = vunpack.c.l.b16 %v2732
        %v2769 = vunpack.c.l.b16 %v2733
        %v2770 = vpack.c.b16 %v2755, %v2754
        %v2771 = vpack.c.b16 %v2757, %v2756
        %v2772 = vpack.c.b16 %v2759, %v2758
        %v2773 = vpack.c.b16 %v2761, %v2760
        %v2774 = vpack.c.b16 %v2763, %v2762
        %v2775 = vpack.c.b16 %v2765, %v2764
        %v2776 = vpack.c.b16 %v2767, %v2766
        %v2777 = vpack.c.b16 %v2769, %v2768
        %2786 = vmatpush.bf16.msra.mxu0 %v2777
        %2787 = vmatpush.bf16.msra.mxu0 %v2776
        %2788 = vmatpush.bf16.msra.mxu0 %v2775
        %2789 = vmatpush.bf16.msra.mxu0 %v2774
        %2790 = vmatpush.bf16.msra.mxu0 %v2773
        %2791 = vmatpush.bf16.msra.mxu0 %v2772
        %2792 = vmatpush.bf16.msra.mxu0 %v2771
        %2793 = vmatpush.bf16.msra.mxu0 %v2770
        %2794 = vmatmul.bf16.gmra.mxu0 %v2716
        %v2795 = vpop.f32.mrf.mxu0
        %v2796 = vadd.f32 %v2736, %v2795
        %v2797 = vpop.f32.mrf.mxu0
        %v2798 = vadd.f32 %v2736, %v2797
        %2799 = vdwg.mxu0
        %2800 = vst [vmem:[%s308] sm:$0xff] %v2796
        %2801 = vst [vmem:[%s308 + $0x8] sm:$0xff] %v2798
        %s2802 = sand.u32 %s156, 1
        %s2803 = scalar_lea.sflag [#allocation6], %s2802
        %s2804 = sand.u32 %s156, 1
        %s2805 = smul.addr %s2804, 16
        %s2806 = scalar_lea.vmem [#allocation12], %s2805
        // Predicated region
        $region61: #{tpu_custom_call.1} parent=39 // pred_check
          %p2807 = pneg %p166
        $region62: #{tpu_custom_call.1} parent=39 // pred_check_branch
          %2809 = sbr.rel (%p2807) target = $region64
        $region63: #{tpu_custom_call.1} parent=39 // pred_region
          %s2810 = smul.u32 2, %s29
          %2812 = vsyncadd %s2803, 0
          %s2813 = smul.addr %s28, 2
          %s2814 = sadd.s32 %s2810, %s2813
          %s2815 = smul.addr %s2814, 8
          %s2816 = scalar_lea.hbm %s5, %s2815
          %s2817 = sshll.u32 %s2806, 4
          %s2818 = int_to_ptr.vmem [resolvable:$true] %s2817
          %s2819 = sshll.u32 %s2816, 4
          %s2820 = int_to_ptr.hbm [resolvable:$true] %s2819
          %2825 = dma.vmem_to_hbm [thread:$0]  %s2818, 256, %s2820, %s2803, 128, 128, 8
        $region64: #{tpu_custom_call.1} parent=39 // pred_fallthru
          _
      $region40: #{tpu_custom_call.1} parent=5 // pred_fallthru
        _
      %p2826 = scmp.le.s32.totalorder 2, %s19
      // Predicated region
      $region65: #{tpu_custom_call.1} parent=5 // pred_check
        %p2827 = pneg %p2826
      $region66: #{tpu_custom_call.1} parent=5 // pred_check_branch
        %2829 = sbr.rel (%p2827) target = $region68
      $region67: #{tpu_custom_call.1} parent=5 // pred_region
        %s2830 = ssub.s32 %s19, 2
        // Predicated region
        $region69: #{tpu_custom_call.1} parent=67 // pred_check
          %p2831 = pneg %p172
        $region70: #{tpu_custom_call.1} parent=67 // pred_check_branch
          %2833 = sbr.rel (%p2831) target = $region72
        $region71: #{tpu_custom_call.1} parent=67 // pred_region
          %s2834 = sand.u32 %s157, 1
          %s2835 = scalar_lea.sflag [#allocation6], %s2834
          %s2836 = sand.u32 %s157, 1
          %s2837 = smul.addr %s2836, 16
          %s2838 = scalar_lea.vmem [#allocation12], %s2837
          %2840 = dma.done %s2835, 256
        $region72: #{tpu_custom_call.1} parent=67 // pred_fallthru
          _
      $region68: #{tpu_custom_call.1} parent=5 // pred_fallthru
        _
    $region6: #{tpu_custom_call.1} parent=1 // loop_footer
      %s23 = sadd.s32 1, %s19
    $region7: #{tpu_custom_call.1} parent=1 // loop_footer_branch
      %18 = sbr.rel target = $region3
    $region8: #{tpu_custom_call.1} parent=1 // loop_exit
      _
    %2841 = vsyncpa [#allocation5], 1
    %s2842 = scalar_lea.sflag [#allocation5], 1
    %2843 = vsyncpa %s2842, 1
    %2844 = vsyncpa [#allocation8], 1
    %2845 = vsyncpa [#allocation11], 1
    %2846 = vsyncpa [#allocation6], 1
    %s2847 = scalar_lea.sflag [#allocation6], 1
    %2848 = vsyncpa %s2847, 1

</llo_original>
